<compile_context>
chip_gen: v7x
topology: tpu7x:2x2x1
jax: 0.10.0
libtpu: 0.0.40
codegen_flags: <defaults>
</compile_context>

<pallas_src>
import math

import jax
import jax.numpy as jnp
from jax import lax
from jax.experimental import pallas as pl
from jax.experimental.pallas import tpu as pltpu


# ----------------------------------------------------------------------------
# Pallas kernels
# ----------------------------------------------------------------------------
def _conv_mm_kernel(x_ref, w_ref, b_ref, o_ref):
    # x: (TM, K) bf16 patches, w: (K, N) bf16, b: (1, N) f32  ->  relu(x@w + b)
    z = jnp.dot(x_ref[...], w_ref[...], preferred_element_type=jnp.float32)
    z = jnp.maximum(z + b_ref[...], 0.0)
    o_ref[...] = z.astype(o_ref.dtype)


def conv_matmul_relu(patches, w, b, *, tm=512):
    """patches: (M, K) bf16, w: (K, N) bf16, b: (1, N) f32 -> (M, N) bf16."""
    M, K = patches.shape
    Kw, N = w.shape
    assert K == Kw
    tm = min(tm, M)                      # tm==M is always a legal full block
    grid = (pl.cdiv(M, tm),)
    return pl.pallas_call(
        _conv_mm_kernel,
        out_shape=jax.ShapeDtypeStruct((M, N), jnp.bfloat16),
        grid=grid,
        in_specs=[
            pl.BlockSpec((tm, K), lambda i: (i, 0)),
            pl.BlockSpec((K, N), lambda i: (0, 0)),
            pl.BlockSpec((1, N), lambda i: (0, 0)),
        ],
        out_specs=pl.BlockSpec((tm, N), lambda i: (i, 0)),
        compiler_params=pltpu.CompilerParams(
            dimension_semantics=("parallel",)),
    )(patches, w, b)


def _fc_head_kernel(x_ref, w1_ref, b1_ref, w2_ref, b2_ref, o_ref):
    # Fused: relu(x@w1+b1) -> @w2+b2 -> softmax.  bf16 matmul inputs, f32 acc.
    h = jnp.dot(x_ref[...], w1_ref[...], preferred_element_type=jnp.float32)
    h = jnp.maximum(h + b1_ref[...], 0.0)
    z = jnp.dot(h.astype(jnp.bfloat16), w2_ref[...],
                preferred_element_type=jnp.float32) + b2_ref[...]
    z = z - jnp.max(z, axis=-1, keepdims=True)
    e = jnp.exp(z)
    inv = pl.reciprocal(jnp.sum(e, axis=-1, keepdims=True), approx=True)
    o_ref[...] = (e * inv).astype(o_ref.dtype)


def fc_head(x, w1, b1, w2, b2, *, tb=256):
    """x: (B, K) bf16; w1: (K, H) bf16; w2: (H, N) bf16 -> (B, N) f32 probs."""
    B, K = x.shape
    _, H = w1.shape
    _, N = w2.shape
    tb = min(tb, B)
    grid = (pl.cdiv(B, tb),)
    return pl.pallas_call(
        _fc_head_kernel,
        out_shape=jax.ShapeDtypeStruct((B, N), jnp.float32),
        grid=grid,
        in_specs=[
            pl.BlockSpec((tb, K), lambda i: (i, 0)),
            pl.BlockSpec((K, H), lambda i: (0, 0)),
            pl.BlockSpec((1, H), lambda i: (0, 0)),
            pl.BlockSpec((H, N), lambda i: (0, 0)),
            pl.BlockSpec((1, N), lambda i: (0, 0)),
        ],
        out_specs=pl.BlockSpec((tb, N), lambda i: (i, 0)),
        compiler_params=pltpu.CompilerParams(
            dimension_semantics=("parallel",)),
    )(x, w1, b1, w2, b2)


# ----------------------------------------------------------------------------
# XLA glue: single-op patch extraction (im2col), NHWC.
# TODO(synk): folding patch extraction fully inside the Pallas kernel (true
# single-kernel network) needs in-kernel strided slicing / sublane relayouts;
# kept as one fused XLA op per conv layer instead.
# ----------------------------------------------------------------------------
def _extract_patches(x, k, s):
    """x: (B, H, W, C) -> (B*Ho*Wo, C*k*k); feature order is whatever
    conv_general_dilated_patches emits (weights are permuted to match)."""
    B, H, W, C = x.shape
    Ho = (H - k) // s + 1
    Wo = (W - k) // s + 1
    p = lax.conv_general_dilated_patches(
        x, (k, k), (s, s), "VALID",
        dimension_numbers=("NHWC", "HWIO", "NHWC"))
    return p.reshape(B * Ho * Wo, C * k * k), Ho, Wo


def _patch_feature_order(k, cin):
    """perm[i] = PyTorch flat receptive-field index (c*k*k + kh*k + kw) that
    patch feature i corresponds to.  Probed once (outside jit), never assumed."""
    probe = jnp.arange(cin * k * k, dtype=jnp.float32).reshape(1, cin, k, k)
    probe = jnp.transpose(probe, (0, 2, 3, 1))                    # NHWC
    pat = lax.conv_general_dilated_patches(
        probe, (k, k), (1, 1), "VALID",
        dimension_numbers=("NHWC", "HWIO", "NHWC"))
    return pat.reshape(cin * k * k).astype(jnp.int32)


# ----------------------------------------------------------------------------
# Parameters: PyTorch-layout init + one-time conversion to kernel layout.
# ----------------------------------------------------------------------------
def _kaiming_normal_fan_out(key, shape):
    cout, _, kh, kw = shape
    std = math.sqrt(2.0 / (cout * kh * kw))
    return std * jax.random.normal(key, shape, dtype=jnp.float32)


def _xavier_uniform(key, shape):
    fan_out, fan_in = shape
    a = math.sqrt(6.0 / (fan_in + fan_out))
    return jax.random.uniform(key, shape, minval=-a, maxval=a, dtype=jnp.float32)


def init_params(key, input_channels, hidden, output):
    ks = jax.random.split(key, 5)
    return {
        "conv1_w": _kaiming_normal_fan_out(ks[0], (32, input_channels, 8, 8)),
        "conv1_b": jnp.zeros((32,), jnp.float32),
        "conv2_w": _kaiming_normal_fan_out(ks[1], (64, 32, 4, 4)),
        "conv2_b": jnp.zeros((64,), jnp.float32),
        "conv3_w": _kaiming_normal_fan_out(ks[2], (64, 64, 3, 3)),
        "conv3_b": jnp.zeros((64,), jnp.float32),
        "fc1_w": _xavier_uniform(ks[3], (hidden, 64 * 6 * 6)),
        "fc1_b": jnp.zeros((hidden,), jnp.float32),
        "fc2_w": _xavier_uniform(ks[4], (output, hidden)),
        "fc2_b": jnp.zeros((output,), jnp.float32),
    }


def prepare_params(params):
    """One-time (outside jit) conversion: all transposes / permutations / bf16
    casts are done here so the jitted forward does zero weight layout work."""
    def conv_w(w):
        cout, cin, k, _ = w.shape
        w2 = w.reshape(cout, cin * k * k).T           # rows = PyTorch (c,kh,kw)
        perm = _patch_feature_order(k, cin)
        return w2[perm, :].astype(jnp.bfloat16)       # rows = patch feature order
    def bias(b):
        return b.reshape(1, -1).astype(jnp.float32)
    hidden = params["fc1_w"].shape[0]
    # fc1 columns: PyTorch flatten is (c, h, w); our NHWC flatten is (h, w, c).
    fc1_w = params["fc1_w"].reshape(hidden, 64, 6, 6)
    fc1_w = jnp.transpose(fc1_w, (0, 2, 3, 1)).reshape(hidden, 64 * 6 * 6)
    return {
        "c1w": conv_w(params["conv1_w"]), "c1b": bias(params["conv1_b"]),
        "c2w": conv_w(params["conv2_w"]), "c2b": bias(params["conv2_b"]),
        "c3w": conv_w(params["conv3_w"]), "c3b": bias(params["conv3_b"]),
        "f1w": fc1_w.T.astype(jnp.bfloat16), "f1b": bias(params["fc1_b"]),
        "f2w": params["fc2_w"].T.astype(jnp.bfloat16), "f2b": bias(params["fc2_b"]),
    }


# ----------------------------------------------------------------------------
# Forward pass (matches CNNMultiAction.forward)
# ----------------------------------------------------------------------------
@jax.jit
def cnn_multiaction_forward(prep, x):
    """x: (B, C, 80, 80) f32 NCHW -> softmax probs (B, output_count) f32."""
    B = x.shape[0]
    a = jnp.transpose(x, (0, 2, 3, 1)).astype(jnp.bfloat16)     # NHWC once
    conv_stack = (
        (prep["c1w"], prep["c1b"], 8, 4),   # 4->32,  19x19
        (prep["c2w"], prep["c2b"], 4, 2),   # 32->64, 8x8
        (prep["c3w"], prep["c3b"], 3, 1),   # 64->64, 6x6
    )
    for w, b, k, s in conv_stack:
        patches, Ho, Wo = _extract_patches(a, k, s)             # (B*Ho*Wo, K)
        y = conv_matmul_relu(patches.astype(jnp.bfloat16), w, b)
        a = y.reshape(B, Ho, Wo, w.shape[1])
    feats = a.reshape(B, -1)                                    # (B, 2304) NHWC flatten
    return fc_head(feats, prep["f1w"], prep["f1b"], prep["f2w"], prep["f2b"])


# ----------------------------------------------------------------------------
# Pure-JAX f32 reference (PyTorch semantics) for a correctness check.
# ----------------------------------------------------------------------------
def reference_forward(params, x):
    def conv(a, w, b, s):
        y = lax.conv_general_dilated(a, w, (s, s), "VALID",
                                     dimension_numbers=("NCHW", "OIHW", "NCHW"))
        return jnp.maximum(y + b.reshape(1, -1, 1, 1), 0.0)
    a = conv(x, params["conv1_w"], params["conv1_b"], 4)
    a = conv(a, params["conv2_w"], params["conv2_b"], 2)
    a = conv(a, params["conv3_w"], params["conv3_b"], 1)
    a = a.reshape(x.shape[0], -1)                               # NCHW flatten
    h = jnp.maximum(a @ params["fc1_w"].T + params["fc1_b"], 0.0)
    logits = h @ params["fc2_w"].T + params["fc2_b"]
    return jax.nn.softmax(logits, axis=-1)


if __name__ == "__main__":
    input_channels = 4
    hidden_layers_count = 32
    output_count = 6
    batch = 2

    key = jax.random.PRNGKey(0)
    pkey, xkey = jax.random.split(key)
    params = init_params(pkey, input_channels, hidden_layers_count, output_count)
    prep = prepare_params(params)                 # one-time layout prep

    # Input must be 80x80 so conv3 output is 6x6 (conv_output_size = 64*6*6).
    x = jax.random.normal(xkey, (batch, input_channels, 80, 80), dtype=jnp.float32)

    probs = cnn_multiaction_forward(prep, x)
    probs = jax.block_until_ready(probs)

    assert probs.shape == (batch, output_count)
    row_sums = jnp.sum(probs, axis=-1)
    assert bool(jnp.all(jnp.abs(row_sums - 1.0) < 2e-2)), "softmax rows must sum to 1"

    ref = reference_forward(params, x)
    max_err = float(jnp.max(jnp.abs(probs - ref)))
    assert max_err < 3e-2, f"mismatch vs f32 reference: {max_err}"

    print("KERNEL_OK")
</pallas_src>

<mosaic_0001>
module attributes {stable_mosaic.version = 11 : i64} {
  func.func @_conv_mm_kernel(%arg0: i32, %arg1: memref<512x256xbf16, #tpu.memory_space<vmem>>, %arg2: memref<256x32xbf16, #tpu.memory_space<vmem>>, %arg3: memref<1x32xf32, #tpu.memory_space<vmem>>, %arg4: memref<512x32xbf16, #tpu.memory_space<vmem>>) attributes {dimension_semantics = [#tpu.dimension_semantics<parallel>], iteration_bounds = array<i64: 2>, scalar_prefetch = 0 : i64, scratch_operands = 0 : i64, tpu.core_type = #tpu.core_type<tc>, window_params = [{transform_indices = @transform_0, window_bounds = array<i64: 512, 256>}, {pipeline_mode = #tpu.pipeline_mode<synchronous>, transform_indices = @transform_1, window_bounds = array<i64: 256, 32>}, {pipeline_mode = #tpu.pipeline_mode<synchronous>, transform_indices = @transform_2, window_bounds = array<i64: 1, 32>}, {transform_indices = @transform_3, window_bounds = array<i64: 512, 32>}]} {
    %c0 = arith.constant 0 : index
    %c0_0 = arith.constant 0 : index
    %0 = vector.load %arg1[%c0, %c0_0] : memref<512x256xbf16, #tpu.memory_space<vmem>>, vector<512x256xbf16>
    %c0_1 = arith.constant 0 : index
    %c0_2 = arith.constant 0 : index
    %1 = vector.load %arg2[%c0_1, %c0_2] : memref<256x32xbf16, #tpu.memory_space<vmem>>, vector<256x32xbf16>
    %cst = arith.constant dense<0.000000e+00> : vector<512x32xf32>
    %2 = tpu.matmul %0, %1, %cst {dimension_numbers = #tpu.dot_dimension_numbers<[1], [0], [0], [1], [0, 0, 1, 1], [], []>} : vector<512x256xbf16>, vector<256x32xbf16>, vector<512x32xf32> -> vector<512x32xf32>
    %c0_3 = arith.constant 0 : index
    %c0_4 = arith.constant 0 : index
    %3 = vector.load %arg3[%c0_3, %c0_4] : memref<1x32xf32, #tpu.memory_space<vmem>>, vector<1x32xf32>
    %4 = vector.broadcast %3 : vector<1x32xf32> to vector<512x32xf32>
    %5 = arith.addf %2, %4 : vector<512x32xf32>
    %cst_5 = arith.constant 0.000000e+00 : f32
    %6 = vector.broadcast %cst_5 : f32 to vector<512x32xf32>
    %7 = arith.maximumf %5, %6 : vector<512x32xf32>
    %8 = arith.truncf %7 : vector<512x32xf32> to vector<512x32xbf16>
    %c0_6 = arith.constant 0 : index
    %c0_7 = arith.constant 0 : index
    %9 = vector.load %arg4[%c0_6, %c0_7] : memref<512x32xbf16, #tpu.memory_space<vmem>>, vector<512x32xbf16>
    tpu.vector_store %arg4[%c0_6, %c0_7], %8 {strides = array<i32>} : memref<512x32xbf16, #tpu.memory_space<vmem>>, vector<512x32xbf16>,
    return
  }
  func.func @transform_0(%arg0: i32) -> (i32, i32) {
    %c0_i32 = arith.constant 0 : i32
    %c0_i32_0 = arith.constant 0 : i32
    return %arg0, %c0_i32 : i32, i32
  }
  func.func @transform_1(%arg0: i32) -> (i32, i32) {
    %c0_i32 = arith.constant 0 : i32
    %c0_i32_0 = arith.constant 0 : i32
    %c0_i32_1 = arith.constant 0 : i32
    return %c0_i32, %c0_i32_0 : i32, i32
  }
  func.func @transform_2(%arg0: i32) -> (i32, i32) {
    %c0_i32 = arith.constant 0 : i32
    %c0_i32_0 = arith.constant 0 : i32
    %c0_i32_1 = arith.constant 0 : i32
    return %c0_i32, %c0_i32_0 : i32, i32
  }
  func.func @transform_3(%arg0: i32) -> (i32, i32) {
    %c0_i32 = arith.constant 0 : i32
    %c0_i32_0 = arith.constant 0 : i32
    return %arg0, %c0_i32 : i32, i32
  }
}

module attributes {stable_mosaic.version = 11 : i64} {
  func.func @_conv_mm_kernel(%arg0: i32, %arg1: memref<128x512xbf16, #tpu.memory_space<vmem>>, %arg2: memref<512x64xbf16, #tpu.memory_space<vmem>>, %arg3: memref<1x64xf32, #tpu.memory_space<vmem>>, %arg4: memref<128x64xbf16, #tpu.memory_space<vmem>>) attributes {dimension_semantics = [#tpu.dimension_semantics<parallel>], iteration_bounds = array<i64: 1>, scalar_prefetch = 0 : i64, scratch_operands = 0 : i64, tpu.core_type = #tpu.core_type<tc>, window_params = [{transform_indices = @transform_0, window_bounds = array<i64: 128, 512>}, {pipeline_mode = #tpu.pipeline_mode<synchronous>, transform_indices = @transform_1, window_bounds = array<i64: 512, 64>}, {pipeline_mode = #tpu.pipeline_mode<synchronous>, transform_indices = @transform_2, window_bounds = array<i64: 1, 64>}, {transform_indices = @transform_3, window_bounds = array<i64: 128, 64>}]} {
    %c0 = arith.constant 0 : index
    %c0_0 = arith.constant 0 : index
    %0 = vector.load %arg1[%c0, %c0_0] : memref<128x512xbf16, #tpu.memory_space<vmem>>, vector<128x512xbf16>
    %c0_1 = arith.constant 0 : index
    %c0_2 = arith.constant 0 : index
    %1 = vector.load %arg2[%c0_1, %c0_2] : memref<512x64xbf16, #tpu.memory_space<vmem>>, vector<512x64xbf16>
    %cst = arith.constant dense<0.000000e+00> : vector<128x64xf32>
    %2 = tpu.matmul %0, %1, %cst {dimension_numbers = #tpu.dot_dimension_numbers<[1], [0], [0], [1], [0, 0, 1, 1], [], []>} : vector<128x512xbf16>, vector<512x64xbf16>, vector<128x64xf32> -> vector<128x64xf32>
    %c0_3 = arith.constant 0 : index
    %c0_4 = arith.constant 0 : index
    %3 = vector.load %arg3[%c0_3, %c0_4] : memref<1x64xf32, #tpu.memory_space<vmem>>, vector<1x64xf32>
    %4 = vector.broadcast %3 : vector<1x64xf32> to vector<128x64xf32>
    %5 = arith.addf %2, %4 : vector<128x64xf32>
    %cst_5 = arith.constant 0.000000e+00 : f32
    %6 = vector.broadcast %cst_5 : f32 to vector<128x64xf32>
    %7 = arith.maximumf %5, %6 : vector<128x64xf32>
    %8 = arith.truncf %7 : vector<128x64xf32> to vector<128x64xbf16>
    %c0_6 = arith.constant 0 : index
    %c0_7 = arith.constant 0 : index
    %9 = vector.load %arg4[%c0_6, %c0_7] : memref<128x64xbf16, #tpu.memory_space<vmem>>, vector<128x64xbf16>
    tpu.vector_store %arg4[%c0_6, %c0_7], %8 {strides = array<i32>} : memref<128x64xbf16, #tpu.memory_space<vmem>>, vector<128x64xbf16>,
    return
  }
  func.func @transform_0(%arg0: i32) -> (i32, i32) {
    %c0_i32 = arith.constant 0 : i32
    %c0_i32_0 = arith.constant 0 : i32
    return %arg0, %c0_i32 : i32, i32
  }
  func.func @transform_1(%arg0: i32) -> (i32, i32) {
    %c0_i32 = arith.constant 0 : i32
    %c0_i32_0 = arith.constant 0 : i32
    %c0_i32_1 = arith.constant 0 : i32
    return %c0_i32, %c0_i32_0 : i32, i32
  }
  func.func @transform_2(%arg0: i32) -> (i32, i32) {
    %c0_i32 = arith.constant 0 : i32
    %c0_i32_0 = arith.constant 0 : i32
    %c0_i32_1 = arith.constant 0 : i32
    return %c0_i32, %c0_i32_0 : i32, i32
  }
  func.func @transform_3(%arg0: i32) -> (i32, i32) {
    %c0_i32 = arith.constant 0 : i32
    %c0_i32_0 = arith.constant 0 : i32
    return %arg0, %c0_i32 : i32, i32
  }
}

module attributes {stable_mosaic.version = 11 : i64} {
  func.func @_conv_mm_kernel(%arg0: i32, %arg1: memref<72x576xbf16, #tpu.memory_space<vmem>>, %arg2: memref<576x64xbf16, #tpu.memory_space<vmem>>, %arg3: memref<1x64xf32, #tpu.memory_space<vmem>>, %arg4: memref<72x64xbf16, #tpu.memory_space<vmem>>) attributes {dimension_semantics = [#tpu.dimension_semantics<parallel>], iteration_bounds = array<i64: 1>, scalar_prefetch = 0 : i64, scratch_operands = 0 : i64, tpu.core_type = #tpu.core_type<tc>, window_params = [{transform_indices = @transform_0, window_bounds = array<i64: 72, 576>}, {pipeline_mode = #tpu.pipeline_mode<synchronous>, transform_indices = @transform_1, window_bounds = array<i64: 576, 64>}, {pipeline_mode = #tpu.pipeline_mode<synchronous>, transform_indices = @transform_2, window_bounds = array<i64: 1, 64>}, {transform_indices = @transform_3, window_bounds = array<i64: 72, 64>}]} {
    %c0 = arith.constant 0 : index
    %c0_0 = arith.constant 0 : index
    %0 = vector.load %arg1[%c0, %c0_0] : memref<72x576xbf16, #tpu.memory_space<vmem>>, vector<72x576xbf16>
    %c0_1 = arith.constant 0 : index
    %c0_2 = arith.constant 0 : index
    %1 = vector.load %arg2[%c0_1, %c0_2] : memref<576x64xbf16, #tpu.memory_space<vmem>>, vector<576x64xbf16>
    %cst = arith.constant dense<0.000000e+00> : vector<72x64xf32>
    %2 = tpu.matmul %0, %1, %cst {dimension_numbers = #tpu.dot_dimension_numbers<[1], [0], [0], [1], [0, 0, 1, 1], [], []>} : vector<72x576xbf16>, vector<576x64xbf16>, vector<72x64xf32> -> vector<72x64xf32>
    %c0_3 = arith.constant 0 : index
    %c0_4 = arith.constant 0 : index
    %3 = vector.load %arg3[%c0_3, %c0_4] : memref<1x64xf32, #tpu.memory_space<vmem>>, vector<1x64xf32>
    %4 = vector.broadcast %3 : vector<1x64xf32> to vector<72x64xf32>
    %5 = arith.addf %2, %4 : vector<72x64xf32>
    %cst_5 = arith.constant 0.000000e+00 : f32
    %6 = vector.broadcast %cst_5 : f32 to vector<72x64xf32>
    %7 = arith.maximumf %5, %6 : vector<72x64xf32>
    %8 = arith.truncf %7 : vector<72x64xf32> to vector<72x64xbf16>
    %c0_6 = arith.constant 0 : index
    %c0_7 = arith.constant 0 : index
    %9 = vector.load %arg4[%c0_6, %c0_7] : memref<72x64xbf16, #tpu.memory_space<vmem>>, vector<72x64xbf16>
    tpu.vector_store %arg4[%c0_6, %c0_7], %8 {strides = array<i32>} : memref<72x64xbf16, #tpu.memory_space<vmem>>, vector<72x64xbf16>,
    return
  }
  func.func @transform_0(%arg0: i32) -> (i32, i32) {
    %c0_i32 = arith.constant 0 : i32
    %c0_i32_0 = arith.constant 0 : i32
    return %arg0, %c0_i32 : i32, i32
  }
  func.func @transform_1(%arg0: i32) -> (i32, i32) {
    %c0_i32 = arith.constant 0 : i32
    %c0_i32_0 = arith.constant 0 : i32
    %c0_i32_1 = arith.constant 0 : i32
    return %c0_i32, %c0_i32_0 : i32, i32
  }
  func.func @transform_2(%arg0: i32) -> (i32, i32) {
    %c0_i32 = arith.constant 0 : i32
    %c0_i32_0 = arith.constant 0 : i32
    %c0_i32_1 = arith.constant 0 : i32
    return %c0_i32, %c0_i32_0 : i32, i32
  }
  func.func @transform_3(%arg0: i32) -> (i32, i32) {
    %c0_i32 = arith.constant 0 : i32
    %c0_i32_0 = arith.constant 0 : i32
    return %arg0, %c0_i32 : i32, i32
  }
}

module attributes {stable_mosaic.version = 11 : i64} {
  func.func @_fc_head_kernel(%arg0: i32, %arg1: memref<2x2304xbf16, #tpu.memory_space<vmem>>, %arg2: memref<2304x32xbf16, #tpu.memory_space<vmem>>, %arg3: memref<1x32xf32, #tpu.memory_space<vmem>>, %arg4: memref<32x6xbf16, #tpu.memory_space<vmem>>, %arg5: memref<1x6xf32, #tpu.memory_space<vmem>>, %arg6: memref<2x6xf32, #tpu.memory_space<vmem>>) attributes {dimension_semantics = [#tpu.dimension_semantics<parallel>], iteration_bounds = array<i64: 1>, scalar_prefetch = 0 : i64, scratch_operands = 0 : i64, tpu.core_type = #tpu.core_type<tc>, window_params = [{transform_indices = @transform_0, window_bounds = array<i64: 2, 2304>}, {pipeline_mode = #tpu.pipeline_mode<synchronous>, transform_indices = @transform_1, window_bounds = array<i64: 2304, 32>}, {pipeline_mode = #tpu.pipeline_mode<synchronous>, transform_indices = @transform_2, window_bounds = array<i64: 1, 32>}, {pipeline_mode = #tpu.pipeline_mode<synchronous>, transform_indices = @transform_3, window_bounds = array<i64: 32, 6>}, {pipeline_mode = #tpu.pipeline_mode<synchronous>, transform_indices = @transform_4, window_bounds = array<i64: 1, 6>}, {transform_indices = @transform_5, window_bounds = array<i64: 2, 6>}]} {
    %c0 = arith.constant 0 : index
    %c0_0 = arith.constant 0 : index
    %0 = vector.load %arg1[%c0, %c0_0] : memref<2x2304xbf16, #tpu.memory_space<vmem>>, vector<2x2304xbf16>
    %c0_1 = arith.constant 0 : index
    %c0_2 = arith.constant 0 : index
    %1 = vector.load %arg2[%c0_1, %c0_2] : memref<2304x32xbf16, #tpu.memory_space<vmem>>, vector<2304x32xbf16>
    %cst = arith.constant dense<0.000000e+00> : vector<2x32xf32>
    %2 = tpu.matmul %0, %1, %cst {dimension_numbers = #tpu.dot_dimension_numbers<[1], [0], [0], [1], [0, 0, 1, 1], [], []>} : vector<2x2304xbf16>, vector<2304x32xbf16>, vector<2x32xf32> -> vector<2x32xf32>
    %c0_3 = arith.constant 0 : index
    %c0_4 = arith.constant 0 : index
    %3 = vector.load %arg3[%c0_3, %c0_4] : memref<1x32xf32, #tpu.memory_space<vmem>>, vector<1x32xf32>
    %4 = vector.broadcast %3 : vector<1x32xf32> to vector<2x32xf32>
    %5 = arith.addf %2, %4 : vector<2x32xf32>
    %cst_5 = arith.constant 0.000000e+00 : f32
    %6 = vector.broadcast %cst_5 : f32 to vector<2x32xf32>
    %7 = arith.maximumf %5, %6 : vector<2x32xf32>
    %8 = arith.truncf %7 : vector<2x32xf32> to vector<2x32xbf16>
    %c0_6 = arith.constant 0 : index
    %c0_7 = arith.constant 0 : index
    %9 = vector.load %arg4[%c0_6, %c0_7] : memref<32x6xbf16, #tpu.memory_space<vmem>>, vector<32x6xbf16>
    %cst_8 = arith.constant dense<0.000000e+00> : vector<2x6xf32>
    %10 = tpu.matmul %8, %9, %cst_8 {dimension_numbers = #tpu.dot_dimension_numbers<[1], [0], [0], [1], [0, 0, 1, 1], [], []>} : vector<2x32xbf16>, vector<32x6xbf16>, vector<2x6xf32> -> vector<2x6xf32>
    %c0_9 = arith.constant 0 : index
    %c0_10 = arith.constant 0 : index
    %11 = vector.load %arg5[%c0_9, %c0_10] : memref<1x6xf32, #tpu.memory_space<vmem>>, vector<1x6xf32>
    %12 = vector.broadcast %11 : vector<1x6xf32> to vector<2x6xf32>
    %13 = arith.addf %10, %12 : vector<2x6xf32>
    %cst_11 = arith.constant dense<0xFF800000> : vector<2xf32>
    %14 = vector.multi_reduction <maximumf>, %13, %cst_11 [1] : vector<2x6xf32> to vector<2xf32>
    %15 = vector.shape_cast %14 : vector<2xf32> to vector<2x1xf32>
    %16 = vector.broadcast %15 : vector<2x1xf32> to vector<2x6xf32>
    %17 = arith.subf %13, %16 : vector<2x6xf32>
    %18 = math.exp %17 : vector<2x6xf32>
    %cst_12 = arith.constant dense<0.000000e+00> : vector<2xf32>
    %19 = vector.multi_reduction <add>, %18, %cst_12 [1] : vector<2x6xf32> to vector<2xf32>
    %20 = vector.shape_cast %19 : vector<2xf32> to vector<2x1xf32>
    %21 = tpu.reciprocal %20 {approx = true} : vector<2x1xf32> -> vector<2x1xf32>
    %22 = vector.broadcast %21 : vector<2x1xf32> to vector<2x6xf32>
    %23 = arith.mulf %18, %22 : vector<2x6xf32>
    %c0_13 = arith.constant 0 : index
    %c0_14 = arith.constant 0 : index
    %24 = vector.load %arg6[%c0_13, %c0_14] : memref<2x6xf32, #tpu.memory_space<vmem>>, vector<2x6xf32>
    tpu.vector_store %arg6[%c0_13, %c0_14], %23 {strides = array<i32>} : memref<2x6xf32, #tpu.memory_space<vmem>>, vector<2x6xf32>,
    return
  }
  func.func @transform_0(%arg0: i32) -> (i32, i32) {
    %c0_i32 = arith.constant 0 : i32
    %c0_i32_0 = arith.constant 0 : i32
    return %arg0, %c0_i32 : i32, i32
  }
  func.func @transform_1(%arg0: i32) -> (i32, i32) {
    %c0_i32 = arith.constant 0 : i32
    %c0_i32_0 = arith.constant 0 : i32
    %c0_i32_1 = arith.constant 0 : i32
    return %c0_i32, %c0_i32_0 : i32, i32
  }
  func.func @transform_2(%arg0: i32) -> (i32, i32) {
    %c0_i32 = arith.constant 0 : i32
    %c0_i32_0 = arith.constant 0 : i32
    %c0_i32_1 = arith.constant 0 : i32
    return %c0_i32, %c0_i32_0 : i32, i32
  }
  func.func @transform_3(%arg0: i32) -> (i32, i32) {
    %c0_i32 = arith.constant 0 : i32
    %c0_i32_0 = arith.constant 0 : i32
    %c0_i32_1 = arith.constant 0 : i32
    return %c0_i32, %c0_i32_0 : i32, i32
  }
  func.func @transform_4(%arg0: i32) -> (i32, i32) {
    %c0_i32 = arith.constant 0 : i32
    %c0_i32_0 = arith.constant 0 : i32
    %c0_i32_1 = arith.constant 0 : i32
    return %c0_i32, %c0_i32_0 : i32, i32
  }
  func.func @transform_5(%arg0: i32) -> (i32, i32) {
    %c0_i32 = arith.constant 0 : i32
    %c0_i32_0 = arith.constant 0 : i32
    return %arg0, %c0_i32 : i32, i32
  }
}

</mosaic_0001>

<llo_original>
// kernel: cnn_multiaction_forward.4
$region0: #{cnn_multiaction_forward.4}
  #allocation0 [shape = 'u32[]', space=smem, size = 0x4, offset = 0x4, fixed_abs, tag = 'smem constant byte address 0x4 - core index']
  #allocation1 [shape = 'u32[144,128]{1,0:T(1,128)}', space=vmem, size = 0x12000, scoped, tag = 'internal scratch']
  %s0 = inlined_call_operand.vmem [shape: bf16[722,256], index: 0, kind: input, shape index: {}]
  %s1 = inlined_call_operand.vmem [shape: bf16[256,32], index: 1, kind: input, shape index: {}]
  %s2 = inlined_call_operand.vmem [shape: f32[1,32], index: 2, kind: input, shape index: {}]
  %s3 = inlined_call_operand.vmem [shape: bf16[722,32], index: 3, kind: output, shape index: {}]
  %s4 = sld [smem:[#allocation0]]
  $region89: #{cnn_multiaction_forward.4} parent=0
    _
  %s6 = ssub.s32 1, %s4
  %s7 = scalar_select 0, %s6, %s4
  $region1: #{cnn_multiaction_forward.4} parent=0
    #allocation2 [shape = 'u8[262144]{0}', space=vmem, size = 0x40000, scoped, tag = 'output window, operand 0']
    loop: start=0, step=1, limit=4
    $region2: #{cnn_multiaction_forward.4} parent=1 // loop_pre_header
      _
    $region3: #{cnn_multiaction_forward.4} parent=1 // loop_header
      %s9 = sphi 0, %s13
      %p10 = scmp.ge.s32.totalorder %s9, 4
      %s19 = sphi 0, %s21
      %s22 = sphi 0, %s19
      %s23 = sphi 0, %s22
      %s39 = sphi 0, %s23
      %s43 = sphi 0, %s43
      %s45 = sphi 0, %s43
      %s46 = sphi 0, %s45
      %s60 = sphi 0, %s46
      %s64 = sphi 0, %s64
      %s66 = sphi 0, %s64
      %s67 = sphi 0, %s66
      %s81 = sphi 0, %s67
      %s87 = sphi 0, %s89
      %s90 = sphi 0, %s87
      %s91 = sphi 0, %s90
      %s107 = sphi 0, %s91
    $region4: #{cnn_multiaction_forward.4} parent=1 // loop_header_branch
      %12 = sbr.rel (%p10) target = $region8
    $region5: #{cnn_multiaction_forward.4} parent=1 // loop_body
      %s14 = ssub.s32 %s9, 1
      %s15 = ssub.s32 %s9, 2
      %s16 = sadd.s32 %s9, 1
      %s17 = ssub.s32 %s9, %s16
      %p18 = scmp.eq.s32.totalorder %s17, 0
      %s20 = sadd.s32 %s19, 1
      %s21 = scalar_select %p18, %s19, %s20
      %p24 = pneg %p18
      %p25 = scmp.eq.s32.totalorder %s9, 1
      %p26 = por %p24, %p25
      %p27 = scmp.ne.s32.totalorder %s19, %s22
      %p28 = scmp.eq.s32.totalorder %s9, 0
      %p29 = por %p27, %p28
      %p30 = scmp.ne.s32.totalorder %s19, %s22
      %p31 = scmp.eq.s32.totalorder %s14, 1
      %p32 = por %p30, %p31
      %p33 = scmp.ne.s32.totalorder %s22, %s23
      %p34 = scmp.eq.s32.totalorder %s14, 0
      %p35 = por %p33, %p34
      %p36 = scmp.ne.s32.totalorder %s22, %s23
      %p37 = scmp.eq.s32.totalorder %s15, 1
      %p38 = por %p36, %p37
      %p40 = scmp.ne.s32.totalorder %s23, %s39
      %p41 = scmp.eq.s32.totalorder %s15, 0
      %p42 = por %p40, %p41
      %s44 = sadd.s32 %s43, 1
      %p47 = scmp.eq.s32.totalorder %s9, 1
      %p48 = scmp.ne.s32.totalorder %s43, %s45
      %p49 = scmp.eq.s32.totalorder %s9, 0
      %p50 = por %p48, %p49
      %p51 = scmp.ne.s32.totalorder %s43, %s45
      %p52 = scmp.eq.s32.totalorder %s14, 1
      %p53 = por %p51, %p52
      %p54 = scmp.ne.s32.totalorder %s45, %s46
      %p55 = scmp.eq.s32.totalorder %s14, 0
      %p56 = por %p54, %p55
      %p57 = scmp.ne.s32.totalorder %s45, %s46
      %p58 = scmp.eq.s32.totalorder %s15, 1
      %p59 = por %p57, %p58
      %p61 = scmp.ne.s32.totalorder %s46, %s60
      %p62 = scmp.eq.s32.totalorder %s15, 0
      %p63 = por %p61, %p62
      %s65 = sadd.s32 %s64, 1
      %p68 = scmp.eq.s32.totalorder %s9, 1
      %p69 = scmp.ne.s32.totalorder %s64, %s66
      %p70 = scmp.eq.s32.totalorder %s9, 0
      %p71 = por %p69, %p70
      %p72 = scmp.ne.s32.totalorder %s64, %s66
      %p73 = scmp.eq.s32.totalorder %s14, 1
      %p74 = por %p72, %p73
      %p75 = scmp.ne.s32.totalorder %s66, %s67
      %p76 = scmp.eq.s32.totalorder %s14, 0
      %p77 = por %p75, %p76
      %p78 = scmp.ne.s32.totalorder %s66, %s67
      %p79 = scmp.eq.s32.totalorder %s15, 1
      %p80 = por %p78, %p79
      %p82 = scmp.ne.s32.totalorder %s67, %s81
      %p83 = scmp.eq.s32.totalorder %s15, 0
      %p84 = por %p82, %p83
      %s85 = ssub.s32 %s9, %s16
      %p86 = scmp.eq.s32.totalorder %s85, 0
      %s88 = sadd.s32 %s87, 1
      %s89 = scalar_select %p86, %s87, %s88
      %p92 = pneg %p86
      %p93 = scmp.eq.s32.totalorder %s9, 1
      %p94 = por %p92, %p93
      %p95 = scmp.ne.s32.totalorder %s87, %s90
      %p96 = scmp.eq.s32.totalorder %s9, 0
      %p97 = por %p95, %p96
      %p98 = scmp.ne.s32.totalorder %s87, %s90
      %p99 = scmp.eq.s32.totalorder %s14, 1
      %p100 = por %p98, %p99
      %p101 = scmp.ne.s32.totalorder %s90, %s91
      %p102 = scmp.eq.s32.totalorder %s14, 0
      %p103 = por %p101, %p102
      %p104 = scmp.ne.s32.totalorder %s90, %s91
      %p105 = scmp.eq.s32.totalorder %s15, 1
      %p106 = por %p104, %p105
      %p108 = scmp.ne.s32.totalorder %s91, %s107
      %p109 = scmp.eq.s32.totalorder %s15, 0
      %p110 = por %p108, %p109
      %p111 = scmp.le.s32.totalorder 1, %s9
      %p112 = scmp.lt.s32.totalorder %s9, 3
      %p113 = pnand %p111, %p112
      %p114 = pneg %p113
      // Predicated region
      $region9: #{cnn_multiaction_forward.4} parent=5 // pred_check
        _
      $region10: #{cnn_multiaction_forward.4} parent=5 // pred_check_branch
        %116 = sbr.rel (%p113) target = $region12
      $region11: #{cnn_multiaction_forward.4} parent=5 // pred_region
        %s117 = ssub.s32 %s9, 1
        // Predicated region
        $region13: #{cnn_multiaction_forward.4} parent=11 // pred_check
          %p118 = pneg %p56
        $region14: #{cnn_multiaction_forward.4} parent=11 // pred_check_branch
          %120 = sbr.rel (%p118) target = $region16
        $region15: #{cnn_multiaction_forward.4} parent=11 // pred_region
          _
        $region16: #{cnn_multiaction_forward.4} parent=11 // pred_fallthru
          _
        // Predicated region
        $region17: #{cnn_multiaction_forward.4} parent=11 // pred_check
          %p121 = pneg %p77
        $region18: #{cnn_multiaction_forward.4} parent=11 // pred_check_branch
          %123 = sbr.rel (%p121) target = $region20
        $region19: #{cnn_multiaction_forward.4} parent=11 // pred_region
          _
        $region20: #{cnn_multiaction_forward.4} parent=11 // pred_fallthru
          _
      $region12: #{cnn_multiaction_forward.4} parent=5 // pred_fallthru
        _
      %p124 = scmp.lt.s32.totalorder %s9, 2
      // Predicated region
      $region21: #{cnn_multiaction_forward.4} parent=5 // pred_check
        %p125 = pneg %p124
      $region22: #{cnn_multiaction_forward.4} parent=5 // pred_check_branch
        %127 = sbr.rel (%p125) target = $region24
      $region23: #{cnn_multiaction_forward.4} parent=5 // pred_region
        // Predicated region
        $region25: #{cnn_multiaction_forward.4} parent=23 // pred_check
          %p128 = pneg %p29
        $region26: #{cnn_multiaction_forward.4} parent=23 // pred_check_branch
          %130 = sbr.rel (%p128) target = $region28
        $region27: #{cnn_multiaction_forward.4} parent=23 // pred_region
          %s131 = smul.u32 64, %s9
          %s132 = ssub.s32 91, %s131
          %p133 = scmp.lt.s32.totalorder %s132, 64
          %s134 = scalar_select %p133, %s132, 64
          %s135 = smul.u32 64, %s134
          %s136 = smul.u32 %s135, 2
          %p137 = scmp.lt.s32.totalorder %s131, 90
          %s138 = scalar_select %p137, %s131, 90
          %s139 = smul.addr %s138, 2
          %s140 = smul.addr %s139, 4
          %s141 = scalar_lea.vmem %s0, %s140
          %s142 = smul.u32 64, %s9
          %s143 = ssub.s32 91, %s142
          %p144 = scmp.lt.s32.totalorder %s143, 64
          %s145 = scalar_select %p144, %s143, 64
          %s146 = smul.u32 64, %s145
          %s147 = smul.u32 %s146, 2
        $region28: #{cnn_multiaction_forward.4} parent=23 // pred_fallthru
          _
      $region24: #{cnn_multiaction_forward.4} parent=5 // pred_fallthru
        _
      %p148 = scmp.le.s32.totalorder 1, %s9
      %p149 = scmp.lt.s32.totalorder %s9, 3
      %p150 = pnand %p148, %p149
      %p151 = pneg %p150
      // Predicated region
      $region29: #{cnn_multiaction_forward.4} parent=5 // pred_check
        _
      $region30: #{cnn_multiaction_forward.4} parent=5 // pred_check_branch
        %153 = sbr.rel (%p150) target = $region32
      $region31: #{cnn_multiaction_forward.4} parent=5 // pred_region
        %s154 = ssub.s32 %s9, 1
        %s155 = smul.u32 64, %s14
        %s156 = ssub.s32 91, %s155
        %p157 = scmp.lt.s32.totalorder %s156, 64
        %s158 = scalar_select %p157, %s156, 64
        %s159 = smul.u32 64, %s158
        %s160 = smul.u32 %s159, 2
        %p161 = scmp.lt.s32.totalorder %s155, 90
        %s162 = scalar_select %p161, %s155, 90
        %s163 = smul.addr %s162, 2
        %s164 = smul.addr %s163, 4
        %s165 = scalar_lea.vmem %s0, %s164
        %p166 = pneg %p35
        %p167 = pneg %p32
        %p168 = pneg %p56
        %p169 = pneg %p53
        %p170 = pneg %p77
        %p171 = pneg %p74
        %p172 = pneg %p103
        %p173 = pneg %p100
        %s174 = sand.u32 %s90, 1
        %s175 = sand.u32 %s90, 1
        %s176 = smul.addr %s175, 256
        %s177 = scalar_lea.vmem [#allocation2], %s176
        %s178 = smul.u32 64, %s14
        %s179 = ssub.s32 91, %s178
        %p180 = scmp.lt.s32.totalorder %s179, 64
        %s181 = scalar_select %p180, %s179, 64
        %s182 = smul.u32 64, %s181
        %s183 = smul.u32 %s182, 2
        %p184 = scmp.lt.s32.totalorder %s178, 90
        %s185 = scalar_select %p184, %s178, 90
        %s186 = smul.addr %s185, 2
        %s187 = smul.addr %s186, 4
        %s188 = scalar_lea.vmem %s0, %s187
        %s189 = smul.u32 64, %s14
        %s190 = ssub.s32 91, %s189
        %p191 = scmp.lt.s32.totalorder %s190, 64
        %s192 = scalar_select %p191, %s190, 64
        %s193 = smul.u32 64, %s192
        %s194 = smul.u32 %s193, 2
        %s195 = smul.u32 64, %s14
        %s196 = ssub.s32 91, %s195
        %p197 = scmp.lt.s32.totalorder %s196, 64
        %s198 = scalar_select %p197, %s196, 64
        %s199 = smul.u32 64, %s198
        %v201 = vld [vmem:[%s188] sm:$0xff]
        %v202 = vld [vmem:[%s188 + $0x8] sm:$0xff]
        %v203 = vld [vmem:[%s188 + $0x10] sm:$0xff]
        %v204 = vld [vmem:[%s188 + $0x18] sm:$0xff]
        %v205 = vld [vmem:[%s188 + $0x20] sm:$0xff]
        %v206 = vld [vmem:[%s188 + $0x28] sm:$0xff]
        %v207 = vld [vmem:[%s188 + $0x30] sm:$0xff]
        %v208 = vld [vmem:[%s188 + $0x38] sm:$0xff]
        %v209 = vld [vmem:[%s188 + $0x40] sm:$0xff]
        %v210 = vld [vmem:[%s188 + $0x48] sm:$0xff]
        %v211 = vld [vmem:[%s188 + $0x50] sm:$0xff]
        %v212 = vld [vmem:[%s188 + $0x58] sm:$0xff]
        %v213 = vld [vmem:[%s188 + $0x60] sm:$0xff]
        %v214 = vld [vmem:[%s188 + $0x68] sm:$0xff]
        %v215 = vld [vmem:[%s188 + $0x70] sm:$0xff]
        %v216 = vld [vmem:[%s188 + $0x78] sm:$0xff]
        %v217 = vld [vmem:[%s188 + $0x80] sm:$0xff]
        %v218 = vld [vmem:[%s188 + $0x88] sm:$0xff]
        %v219 = vld [vmem:[%s188 + $0x90] sm:$0xff]
        %v220 = vld [vmem:[%s188 + $0x98] sm:$0xff]
        %v221 = vld [vmem:[%s188 + $0xa0] sm:$0xff]
        %v222 = vld [vmem:[%s188 + $0xa8] sm:$0xff]
        %v223 = vld [vmem:[%s188 + $0xb0] sm:$0xff]
        %v224 = vld [vmem:[%s188 + $0xb8] sm:$0xff]
        %v225 = vld [vmem:[%s188 + $0xc0] sm:$0xff]
        %v226 = vld [vmem:[%s188 + $0xc8] sm:$0xff]
        %v227 = vld [vmem:[%s188 + $0xd0] sm:$0xff]
        %v228 = vld [vmem:[%s188 + $0xd8] sm:$0xff]
        %v229 = vld [vmem:[%s188 + $0xe0] sm:$0xff]
        %v230 = vld [vmem:[%s188 + $0xe8] sm:$0xff]
        %v231 = vld [vmem:[%s188 + $0xf0] sm:$0xff]
        %v232 = vld [vmem:[%s188 + $0xf8] sm:$0xff]
        %v233 = vld [vmem:[%s188 + $0x100] sm:$0xff]
        %v234 = vld [vmem:[%s188 + $0x108] sm:$0xff]
        %v235 = vld [vmem:[%s188 + $0x110] sm:$0xff]
        %v236 = vld [vmem:[%s188 + $0x118] sm:$0xff]
        %v237 = vld [vmem:[%s188 + $0x120] sm:$0xff]
        %v238 = vld [vmem:[%s188 + $0x128] sm:$0xff]
        %v239 = vld [vmem:[%s188 + $0x130] sm:$0xff]
        %v240 = vld [vmem:[%s188 + $0x138] sm:$0xff]
        %v241 = vld [vmem:[%s188 + $0x140] sm:$0xff]
        %v242 = vld [vmem:[%s188 + $0x148] sm:$0xff]
        %v243 = vld [vmem:[%s188 + $0x150] sm:$0xff]
        %v244 = vld [vmem:[%s188 + $0x158] sm:$0xff]
        %v245 = vld [vmem:[%s188 + $0x160] sm:$0xff]
        %v246 = vld [vmem:[%s188 + $0x168] sm:$0xff]
        %v247 = vld [vmem:[%s188 + $0x170] sm:$0xff]
        %v248 = vld [vmem:[%s188 + $0x178] sm:$0xff]
        %v249 = vld [vmem:[%s188 + $0x180] sm:$0xff]
        %v250 = vld [vmem:[%s188 + $0x188] sm:$0xff]
        %v251 = vld [vmem:[%s188 + $0x190] sm:$0xff]
        %v252 = vld [vmem:[%s188 + $0x198] sm:$0xff]
        %v253 = vld [vmem:[%s188 + $0x1a0] sm:$0xff]
        %v254 = vld [vmem:[%s188 + $0x1a8] sm:$0xff]
        %v255 = vld [vmem:[%s188 + $0x1b0] sm:$0xff]
        %v256 = vld [vmem:[%s188 + $0x1b8] sm:$0xff]
        %v257 = vld [vmem:[%s188 + $0x1c0] sm:$0xff]
        %v258 = vld [vmem:[%s188 + $0x1c8] sm:$0xff]
        %v259 = vld [vmem:[%s188 + $0x1d0] sm:$0xff]
        %v260 = vld [vmem:[%s188 + $0x1d8] sm:$0xff]
        %v261 = vld [vmem:[%s188 + $0x1e0] sm:$0xff]
        %v262 = vld [vmem:[%s188 + $0x1e8] sm:$0xff]
        %v263 = vld [vmem:[%s188 + $0x1f0] sm:$0xff]
        %v264 = vld [vmem:[%s188 + $0x1f8] sm:$0xff]
        %v265 = vld [vmem:[%s1] sm:$0xf]
        %v266 = vld [vmem:[%s1 + $0x4] sm:$0xf]
        %v267 = vld [vmem:[%s1 + $0x8] sm:$0xf]
        %v268 = vld [vmem:[%s1 + $0xc] sm:$0xf]
        %v269 = vld [vmem:[%s1 + $0x10] sm:$0xf]
        %v270 = vld [vmem:[%s1 + $0x14] sm:$0xf]
        %v271 = vld [vmem:[%s1 + $0x18] sm:$0xf]
        %v272 = vld [vmem:[%s1 + $0x1c] sm:$0xf]
        %v273 = vld [vmem:[%s1 + $0x20] sm:$0xf]
        %v274 = vld [vmem:[%s1 + $0x24] sm:$0xf]
        %v275 = vld [vmem:[%s1 + $0x28] sm:$0xf]
        %v276 = vld [vmem:[%s1 + $0x2c] sm:$0xf]
        %v277 = vld [vmem:[%s1 + $0x30] sm:$0xf]
        %v278 = vld [vmem:[%s1 + $0x34] sm:$0xf]
        %v279 = vld [vmem:[%s1 + $0x38] sm:$0xf]
        %v280 = vld [vmem:[%s1 + $0x3c] sm:$0xf]
        %v281 = vld [vmem:[%s1 + $0x40] sm:$0xf]
        %v282 = vld [vmem:[%s1 + $0x44] sm:$0xf]
        %v283 = vld [vmem:[%s1 + $0x48] sm:$0xf]
        %v284 = vld [vmem:[%s1 + $0x4c] sm:$0xf]
        %v285 = vld [vmem:[%s1 + $0x50] sm:$0xf]
        %v286 = vld [vmem:[%s1 + $0x54] sm:$0xf]
        %v287 = vld [vmem:[%s1 + $0x58] sm:$0xf]
        %v288 = vld [vmem:[%s1 + $0x5c] sm:$0xf]
        %v289 = vld [vmem:[%s1 + $0x60] sm:$0xf]
        %v290 = vld [vmem:[%s1 + $0x64] sm:$0xf]
        %v291 = vld [vmem:[%s1 + $0x68] sm:$0xf]
        %v292 = vld [vmem:[%s1 + $0x6c] sm:$0xf]
        %v293 = vld [vmem:[%s1 + $0x70] sm:$0xf]
        %v294 = vld [vmem:[%s1 + $0x74] sm:$0xf]
        %v295 = vld [vmem:[%s1 + $0x78] sm:$0xf]
        %v296 = vld [vmem:[%s1 + $0x7c] sm:$0xf]
        %v297 = vld [vmem:[%s2] sm:$0x1]
        %v299 = vlaneseq
        %v300 = vshrl.u32 %v299, 7
        %v301 = vsub.s32 0, %v300
        %v302 = vrot.slane %v297, %v301
        %v368 = vunpack.c.l.b16 %v201
        %v369 = vunpack.c.h.b16 %v201
        %v370 = vunpack.c.l.b16 %v202
        %v371 = vunpack.c.h.b16 %v202
        %v372 = vunpack.c.l.b16 %v203
        %v373 = vunpack.c.h.b16 %v203
        %v374 = vunpack.c.l.b16 %v204
        %v375 = vunpack.c.h.b16 %v204
        %v376 = vunpack.c.l.b16 %v205
        %v377 = vunpack.c.h.b16 %v205
        %v378 = vunpack.c.l.b16 %v206
        %v379 = vunpack.c.h.b16 %v206
        %v380 = vunpack.c.l.b16 %v207
        %v381 = vunpack.c.h.b16 %v207
        %v382 = vunpack.c.l.b16 %v208
        %v383 = vunpack.c.h.b16 %v208
        %v384 = vunpack.c.l.b16 %v209
        %v385 = vunpack.c.h.b16 %v209
        %v386 = vunpack.c.l.b16 %v210
        %v387 = vunpack.c.h.b16 %v210
        %v388 = vunpack.c.l.b16 %v211
        %v389 = vunpack.c.h.b16 %v211
        %v390 = vunpack.c.l.b16 %v212
        %v391 = vunpack.c.h.b16 %v212
        %v392 = vunpack.c.l.b16 %v213
        %v393 = vunpack.c.h.b16 %v213
        %v394 = vunpack.c.l.b16 %v214
        %v395 = vunpack.c.h.b16 %v214
        %v396 = vunpack.c.l.b16 %v215
        %v397 = vunpack.c.h.b16 %v215
        %v398 = vunpack.c.l.b16 %v216
        %v399 = vunpack.c.h.b16 %v216
        %v400 = vunpack.c.l.b16 %v217
        %v401 = vunpack.c.h.b16 %v217
        %v402 = vunpack.c.l.b16 %v218
        %v403 = vunpack.c.h.b16 %v218
        %v404 = vunpack.c.l.b16 %v219
        %v405 = vunpack.c.h.b16 %v219
        %v406 = vunpack.c.l.b16 %v220
        %v407 = vunpack.c.h.b16 %v220
        %v408 = vunpack.c.l.b16 %v221
        %v409 = vunpack.c.h.b16 %v221
        %v410 = vunpack.c.l.b16 %v222
        %v411 = vunpack.c.h.b16 %v222
        %v412 = vunpack.c.l.b16 %v223
        %v413 = vunpack.c.h.b16 %v223
        %v414 = vunpack.c.l.b16 %v224
        %v415 = vunpack.c.h.b16 %v224
        %v416 = vunpack.c.l.b16 %v225
        %v417 = vunpack.c.h.b16 %v225
        %v418 = vunpack.c.l.b16 %v226
        %v419 = vunpack.c.h.b16 %v226
        %v420 = vunpack.c.l.b16 %v227
        %v421 = vunpack.c.h.b16 %v227
        %v422 = vunpack.c.l.b16 %v228
        %v423 = vunpack.c.h.b16 %v228
        %v424 = vunpack.c.l.b16 %v229
        %v425 = vunpack.c.h.b16 %v229
        %v426 = vunpack.c.l.b16 %v230
        %v427 = vunpack.c.h.b16 %v230
        %v428 = vunpack.c.l.b16 %v231
        %v429 = vunpack.c.h.b16 %v231
        %v430 = vunpack.c.l.b16 %v232
        %v431 = vunpack.c.h.b16 %v232
        %v432 = vunpack.c.l.b16 %v233
        %v433 = vunpack.c.h.b16 %v233
        %v434 = vunpack.c.l.b16 %v234
        %v435 = vunpack.c.h.b16 %v234
        %v436 = vunpack.c.l.b16 %v235
        %v437 = vunpack.c.h.b16 %v235
        %v438 = vunpack.c.l.b16 %v236
        %v439 = vunpack.c.h.b16 %v236
        %v440 = vunpack.c.l.b16 %v237
        %v441 = vunpack.c.h.b16 %v237
        %v442 = vunpack.c.l.b16 %v238
        %v443 = vunpack.c.h.b16 %v238
        %v444 = vunpack.c.l.b16 %v239
        %v445 = vunpack.c.h.b16 %v239
        %v446 = vunpack.c.l.b16 %v240
        %v447 = vunpack.c.h.b16 %v240
        %v448 = vunpack.c.l.b16 %v241
        %v449 = vunpack.c.h.b16 %v241
        %v450 = vunpack.c.l.b16 %v242
        %v451 = vunpack.c.h.b16 %v242
        %v452 = vunpack.c.l.b16 %v243
        %v453 = vunpack.c.h.b16 %v243
        %v454 = vunpack.c.l.b16 %v244
        %v455 = vunpack.c.h.b16 %v244
        %v456 = vunpack.c.l.b16 %v245
        %v457 = vunpack.c.h.b16 %v245
        %v458 = vunpack.c.l.b16 %v246
        %v459 = vunpack.c.h.b16 %v246
        %v460 = vunpack.c.l.b16 %v247
        %v461 = vunpack.c.h.b16 %v247
        %v462 = vunpack.c.l.b16 %v248
        %v463 = vunpack.c.h.b16 %v248
        %v464 = vunpack.c.l.b16 %v249
        %v465 = vunpack.c.h.b16 %v249
        %v466 = vunpack.c.l.b16 %v250
        %v467 = vunpack.c.h.b16 %v250
        %v468 = vunpack.c.l.b16 %v251
        %v469 = vunpack.c.h.b16 %v251
        %v470 = vunpack.c.l.b16 %v252
        %v471 = vunpack.c.h.b16 %v252
        %v472 = vunpack.c.l.b16 %v253
        %v473 = vunpack.c.h.b16 %v253
        %v474 = vunpack.c.l.b16 %v254
        %v475 = vunpack.c.h.b16 %v254
        %v476 = vunpack.c.l.b16 %v255
        %v477 = vunpack.c.h.b16 %v255
        %v478 = vunpack.c.l.b16 %v256
        %v479 = vunpack.c.h.b16 %v256
        %v480 = vunpack.c.l.b16 %v257
        %v481 = vunpack.c.h.b16 %v257
        %v482 = vunpack.c.l.b16 %v258
        %v483 = vunpack.c.h.b16 %v258
        %v484 = vunpack.c.l.b16 %v259
        %v485 = vunpack.c.h.b16 %v259
        %v486 = vunpack.c.l.b16 %v260
        %v487 = vunpack.c.h.b16 %v260
        %v488 = vunpack.c.l.b16 %v261
        %v489 = vunpack.c.h.b16 %v261
        %v490 = vunpack.c.l.b16 %v262
        %v491 = vunpack.c.h.b16 %v262
        %v492 = vunpack.c.l.b16 %v263
        %v493 = vunpack.c.h.b16 %v263
        %v494 = vunpack.c.l.b16 %v264
        %v495 = vunpack.c.h.b16 %v264
        %v496 = vpack.c.b16 %v370, %v368
        %v497 = vpack.c.b16 %v371, %v369
        %v498 = vpack.c.b16 %v374, %v372
        %v499 = vpack.c.b16 %v375, %v373
        %v500 = vpack.c.b16 %v378, %v376
        %v501 = vpack.c.b16 %v379, %v377
        %v502 = vpack.c.b16 %v382, %v380
        %v503 = vpack.c.b16 %v383, %v381
        %v504 = vpack.c.b16 %v386, %v384
        %v505 = vpack.c.b16 %v387, %v385
        %v506 = vpack.c.b16 %v390, %v388
        %v507 = vpack.c.b16 %v391, %v389
        %v508 = vpack.c.b16 %v394, %v392
        %v509 = vpack.c.b16 %v395, %v393
        %v510 = vpack.c.b16 %v398, %v396
        %v511 = vpack.c.b16 %v399, %v397
        %v512 = vpack.c.b16 %v402, %v400
        %v513 = vpack.c.b16 %v403, %v401
        %v514 = vpack.c.b16 %v406, %v404
        %v515 = vpack.c.b16 %v407, %v405
        %v516 = vpack.c.b16 %v410, %v408
        %v517 = vpack.c.b16 %v411, %v409
        %v518 = vpack.c.b16 %v414, %v412
        %v519 = vpack.c.b16 %v415, %v413
        %v520 = vpack.c.b16 %v418, %v416
        %v521 = vpack.c.b16 %v419, %v417
        %v522 = vpack.c.b16 %v422, %v420
        %v523 = vpack.c.b16 %v423, %v421
        %v524 = vpack.c.b16 %v426, %v424
        %v525 = vpack.c.b16 %v427, %v425
        %v526 = vpack.c.b16 %v430, %v428
        %v527 = vpack.c.b16 %v431, %v429
        %v528 = vpack.c.b16 %v434, %v432
        %v529 = vpack.c.b16 %v435, %v433
        %v530 = vpack.c.b16 %v438, %v436
        %v531 = vpack.c.b16 %v439, %v437
        %v532 = vpack.c.b16 %v442, %v440
        %v533 = vpack.c.b16 %v443, %v441
        %v534 = vpack.c.b16 %v446, %v444
        %v535 = vpack.c.b16 %v447, %v445
        %v536 = vpack.c.b16 %v450, %v448
        %v537 = vpack.c.b16 %v451, %v449
        %v538 = vpack.c.b16 %v454, %v452
        %v539 = vpack.c.b16 %v455, %v453
        %v540 = vpack.c.b16 %v458, %v456
        %v541 = vpack.c.b16 %v459, %v457
        %v542 = vpack.c.b16 %v462, %v460
        %v543 = vpack.c.b16 %v463, %v461
        %v544 = vpack.c.b16 %v466, %v464
        %v545 = vpack.c.b16 %v467, %v465
        %v546 = vpack.c.b16 %v470, %v468
        %v547 = vpack.c.b16 %v471, %v469
        %v548 = vpack.c.b16 %v474, %v472
        %v549 = vpack.c.b16 %v475, %v473
        %v550 = vpack.c.b16 %v478, %v476
        %v551 = vpack.c.b16 %v479, %v477
        %v552 = vpack.c.b16 %v482, %v480
        %v553 = vpack.c.b16 %v483, %v481
        %v554 = vpack.c.b16 %v486, %v484
        %v555 = vpack.c.b16 %v487, %v485
        %v556 = vpack.c.b16 %v490, %v488
        %v557 = vpack.c.b16 %v491, %v489
        %v558 = vpack.c.b16 %v494, %v492
        %v559 = vpack.c.b16 %v495, %v493
        %v656 = vunpack.c.l.b16 %v265
        %v657 = vunpack.c.l.b16 %v266
        %v658 = vunpack.c.l.b16 %v267
        %v659 = vunpack.c.l.b16 %v268
        %v660 = vunpack.c.l.b16 %v269
        %v661 = vunpack.c.l.b16 %v270
        %v662 = vunpack.c.l.b16 %v271
        %v663 = vunpack.c.l.b16 %v272
        %v664 = vunpack.c.l.b16 %v273
        %v665 = vunpack.c.l.b16 %v274
        %v666 = vunpack.c.l.b16 %v275
        %v667 = vunpack.c.l.b16 %v276
        %v668 = vunpack.c.l.b16 %v277
        %v669 = vunpack.c.l.b16 %v278
        %v670 = vunpack.c.l.b16 %v279
        %v671 = vunpack.c.l.b16 %v280
        %v672 = vunpack.c.l.b16 %v281
        %v673 = vunpack.c.l.b16 %v282
        %v674 = vunpack.c.l.b16 %v283
        %v675 = vunpack.c.l.b16 %v284
        %v676 = vunpack.c.l.b16 %v285
        %v677 = vunpack.c.l.b16 %v286
        %v678 = vunpack.c.l.b16 %v287
        %v679 = vunpack.c.l.b16 %v288
        %v680 = vunpack.c.l.b16 %v289
        %v681 = vunpack.c.l.b16 %v290
        %v682 = vunpack.c.l.b16 %v291
        %v683 = vunpack.c.l.b16 %v292
        %v684 = vunpack.c.l.b16 %v293
        %v685 = vunpack.c.l.b16 %v294
        %v686 = vunpack.c.l.b16 %v295
        %v687 = vunpack.c.l.b16 %v296
        %v688 = vpack.c.b16 %v657, %v656
        %v689 = vpack.c.b16 %v659, %v658
        %v690 = vpack.c.b16 %v661, %v660
        %v691 = vpack.c.b16 %v663, %v662
        %v692 = vpack.c.b16 %v665, %v664
        %v693 = vpack.c.b16 %v667, %v666
        %v694 = vpack.c.b16 %v669, %v668
        %v695 = vpack.c.b16 %v671, %v670
        %v696 = vpack.c.b16 %v673, %v672
        %v697 = vpack.c.b16 %v675, %v674
        %v698 = vpack.c.b16 %v677, %v676
        %v699 = vpack.c.b16 %v679, %v678
        %v700 = vpack.c.b16 %v681, %v680
        %v701 = vpack.c.b16 %v683, %v682
        %v702 = vpack.c.b16 %v685, %v684
        %v703 = vpack.c.b16 %v687, %v686
        %720 = vmatprep.subr.bf16.mxu0 0
        %721 = vmatpush1.bf16.msra.mxu0 %v688
        %722 = vmatprep.subr.bf16.mxu0 0
        %723 = vmatpush1.bf16.msra.mxu0 %v689
        %724 = vmatprep.subr.bf16.mxu0 0
        %725 = vmatpush1.bf16.msra.mxu0 %v690
        %726 = vmatprep.subr.bf16.mxu0 0
        %727 = vmatpush1.bf16.msra.mxu0 %v691
        %728 = vmatprep.subr.bf16.mxu0 0
        %729 = vmatpush1.bf16.msra.mxu0 %v692
        %730 = vmatprep.subr.bf16.mxu0 0
        %731 = vmatpush1.bf16.msra.mxu0 %v693
        %732 = vmatprep.subr.bf16.mxu0 0
        %733 = vmatpush1.bf16.msra.mxu0 %v694
        %734 = vmatprep.subr.bf16.mxu0 0
        %735 = vmatpush1.bf16.msra.mxu0 %v695
        %736 = vmatprep.subr.bf16.mxu0 0
        %737 = vmatpush1.bf16.msra.mxu0 %v696
        %738 = vmatprep.subr.bf16.mxu0 0
        %739 = vmatpush1.bf16.msra.mxu0 %v697
        %740 = vmatprep.subr.bf16.mxu0 0
        %741 = vmatpush1.bf16.msra.mxu0 %v698
        %742 = vmatprep.subr.bf16.mxu0 0
        %743 = vmatpush1.bf16.msra.mxu0 %v699
        %744 = vmatprep.subr.bf16.mxu0 0
        %745 = vmatpush1.bf16.msra.mxu0 %v700
        %746 = vmatprep.subr.bf16.mxu0 0
        %747 = vmatpush1.bf16.msra.mxu0 %v701
        %748 = vmatprep.subr.bf16.mxu0 0
        %749 = vmatpush1.bf16.msra.mxu0 %v702
        %750 = vmatprep.subr.bf16.mxu0 0
        %751 = vmatpush1.bf16.msra.mxu0 %v703
        %752 = vmatprep.mubr.bf16.mxu0 %v497
        %753 = vmatmul.mubr.bf16.gmra.mrb[0].mxu0 %v496
        %v754 = vpop.f32.mrb[0].mxu0
        %v755 = vadd.f32 %v302, %v754
        %v756 = vpop.f32.mrb[0].mxu0
        %v757 = vpop.f32.mrb[0].mxu0
        %v758 = vadd.f32 %v302, %v757
        %v759 = vpop.f32.mrb[0].mxu0
        %760 = vmatprep.mubr.bf16.mxu0 %v499
        %761 = vmatmul.mubr.bf16.gmra.mrb[0].mxu0 %v498
        %v762 = vpop.f32.mrb[0].mxu0
        %v763 = vadd.f32 %v302, %v762
        %v764 = vpop.f32.mrb[0].mxu0
        %v765 = vpop.f32.mrb[0].mxu0
        %v766 = vadd.f32 %v302, %v765
        %v767 = vpop.f32.mrb[0].mxu0
        %768 = vmatprep.mubr.bf16.mxu0 %v501
        %769 = vmatmul.mubr.bf16.gmra.mrb[0].mxu0 %v500
        %v770 = vpop.f32.mrb[0].mxu0
        %v771 = vadd.f32 %v302, %v770
        %v772 = vpop.f32.mrb[0].mxu0
        %v773 = vpop.f32.mrb[0].mxu0
        %v774 = vadd.f32 %v302, %v773
        %v775 = vpop.f32.mrb[0].mxu0
        %776 = vmatprep.mubr.bf16.mxu0 %v503
        %777 = vmatmul.mubr.bf16.gmra.mrb[0].mxu0 %v502
        %v778 = vpop.f32.mrb[0].mxu0
        %v779 = vadd.f32 %v302, %v778
        %v780 = vpop.f32.mrb[0].mxu0
        %v781 = vpop.f32.mrb[0].mxu0
        %v782 = vadd.f32 %v302, %v781
        %v783 = vpop.f32.mrb[0].mxu0
        %784 = vmatprep.mubr.bf16.mxu0 %v505
        %785 = vmatmul.mubr.bf16.gmra.mrb[0].mxu0 %v504
        %v786 = vpop.f32.mrb[0].mxu0
        %v787 = vadd.f32 %v302, %v786
        %v788 = vpop.f32.mrb[0].mxu0
        %v789 = vpop.f32.mrb[0].mxu0
        %v790 = vadd.f32 %v302, %v789
        %v791 = vpop.f32.mrb[0].mxu0
        %792 = vmatprep.mubr.bf16.mxu0 %v507
        %793 = vmatmul.mubr.bf16.gmra.mrb[0].mxu0 %v506
        %v794 = vpop.f32.mrb[0].mxu0
        %v795 = vadd.f32 %v302, %v794
        %v796 = vpop.f32.mrb[0].mxu0
        %v797 = vpop.f32.mrb[0].mxu0
        %v798 = vadd.f32 %v302, %v797
        %v799 = vpop.f32.mrb[0].mxu0
        %800 = vmatprep.mubr.bf16.mxu0 %v509
        %801 = vmatmul.mubr.bf16.gmra.mrb[0].mxu0 %v508
        %v802 = vpop.f32.mrb[0].mxu0
        %v803 = vadd.f32 %v302, %v802
        %v804 = vpop.f32.mrb[0].mxu0
        %v805 = vpop.f32.mrb[0].mxu0
        %v806 = vadd.f32 %v302, %v805
        %v807 = vpop.f32.mrb[0].mxu0
        %808 = vmatprep.mubr.bf16.mxu0 %v511
        %809 = vmatmul.mubr.bf16.gmra.mrb[0].mxu0 %v510
        %v810 = vpop.f32.mrb[0].mxu0
        %v811 = vadd.f32 %v302, %v810
        %v812 = vpop.f32.mrb[0].mxu0
        %v813 = vpop.f32.mrb[0].mxu0
        %v814 = vadd.f32 %v302, %v813
        %v815 = vpop.f32.mrb[0].mxu0
        %816 = vmatprep.mubr.bf16.mxu0 %v513
        %817 = vmatmul.mubr.bf16.gmra.mrb[0].mxu0 %v512
        %v818 = vpop.f32.mrb[0].mxu0
        %v819 = vadd.f32 %v302, %v818
        %v820 = vpop.f32.mrb[0].mxu0
        %v821 = vpop.f32.mrb[0].mxu0
        %v822 = vadd.f32 %v302, %v821
        %v823 = vpop.f32.mrb[0].mxu0
        %824 = vmatprep.mubr.bf16.mxu0 %v515
        %825 = vmatmul.mubr.bf16.gmra.mrb[0].mxu0 %v514
        %v826 = vpop.f32.mrb[0].mxu0
        %v827 = vadd.f32 %v302, %v826
        %v828 = vpop.f32.mrb[0].mxu0
        %v829 = vpop.f32.mrb[0].mxu0
        %v830 = vadd.f32 %v302, %v829
        %v831 = vpop.f32.mrb[0].mxu0
        %832 = vmatprep.mubr.bf16.mxu0 %v517
        %833 = vmatmul.mubr.bf16.gmra.mrb[0].mxu0 %v516
        %v834 = vpop.f32.mrb[0].mxu0
        %v835 = vadd.f32 %v302, %v834
        %v836 = vpop.f32.mrb[0].mxu0
        %v837 = vpop.f32.mrb[0].mxu0
        %v838 = vadd.f32 %v302, %v837
        %v839 = vpop.f32.mrb[0].mxu0
        %840 = vmatprep.mubr.bf16.mxu0 %v519
        %841 = vmatmul.mubr.bf16.gmra.mrb[0].mxu0 %v518
        %v842 = vpop.f32.mrb[0].mxu0
        %v843 = vadd.f32 %v302, %v842
        %v844 = vpop.f32.mrb[0].mxu0
        %v845 = vpop.f32.mrb[0].mxu0
        %v846 = vadd.f32 %v302, %v845
        %v847 = vpop.f32.mrb[0].mxu0
        %848 = vmatprep.mubr.bf16.mxu0 %v521
        %849 = vmatmul.mubr.bf16.gmra.mrb[0].mxu0 %v520
        %v850 = vpop.f32.mrb[0].mxu0
        %v851 = vadd.f32 %v302, %v850
        %v852 = vpop.f32.mrb[0].mxu0
        %v853 = vpop.f32.mrb[0].mxu0
        %v854 = vadd.f32 %v302, %v853
        %v855 = vpop.f32.mrb[0].mxu0
        %856 = vmatprep.mubr.bf16.mxu0 %v523
        %857 = vmatmul.mubr.bf16.gmra.mrb[0].mxu0 %v522
        %v858 = vpop.f32.mrb[0].mxu0
        %v859 = vadd.f32 %v302, %v858
        %v860 = vpop.f32.mrb[0].mxu0
        %v861 = vpop.f32.mrb[0].mxu0
        %v862 = vadd.f32 %v302, %v861
        %v863 = vpop.f32.mrb[0].mxu0
        %864 = vmatprep.mubr.bf16.mxu0 %v525
        %865 = vmatmul.mubr.bf16.gmra.mrb[0].mxu0 %v524
        %v866 = vpop.f32.mrb[0].mxu0
        %v867 = vadd.f32 %v302, %v866
        %v868 = vpop.f32.mrb[0].mxu0
        %v869 = vpop.f32.mrb[0].mxu0
        %v870 = vadd.f32 %v302, %v869
        %v871 = vpop.f32.mrb[0].mxu0
        %872 = vmatprep.mubr.bf16.mxu0 %v527
        %873 = vmatmul.mubr.bf16.gmra.mrb[0].mxu0 %v526
        %v874 = vpop.f32.mrb[0].mxu0
        %v875 = vadd.f32 %v302, %v874
        %v876 = vpop.f32.mrb[0].mxu0
        %v877 = vpop.f32.mrb[0].mxu0
        %v878 = vadd.f32 %v302, %v877
        %v879 = vpop.f32.mrb[0].mxu0
        %880 = vmatprep.mubr.bf16.mxu0 %v529
        %881 = vmatmul.mubr.bf16.gmra.mrb[0].mxu0 %v528
        %v882 = vpop.f32.mrb[0].mxu0
        %v883 = vadd.f32 %v302, %v882
        %v884 = vpop.f32.mrb[0].mxu0
        %v885 = vpop.f32.mrb[0].mxu0
        %v886 = vadd.f32 %v302, %v885
        %v887 = vpop.f32.mrb[0].mxu0
        %888 = vmatprep.mubr.bf16.mxu0 %v531
        %889 = vmatmul.mubr.bf16.gmra.mrb[0].mxu0 %v530
        %v890 = vpop.f32.mrb[0].mxu0
        %v891 = vadd.f32 %v302, %v890
        %v892 = vpop.f32.mrb[0].mxu0
        %v893 = vpop.f32.mrb[0].mxu0
        %v894 = vadd.f32 %v302, %v893
        %v895 = vpop.f32.mrb[0].mxu0
        %896 = vmatprep.mubr.bf16.mxu0 %v533
        %897 = vmatmul.mubr.bf16.gmra.mrb[0].mxu0 %v532
        %v898 = vpop.f32.mrb[0].mxu0
        %v899 = vadd.f32 %v302, %v898
        %v900 = vpop.f32.mrb[0].mxu0
        %v901 = vpop.f32.mrb[0].mxu0
        %v902 = vadd.f32 %v302, %v901
        %v903 = vpop.f32.mrb[0].mxu0
        %904 = vmatprep.mubr.bf16.mxu0 %v535
        %905 = vmatmul.mubr.bf16.gmra.mrb[0].mxu0 %v534
        %v906 = vpop.f32.mrb[0].mxu0
        %v907 = vadd.f32 %v302, %v906
        %v908 = vpop.f32.mrb[0].mxu0
        %v909 = vpop.f32.mrb[0].mxu0
        %v910 = vadd.f32 %v302, %v909
        %v911 = vpop.f32.mrb[0].mxu0
        %912 = vmatprep.mubr.bf16.mxu0 %v537
        %913 = vmatmul.mubr.bf16.gmra.mrb[0].mxu0 %v536
        %v914 = vpop.f32.mrb[0].mxu0
        %v915 = vadd.f32 %v302, %v914
        %v916 = vpop.f32.mrb[0].mxu0
        %v917 = vpop.f32.mrb[0].mxu0
        %v918 = vadd.f32 %v302, %v917
        %v919 = vpop.f32.mrb[0].mxu0
        %920 = vmatprep.mubr.bf16.mxu0 %v539
        %921 = vmatmul.mubr.bf16.gmra.mrb[0].mxu0 %v538
        %v922 = vpop.f32.mrb[0].mxu0
        %v923 = vadd.f32 %v302, %v922
        %v924 = vpop.f32.mrb[0].mxu0
        %v925 = vpop.f32.mrb[0].mxu0
        %v926 = vadd.f32 %v302, %v925
        %v927 = vpop.f32.mrb[0].mxu0
        %928 = vmatprep.mubr.bf16.mxu0 %v541
        %929 = vmatmul.mubr.bf16.gmra.mrb[0].mxu0 %v540
        %v930 = vpop.f32.mrb[0].mxu0
        %v931 = vadd.f32 %v302, %v930
        %v932 = vpop.f32.mrb[0].mxu0
        %v933 = vpop.f32.mrb[0].mxu0
        %v934 = vadd.f32 %v302, %v933
        %v935 = vpop.f32.mrb[0].mxu0
        %936 = vmatprep.mubr.bf16.mxu0 %v543
        %937 = vmatmul.mubr.bf16.gmra.mrb[0].mxu0 %v542
        %v938 = vpop.f32.mrb[0].mxu0
        %v939 = vadd.f32 %v302, %v938
        %v940 = vpop.f32.mrb[0].mxu0
        %v941 = vpop.f32.mrb[0].mxu0
        %v942 = vadd.f32 %v302, %v941
        %v943 = vpop.f32.mrb[0].mxu0
        %944 = vmatprep.mubr.bf16.mxu0 %v545
        %945 = vmatmul.mubr.bf16.gmra.mrb[0].mxu0 %v544
        %v946 = vpop.f32.mrb[0].mxu0
        %v947 = vadd.f32 %v302, %v946
        %v948 = vpop.f32.mrb[0].mxu0
        %v949 = vpop.f32.mrb[0].mxu0
        %v950 = vadd.f32 %v302, %v949
        %v951 = vpop.f32.mrb[0].mxu0
        %952 = vmatprep.mubr.bf16.mxu0 %v547
        %953 = vmatmul.mubr.bf16.gmra.mrb[0].mxu0 %v546
        %v954 = vpop.f32.mrb[0].mxu0
        %v955 = vadd.f32 %v302, %v954
        %v956 = vpop.f32.mrb[0].mxu0
        %v957 = vpop.f32.mrb[0].mxu0
        %v958 = vadd.f32 %v302, %v957
        %v959 = vpop.f32.mrb[0].mxu0
        %960 = vmatprep.mubr.bf16.mxu0 %v549
        %961 = vmatmul.mubr.bf16.gmra.mrb[0].mxu0 %v548
        %v962 = vpop.f32.mrb[0].mxu0
        %v963 = vadd.f32 %v302, %v962
        %v964 = vpop.f32.mrb[0].mxu0
        %v965 = vpop.f32.mrb[0].mxu0
        %v966 = vadd.f32 %v302, %v965
        %v967 = vpop.f32.mrb[0].mxu0
        %968 = vmatprep.mubr.bf16.mxu0 %v551
        %969 = vmatmul.mubr.bf16.gmra.mrb[0].mxu0 %v550
        %v970 = vpop.f32.mrb[0].mxu0
        %v971 = vadd.f32 %v302, %v970
        %v972 = vpop.f32.mrb[0].mxu0
        %v973 = vpop.f32.mrb[0].mxu0
        %v974 = vadd.f32 %v302, %v973
        %v975 = vpop.f32.mrb[0].mxu0
        %976 = vmatprep.mubr.bf16.mxu0 %v553
        %977 = vmatmul.mubr.bf16.gmra.mrb[0].mxu0 %v552
        %v978 = vpop.f32.mrb[0].mxu0
        %v979 = vadd.f32 %v302, %v978
        %v980 = vpop.f32.mrb[0].mxu0
        %v981 = vpop.f32.mrb[0].mxu0
        %v982 = vadd.f32 %v302, %v981
        %v983 = vpop.f32.mrb[0].mxu0
        %984 = vmatprep.mubr.bf16.mxu0 %v555
        %985 = vmatmul.mubr.bf16.gmra.mrb[0].mxu0 %v554
        %v986 = vpop.f32.mrb[0].mxu0
        %v987 = vadd.f32 %v302, %v986
        %v988 = vpop.f32.mrb[0].mxu0
        %v989 = vpop.f32.mrb[0].mxu0
        %v990 = vadd.f32 %v302, %v989
        %v991 = vpop.f32.mrb[0].mxu0
        %992 = vmatprep.mubr.bf16.mxu0 %v557
        %993 = vmatmul.mubr.bf16.gmra.mrb[0].mxu0 %v556
        %v994 = vpop.f32.mrb[0].mxu0
        %v995 = vadd.f32 %v302, %v994
        %v996 = vpop.f32.mrb[0].mxu0
        %v997 = vpop.f32.mrb[0].mxu0
        %v998 = vadd.f32 %v302, %v997
        %v999 = vpop.f32.mrb[0].mxu0
        %1000 = vmatprep.mubr.bf16.mxu0 %v559
        %1001 = vmatmul.mubr.bf16.gmra.mrb[0].mxu0 %v558
        %v1002 = vpop.f32.mrb[0].mxu0
        %v1003 = vadd.f32 %v302, %v1002
        %v1004 = vpop.f32.mrb[0].mxu0
        %v1005 = vpop.f32.mrb[0].mxu0
        %v1006 = vadd.f32 %v302, %v1005
        %v1007 = vpop.f32.mrb[0].mxu0
        %1008 = vdwg.mxu0
        %v1009 = vmax.f32 %v755, 0.0
        %v1010 = vmax.f32 %v758, 0.0
        %v1011 = vmax.f32 %v763, 0.0
        %v1012 = vmax.f32 %v766, 0.0
        %v1013 = vmax.f32 %v771, 0.0
        %v1014 = vmax.f32 %v774, 0.0
        %v1015 = vmax.f32 %v779, 0.0
        %v1016 = vmax.f32 %v782, 0.0
        %v1017 = vmax.f32 %v787, 0.0
        %v1018 = vmax.f32 %v790, 0.0
        %v1019 = vmax.f32 %v795, 0.0
        %v1020 = vmax.f32 %v798, 0.0
        %v1021 = vmax.f32 %v803, 0.0
        %v1022 = vmax.f32 %v806, 0.0
        %v1023 = vmax.f32 %v811, 0.0
        %v1024 = vmax.f32 %v814, 0.0
        %v1025 = vmax.f32 %v819, 0.0
        %v1026 = vmax.f32 %v822, 0.0
        %v1027 = vmax.f32 %v827, 0.0
        %v1028 = vmax.f32 %v830, 0.0
        %v1029 = vmax.f32 %v835, 0.0
        %v1030 = vmax.f32 %v838, 0.0
        %v1031 = vmax.f32 %v843, 0.0
        %v1032 = vmax.f32 %v846, 0.0
        %v1033 = vmax.f32 %v851, 0.0
        %v1034 = vmax.f32 %v854, 0.0
        %v1035 = vmax.f32 %v859, 0.0
        %v1036 = vmax.f32 %v862, 0.0
        %v1037 = vmax.f32 %v867, 0.0
        %v1038 = vmax.f32 %v870, 0.0
        %v1039 = vmax.f32 %v875, 0.0
        %v1040 = vmax.f32 %v878, 0.0
        %v1041 = vmax.f32 %v883, 0.0
        %v1042 = vmax.f32 %v886, 0.0
        %v1043 = vmax.f32 %v891, 0.0
        %v1044 = vmax.f32 %v894, 0.0
        %v1045 = vmax.f32 %v899, 0.0
        %v1046 = vmax.f32 %v902, 0.0
        %v1047 = vmax.f32 %v907, 0.0
        %v1048 = vmax.f32 %v910, 0.0
        %v1049 = vmax.f32 %v915, 0.0
        %v1050 = vmax.f32 %v918, 0.0
        %v1051 = vmax.f32 %v923, 0.0
        %v1052 = vmax.f32 %v926, 0.0
        %v1053 = vmax.f32 %v931, 0.0
        %v1054 = vmax.f32 %v934, 0.0
        %v1055 = vmax.f32 %v939, 0.0
        %v1056 = vmax.f32 %v942, 0.0
        %v1057 = vmax.f32 %v947, 0.0
        %v1058 = vmax.f32 %v950, 0.0
        %v1059 = vmax.f32 %v955, 0.0
        %v1060 = vmax.f32 %v958, 0.0
        %v1061 = vmax.f32 %v963, 0.0
        %v1062 = vmax.f32 %v966, 0.0
        %v1063 = vmax.f32 %v971, 0.0
        %v1064 = vmax.f32 %v974, 0.0
        %v1065 = vmax.f32 %v979, 0.0
        %v1066 = vmax.f32 %v982, 0.0
        %v1067 = vmax.f32 %v987, 0.0
        %v1068 = vmax.f32 %v990, 0.0
        %v1069 = vmax.f32 %v995, 0.0
        %v1070 = vmax.f32 %v998, 0.0
        %v1071 = vmax.f32 %v1003, 0.0
        %v1072 = vmax.f32 %v1006, 0.0
        %v1073 = vpack.c.bf16 %v1010, %v1009
        %v1074 = vpack.c.bf16 %v1012, %v1011
        %v1075 = vpack.c.bf16 %v1014, %v1013
        %v1076 = vpack.c.bf16 %v1016, %v1015
        %v1077 = vpack.c.bf16 %v1018, %v1017
        %v1078 = vpack.c.bf16 %v1020, %v1019
        %v1079 = vpack.c.bf16 %v1022, %v1021
        %v1080 = vpack.c.bf16 %v1024, %v1023
        %v1081 = vpack.c.bf16 %v1026, %v1025
        %v1082 = vpack.c.bf16 %v1028, %v1027
        %v1083 = vpack.c.bf16 %v1030, %v1029
        %v1084 = vpack.c.bf16 %v1032, %v1031
        %v1085 = vpack.c.bf16 %v1034, %v1033
        %v1086 = vpack.c.bf16 %v1036, %v1035
        %v1087 = vpack.c.bf16 %v1038, %v1037
        %v1088 = vpack.c.bf16 %v1040, %v1039
        %v1089 = vpack.c.bf16 %v1042, %v1041
        %v1090 = vpack.c.bf16 %v1044, %v1043
        %v1091 = vpack.c.bf16 %v1046, %v1045
        %v1092 = vpack.c.bf16 %v1048, %v1047
        %v1093 = vpack.c.bf16 %v1050, %v1049
        %v1094 = vpack.c.bf16 %v1052, %v1051
        %v1095 = vpack.c.bf16 %v1054, %v1053
        %v1096 = vpack.c.bf16 %v1056, %v1055
        %v1097 = vpack.c.bf16 %v1058, %v1057
        %v1098 = vpack.c.bf16 %v1060, %v1059
        %v1099 = vpack.c.bf16 %v1062, %v1061
        %v1100 = vpack.c.bf16 %v1064, %v1063
        %v1101 = vpack.c.bf16 %v1066, %v1065
        %v1102 = vpack.c.bf16 %v1068, %v1067
        %v1103 = vpack.c.bf16 %v1070, %v1069
        %v1104 = vpack.c.bf16 %v1072, %v1071
        %v1137 = vunpack.c.l.b16 %v1073
        %v1138 = vunpack.c.h.b16 %v1073
        %v1139 = vunpack.c.l.b16 %v1074
        %v1140 = vunpack.c.h.b16 %v1074
        %v1141 = vunpack.c.l.b16 %v1075
        %v1142 = vunpack.c.h.b16 %v1075
        %v1143 = vunpack.c.l.b16 %v1076
        %v1144 = vunpack.c.h.b16 %v1076
        %v1145 = vunpack.c.l.b16 %v1077
        %v1146 = vunpack.c.h.b16 %v1077
        %v1147 = vunpack.c.l.b16 %v1078
        %v1148 = vunpack.c.h.b16 %v1078
        %v1149 = vunpack.c.l.b16 %v1079
        %v1150 = vunpack.c.h.b16 %v1079
        %v1151 = vunpack.c.l.b16 %v1080
        %v1152 = vunpack.c.h.b16 %v1080
        %v1153 = vunpack.c.l.b16 %v1081
        %v1154 = vunpack.c.h.b16 %v1081
        %v1155 = vunpack.c.l.b16 %v1082
        %v1156 = vunpack.c.h.b16 %v1082
        %v1157 = vunpack.c.l.b16 %v1083
        %v1158 = vunpack.c.h.b16 %v1083
        %v1159 = vunpack.c.l.b16 %v1084
        %v1160 = vunpack.c.h.b16 %v1084
        %v1161 = vunpack.c.l.b16 %v1085
        %v1162 = vunpack.c.h.b16 %v1085
        %v1163 = vunpack.c.l.b16 %v1086
        %v1164 = vunpack.c.h.b16 %v1086
        %v1165 = vunpack.c.l.b16 %v1087
        %v1166 = vunpack.c.h.b16 %v1087
        %v1167 = vunpack.c.l.b16 %v1088
        %v1168 = vunpack.c.h.b16 %v1088
        %v1169 = vunpack.c.l.b16 %v1089
        %v1170 = vunpack.c.h.b16 %v1089
        %v1171 = vunpack.c.l.b16 %v1090
        %v1172 = vunpack.c.h.b16 %v1090
        %v1173 = vunpack.c.l.b16 %v1091
        %v1174 = vunpack.c.h.b16 %v1091
        %v1175 = vunpack.c.l.b16 %v1092
        %v1176 = vunpack.c.h.b16 %v1092
        %v1177 = vunpack.c.l.b16 %v1093
        %v1178 = vunpack.c.h.b16 %v1093
        %v1179 = vunpack.c.l.b16 %v1094
        %v1180 = vunpack.c.h.b16 %v1094
        %v1181 = vunpack.c.l.b16 %v1095
        %v1182 = vunpack.c.h.b16 %v1095
        %v1183 = vunpack.c.l.b16 %v1096
        %v1184 = vunpack.c.h.b16 %v1096
        %v1185 = vunpack.c.l.b16 %v1097
        %v1186 = vunpack.c.h.b16 %v1097
        %v1187 = vunpack.c.l.b16 %v1098
        %v1188 = vunpack.c.h.b16 %v1098
        %v1189 = vunpack.c.l.b16 %v1099
        %v1190 = vunpack.c.h.b16 %v1099
        %v1191 = vunpack.c.l.b16 %v1100
        %v1192 = vunpack.c.h.b16 %v1100
        %v1193 = vunpack.c.l.b16 %v1101
        %v1194 = vunpack.c.h.b16 %v1101
        %v1195 = vunpack.c.l.b16 %v1102
        %v1196 = vunpack.c.h.b16 %v1102
        %v1197 = vunpack.c.l.b16 %v1103
        %v1198 = vunpack.c.h.b16 %v1103
        %v1199 = vunpack.c.l.b16 %v1104
        %v1200 = vunpack.c.h.b16 %v1104
        %v1201 = vpack.c.b16 %v1137, %v1137
        %v1202 = vpack.c.b16 %v1138, %v1138
        %v1203 = vpack.c.b16 %v1139, %v1139
        %v1204 = vpack.c.b16 %v1140, %v1140
        %v1205 = vpack.c.b16 %v1141, %v1141
        %v1206 = vpack.c.b16 %v1142, %v1142
        %v1207 = vpack.c.b16 %v1143, %v1143
        %v1208 = vpack.c.b16 %v1144, %v1144
        %v1209 = vpack.c.b16 %v1145, %v1145
        %v1210 = vpack.c.b16 %v1146, %v1146
        %v1211 = vpack.c.b16 %v1147, %v1147
        %v1212 = vpack.c.b16 %v1148, %v1148
        %v1213 = vpack.c.b16 %v1149, %v1149
        %v1214 = vpack.c.b16 %v1150, %v1150
        %v1215 = vpack.c.b16 %v1151, %v1151
        %v1216 = vpack.c.b16 %v1152, %v1152
        %v1217 = vpack.c.b16 %v1153, %v1153
        %v1218 = vpack.c.b16 %v1154, %v1154
        %v1219 = vpack.c.b16 %v1155, %v1155
        %v1220 = vpack.c.b16 %v1156, %v1156
        %v1221 = vpack.c.b16 %v1157, %v1157
        %v1222 = vpack.c.b16 %v1158, %v1158
        %v1223 = vpack.c.b16 %v1159, %v1159
        %v1224 = vpack.c.b16 %v1160, %v1160
        %v1225 = vpack.c.b16 %v1161, %v1161
        %v1226 = vpack.c.b16 %v1162, %v1162
        %v1227 = vpack.c.b16 %v1163, %v1163
        %v1228 = vpack.c.b16 %v1164, %v1164
        %v1229 = vpack.c.b16 %v1165, %v1165
        %v1230 = vpack.c.b16 %v1166, %v1166
        %v1231 = vpack.c.b16 %v1167, %v1167
        %v1232 = vpack.c.b16 %v1168, %v1168
        %v1233 = vpack.c.b16 %v1169, %v1169
        %v1234 = vpack.c.b16 %v1170, %v1170
        %v1235 = vpack.c.b16 %v1171, %v1171
        %v1236 = vpack.c.b16 %v1172, %v1172
        %v1237 = vpack.c.b16 %v1173, %v1173
        %v1238 = vpack.c.b16 %v1174, %v1174
        %v1239 = vpack.c.b16 %v1175, %v1175
        %v1240 = vpack.c.b16 %v1176, %v1176
        %v1241 = vpack.c.b16 %v1177, %v1177
        %v1242 = vpack.c.b16 %v1178, %v1178
        %v1243 = vpack.c.b16 %v1179, %v1179
        %v1244 = vpack.c.b16 %v1180, %v1180
        %v1245 = vpack.c.b16 %v1181, %v1181
        %v1246 = vpack.c.b16 %v1182, %v1182
        %v1247 = vpack.c.b16 %v1183, %v1183
        %v1248 = vpack.c.b16 %v1184, %v1184
        %v1249 = vpack.c.b16 %v1185, %v1185
        %v1250 = vpack.c.b16 %v1186, %v1186
        %v1251 = vpack.c.b16 %v1187, %v1187
        %v1252 = vpack.c.b16 %v1188, %v1188
        %v1253 = vpack.c.b16 %v1189, %v1189
        %v1254 = vpack.c.b16 %v1190, %v1190
        %v1255 = vpack.c.b16 %v1191, %v1191
        %v1256 = vpack.c.b16 %v1192, %v1192
        %v1257 = vpack.c.b16 %v1193, %v1193
        %v1258 = vpack.c.b16 %v1194, %v1194
        %v1259 = vpack.c.b16 %v1195, %v1195
        %v1260 = vpack.c.b16 %v1196, %v1196
        %v1261 = vpack.c.b16 %v1197, %v1197
        %v1262 = vpack.c.b16 %v1198, %v1198
        %v1263 = vpack.c.b16 %v1199, %v1199
        %v1264 = vpack.c.b16 %v1200, %v1200
        %vm1329 = vcmask 257024
        %1330 = vst.msk [vmem:[%s177] sm:$0xf] %vm1329, %v1201
        %1331 = vst.msk [vmem:[%s177 + $0x4] sm:$0xf] %vm1329, %v1202
        %1332 = vst.msk [vmem:[%s177 + $0x8] sm:$0xf] %vm1329, %v1203
        %1333 = vst.msk [vmem:[%s177 + $0xc] sm:$0xf] %vm1329, %v1204
        %1334 = vst.msk [vmem:[%s177 + $0x10] sm:$0xf] %vm1329, %v1205
        %1335 = vst.msk [vmem:[%s177 + $0x14] sm:$0xf] %vm1329, %v1206
        %1336 = vst.msk [vmem:[%s177 + $0x18] sm:$0xf] %vm1329, %v1207
        %1337 = vst.msk [vmem:[%s177 + $0x1c] sm:$0xf] %vm1329, %v1208
        %1338 = vst.msk [vmem:[%s177 + $0x20] sm:$0xf] %vm1329, %v1209
        %1339 = vst.msk [vmem:[%s177 + $0x24] sm:$0xf] %vm1329, %v1210
        %1340 = vst.msk [vmem:[%s177 + $0x28] sm:$0xf] %vm1329, %v1211
        %1341 = vst.msk [vmem:[%s177 + $0x2c] sm:$0xf] %vm1329, %v1212
        %1342 = vst.msk [vmem:[%s177 + $0x30] sm:$0xf] %vm1329, %v1213
        %1343 = vst.msk [vmem:[%s177 + $0x34] sm:$0xf] %vm1329, %v1214
        %1344 = vst.msk [vmem:[%s177 + $0x38] sm:$0xf] %vm1329, %v1215
        %1345 = vst.msk [vmem:[%s177 + $0x3c] sm:$0xf] %vm1329, %v1216
        %1346 = vst.msk [vmem:[%s177 + $0x40] sm:$0xf] %vm1329, %v1217
        %1347 = vst.msk [vmem:[%s177 + $0x44] sm:$0xf] %vm1329, %v1218
        %1348 = vst.msk [vmem:[%s177 + $0x48] sm:$0xf] %vm1329, %v1219
        %1349 = vst.msk [vmem:[%s177 + $0x4c] sm:$0xf] %vm1329, %v1220
        %1350 = vst.msk [vmem:[%s177 + $0x50] sm:$0xf] %vm1329, %v1221
        %1351 = vst.msk [vmem:[%s177 + $0x54] sm:$0xf] %vm1329, %v1222
        %1352 = vst.msk [vmem:[%s177 + $0x58] sm:$0xf] %vm1329, %v1223
        %1353 = vst.msk [vmem:[%s177 + $0x5c] sm:$0xf] %vm1329, %v1224
        %1354 = vst.msk [vmem:[%s177 + $0x60] sm:$0xf] %vm1329, %v1225
        %1355 = vst.msk [vmem:[%s177 + $0x64] sm:$0xf] %vm1329, %v1226
        %1356 = vst.msk [vmem:[%s177 + $0x68] sm:$0xf] %vm1329, %v1227
        %1357 = vst.msk [vmem:[%s177 + $0x6c] sm:$0xf] %vm1329, %v1228
        %1358 = vst.msk [vmem:[%s177 + $0x70] sm:$0xf] %vm1329, %v1229
        %1359 = vst.msk [vmem:[%s177 + $0x74] sm:$0xf] %vm1329, %v1230
        %1360 = vst.msk [vmem:[%s177 + $0x78] sm:$0xf] %vm1329, %v1231
        %1361 = vst.msk [vmem:[%s177 + $0x7c] sm:$0xf] %vm1329, %v1232
        %1362 = vst.msk [vmem:[%s177 + $0x80] sm:$0xf] %vm1329, %v1233
        %1363 = vst.msk [vmem:[%s177 + $0x84] sm:$0xf] %vm1329, %v1234
        %1364 = vst.msk [vmem:[%s177 + $0x88] sm:$0xf] %vm1329, %v1235
        %1365 = vst.msk [vmem:[%s177 + $0x8c] sm:$0xf] %vm1329, %v1236
        %1366 = vst.msk [vmem:[%s177 + $0x90] sm:$0xf] %vm1329, %v1237
        %1367 = vst.msk [vmem:[%s177 + $0x94] sm:$0xf] %vm1329, %v1238
        %1368 = vst.msk [vmem:[%s177 + $0x98] sm:$0xf] %vm1329, %v1239
        %1369 = vst.msk [vmem:[%s177 + $0x9c] sm:$0xf] %vm1329, %v1240
        %1370 = vst.msk [vmem:[%s177 + $0xa0] sm:$0xf] %vm1329, %v1241
        %1371 = vst.msk [vmem:[%s177 + $0xa4] sm:$0xf] %vm1329, %v1242
        %1372 = vst.msk [vmem:[%s177 + $0xa8] sm:$0xf] %vm1329, %v1243
        %1373 = vst.msk [vmem:[%s177 + $0xac] sm:$0xf] %vm1329, %v1244
        %1374 = vst.msk [vmem:[%s177 + $0xb0] sm:$0xf] %vm1329, %v1245
        %1375 = vst.msk [vmem:[%s177 + $0xb4] sm:$0xf] %vm1329, %v1246
        %1376 = vst.msk [vmem:[%s177 + $0xb8] sm:$0xf] %vm1329, %v1247
        %1377 = vst.msk [vmem:[%s177 + $0xbc] sm:$0xf] %vm1329, %v1248
        %1378 = vst.msk [vmem:[%s177 + $0xc0] sm:$0xf] %vm1329, %v1249
        %1379 = vst.msk [vmem:[%s177 + $0xc4] sm:$0xf] %vm1329, %v1250
        %1380 = vst.msk [vmem:[%s177 + $0xc8] sm:$0xf] %vm1329, %v1251
        %1381 = vst.msk [vmem:[%s177 + $0xcc] sm:$0xf] %vm1329, %v1252
        %1382 = vst.msk [vmem:[%s177 + $0xd0] sm:$0xf] %vm1329, %v1253
        %1383 = vst.msk [vmem:[%s177 + $0xd4] sm:$0xf] %vm1329, %v1254
        %1384 = vst.msk [vmem:[%s177 + $0xd8] sm:$0xf] %vm1329, %v1255
        %1385 = vst.msk [vmem:[%s177 + $0xdc] sm:$0xf] %vm1329, %v1256
        %1386 = vst.msk [vmem:[%s177 + $0xe0] sm:$0xf] %vm1329, %v1257
        %1387 = vst.msk [vmem:[%s177 + $0xe4] sm:$0xf] %vm1329, %v1258
        %1388 = vst.msk [vmem:[%s177 + $0xe8] sm:$0xf] %vm1329, %v1259
        %1389 = vst.msk [vmem:[%s177 + $0xec] sm:$0xf] %vm1329, %v1260
        %1390 = vst.msk [vmem:[%s177 + $0xf0] sm:$0xf] %vm1329, %v1261
        %1391 = vst.msk [vmem:[%s177 + $0xf4] sm:$0xf] %vm1329, %v1262
        %1392 = vst.msk [vmem:[%s177 + $0xf8] sm:$0xf] %vm1329, %v1263
        %1393 = vst.msk [vmem:[%s177 + $0xfc] sm:$0xf] %vm1329, %v1264
        %s1394 = sand.u32 %s90, 1
        %s1395 = sand.u32 %s90, 1
        %s1396 = smul.addr %s1395, 256
        %s1397 = scalar_lea.vmem [#allocation2], %s1396
        // Predicated region
        $region33: #{cnn_multiaction_forward.4} parent=31 // pred_check
          %p1398 = pneg %p100
        $region34: #{cnn_multiaction_forward.4} parent=31 // pred_check_branch
          %1400 = sbr.rel (%p1398) target = $region36
        $region35: #{cnn_multiaction_forward.4} parent=31 // pred_region
          %s1401 = smul.u32 64, %s14
          %s1402 = ssub.s32 91, %s1401
          %p1403 = scmp.lt.s32.totalorder %s1402, 64
          %s1404 = scalar_select %p1403, %s1402, 64
          %s1405 = smul.u32 64, %s1404
          %p1406 = scmp.ne.s32.totalorder 0, %s1405
          %s1407 = smul.addr %s1401, 4
          %s1408 = scalar_lea.vmem %s3, %s1407
          // Predicated region
          $region37: #{cnn_multiaction_forward.4} parent=35 // pred_check
            %p1409 = pneg %p1406
          $region38: #{cnn_multiaction_forward.4} parent=35 // pred_check_branch
            %1411 = sbr.rel (%p1409) target = $region40
          $region39: #{cnn_multiaction_forward.4} parent=35 // pred_region
            // Predicated region
            $region41: #{cnn_multiaction_forward.4} parent=39 // pred_check
              _
            $region42: #{cnn_multiaction_forward.4} parent=39 // pred_check_branch
              %1413 = sbr.rel target = $region44
            $region43: #{cnn_multiaction_forward.4} parent=39 // pred_region
              // Predicated region
              $region63: #{cnn_multiaction_forward.4} parent=43 // pred_check
                _
              $region64: #{cnn_multiaction_forward.4} parent=43 // pred_check_branch
                %1588 = sbr.rel (0) target = $region66
              $region65: #{cnn_multiaction_forward.4} parent=43 // pred_region
                %s1590 = sshrl.u32 %s1404, 6
                // While loop
                $region67: #{cnn_multiaction_forward.4} parent=65 // loop_pre_header
                  _
                $region68: #{cnn_multiaction_forward.4} parent=65 // loop_header
                  %s1592 = sphi 0, %s1594
                  %p1593 = scmp.ge.s32.totalorder %s1592, %s1590
                  %s1597 = sphi 0, %s1730
                  %s1598 = sphi %s1397, %s1733
                  %s1599 = sphi %s1408, %s1734
                $region69: #{cnn_multiaction_forward.4} parent=65 // loop_header_branch
                  %1596 = sbr.rel (%p1593) target = $region73
                $region70: #{cnn_multiaction_forward.4} parent=65 // loop_body
                  %v1600 = vld [vmem:[%s1598] sm:$0xf]
                  %1601 = vst [vmem:[%s1599] sm:$0xf] %v1600
                  %v1602 = vld [vmem:[%s1598 + $0x4] sm:$0xf]
                  %1603 = vst [vmem:[%s1599 + $0x4] sm:$0xf] %v1602
                  %v1604 = vld [vmem:[%s1598 + $0x8] sm:$0xf]
                  %1605 = vst [vmem:[%s1599 + $0x8] sm:$0xf] %v1604
                  %v1606 = vld [vmem:[%s1598 + $0xc] sm:$0xf]
                  %1607 = vst [vmem:[%s1599 + $0xc] sm:$0xf] %v1606
                  %v1608 = vld [vmem:[%s1598 + $0x10] sm:$0xf]
                  %1609 = vst [vmem:[%s1599 + $0x10] sm:$0xf] %v1608
                  %v1610 = vld [vmem:[%s1598 + $0x14] sm:$0xf]
                  %1611 = vst [vmem:[%s1599 + $0x14] sm:$0xf] %v1610
                  %v1612 = vld [vmem:[%s1598 + $0x18] sm:$0xf]
                  %1613 = vst [vmem:[%s1599 + $0x18] sm:$0xf] %v1612
                  %v1614 = vld [vmem:[%s1598 + $0x1c] sm:$0xf]
                  %1615 = vst [vmem:[%s1599 + $0x1c] sm:$0xf] %v1614
                  %v1616 = vld [vmem:[%s1598 + $0x20] sm:$0xf]
                  %1617 = vst [vmem:[%s1599 + $0x20] sm:$0xf] %v1616
                  %v1618 = vld [vmem:[%s1598 + $0x24] sm:$0xf]
                  %1619 = vst [vmem:[%s1599 + $0x24] sm:$0xf] %v1618
                  %v1620 = vld [vmem:[%s1598 + $0x28] sm:$0xf]
                  %1621 = vst [vmem:[%s1599 + $0x28] sm:$0xf] %v1620
                  %v1622 = vld [vmem:[%s1598 + $0x2c] sm:$0xf]
                  %1623 = vst [vmem:[%s1599 + $0x2c] sm:$0xf] %v1622
                  %v1624 = vld [vmem:[%s1598 + $0x30] sm:$0xf]
                  %1625 = vst [vmem:[%s1599 + $0x30] sm:$0xf] %v1624
                  %v1626 = vld [vmem:[%s1598 + $0x34] sm:$0xf]
                  %1627 = vst [vmem:[%s1599 + $0x34] sm:$0xf] %v1626
                  %v1628 = vld [vmem:[%s1598 + $0x38] sm:$0xf]
                  %1629 = vst [vmem:[%s1599 + $0x38] sm:$0xf] %v1628
                  %v1630 = vld [vmem:[%s1598 + $0x3c] sm:$0xf]
                  %1631 = vst [vmem:[%s1599 + $0x3c] sm:$0xf] %v1630
                  %v1632 = vld [vmem:[%s1598 + $0x40] sm:$0xf]
                  %1633 = vst [vmem:[%s1599 + $0x40] sm:$0xf] %v1632
                  %v1634 = vld [vmem:[%s1598 + $0x44] sm:$0xf]
                  %1635 = vst [vmem:[%s1599 + $0x44] sm:$0xf] %v1634
                  %v1636 = vld [vmem:[%s1598 + $0x48] sm:$0xf]
                  %1637 = vst [vmem:[%s1599 + $0x48] sm:$0xf] %v1636
                  %v1638 = vld [vmem:[%s1598 + $0x4c] sm:$0xf]
                  %1639 = vst [vmem:[%s1599 + $0x4c] sm:$0xf] %v1638
                  %v1640 = vld [vmem:[%s1598 + $0x50] sm:$0xf]
                  %1641 = vst [vmem:[%s1599 + $0x50] sm:$0xf] %v1640
                  %v1642 = vld [vmem:[%s1598 + $0x54] sm:$0xf]
                  %1643 = vst [vmem:[%s1599 + $0x54] sm:$0xf] %v1642
                  %v1644 = vld [vmem:[%s1598 + $0x58] sm:$0xf]
                  %1645 = vst [vmem:[%s1599 + $0x58] sm:$0xf] %v1644
                  %v1646 = vld [vmem:[%s1598 + $0x5c] sm:$0xf]
                  %1647 = vst [vmem:[%s1599 + $0x5c] sm:$0xf] %v1646
                  %v1648 = vld [vmem:[%s1598 + $0x60] sm:$0xf]
                  %1649 = vst [vmem:[%s1599 + $0x60] sm:$0xf] %v1648
                  %v1650 = vld [vmem:[%s1598 + $0x64] sm:$0xf]
                  %1651 = vst [vmem:[%s1599 + $0x64] sm:$0xf] %v1650
                  %v1652 = vld [vmem:[%s1598 + $0x68] sm:$0xf]
                  %1653 = vst [vmem:[%s1599 + $0x68] sm:$0xf] %v1652
                  %v1654 = vld [vmem:[%s1598 + $0x6c] sm:$0xf]
                  %1655 = vst [vmem:[%s1599 + $0x6c] sm:$0xf] %v1654
                  %v1656 = vld [vmem:[%s1598 + $0x70] sm:$0xf]
                  %1657 = vst [vmem:[%s1599 + $0x70] sm:$0xf] %v1656
                  %v1658 = vld [vmem:[%s1598 + $0x74] sm:$0xf]
                  %1659 = vst [vmem:[%s1599 + $0x74] sm:$0xf] %v1658
                  %v1660 = vld [vmem:[%s1598 + $0x78] sm:$0xf]
                  %1661 = vst [vmem:[%s1599 + $0x78] sm:$0xf] %v1660
                  %v1662 = vld [vmem:[%s1598 + $0x7c] sm:$0xf]
                  %1663 = vst [vmem:[%s1599 + $0x7c] sm:$0xf] %v1662
                  %v1664 = vld [vmem:[%s1598 + $0x80] sm:$0xf]
                  %1665 = vst [vmem:[%s1599 + $0x80] sm:$0xf] %v1664
                  %v1666 = vld [vmem:[%s1598 + $0x84] sm:$0xf]
                  %1667 = vst [vmem:[%s1599 + $0x84] sm:$0xf] %v1666
                  %v1668 = vld [vmem:[%s1598 + $0x88] sm:$0xf]
                  %1669 = vst [vmem:[%s1599 + $0x88] sm:$0xf] %v1668
                  %v1670 = vld [vmem:[%s1598 + $0x8c] sm:$0xf]
                  %1671 = vst [vmem:[%s1599 + $0x8c] sm:$0xf] %v1670
                  %v1672 = vld [vmem:[%s1598 + $0x90] sm:$0xf]
                  %1673 = vst [vmem:[%s1599 + $0x90] sm:$0xf] %v1672
                  %v1674 = vld [vmem:[%s1598 + $0x94] sm:$0xf]
                  %1675 = vst [vmem:[%s1599 + $0x94] sm:$0xf] %v1674
                  %v1676 = vld [vmem:[%s1598 + $0x98] sm:$0xf]
                  %1677 = vst [vmem:[%s1599 + $0x98] sm:$0xf] %v1676
                  %v1678 = vld [vmem:[%s1598 + $0x9c] sm:$0xf]
                  %1679 = vst [vmem:[%s1599 + $0x9c] sm:$0xf] %v1678
                  %v1680 = vld [vmem:[%s1598 + $0xa0] sm:$0xf]
                  %1681 = vst [vmem:[%s1599 + $0xa0] sm:$0xf] %v1680
                  %v1682 = vld [vmem:[%s1598 + $0xa4] sm:$0xf]
                  %1683 = vst [vmem:[%s1599 + $0xa4] sm:$0xf] %v1682
                  %v1684 = vld [vmem:[%s1598 + $0xa8] sm:$0xf]
                  %1685 = vst [vmem:[%s1599 + $0xa8] sm:$0xf] %v1684
                  %v1686 = vld [vmem:[%s1598 + $0xac] sm:$0xf]
                  %1687 = vst [vmem:[%s1599 + $0xac] sm:$0xf] %v1686
                  %v1688 = vld [vmem:[%s1598 + $0xb0] sm:$0xf]
                  %1689 = vst [vmem:[%s1599 + $0xb0] sm:$0xf] %v1688
                  %v1690 = vld [vmem:[%s1598 + $0xb4] sm:$0xf]
                  %1691 = vst [vmem:[%s1599 + $0xb4] sm:$0xf] %v1690
                  %v1692 = vld [vmem:[%s1598 + $0xb8] sm:$0xf]
                  %1693 = vst [vmem:[%s1599 + $0xb8] sm:$0xf] %v1692
                  %v1694 = vld [vmem:[%s1598 + $0xbc] sm:$0xf]
                  %1695 = vst [vmem:[%s1599 + $0xbc] sm:$0xf] %v1694
                  %v1696 = vld [vmem:[%s1598 + $0xc0] sm:$0xf]
                  %1697 = vst [vmem:[%s1599 + $0xc0] sm:$0xf] %v1696
                  %v1698 = vld [vmem:[%s1598 + $0xc4] sm:$0xf]
                  %1699 = vst [vmem:[%s1599 + $0xc4] sm:$0xf] %v1698
                  %v1700 = vld [vmem:[%s1598 + $0xc8] sm:$0xf]
                  %1701 = vst [vmem:[%s1599 + $0xc8] sm:$0xf] %v1700
                  %v1702 = vld [vmem:[%s1598 + $0xcc] sm:$0xf]
                  %1703 = vst [vmem:[%s1599 + $0xcc] sm:$0xf] %v1702
                  %v1704 = vld [vmem:[%s1598 + $0xd0] sm:$0xf]
                  %1705 = vst [vmem:[%s1599 + $0xd0] sm:$0xf] %v1704
                  %v1706 = vld [vmem:[%s1598 + $0xd4] sm:$0xf]
                  %1707 = vst [vmem:[%s1599 + $0xd4] sm:$0xf] %v1706
                  %v1708 = vld [vmem:[%s1598 + $0xd8] sm:$0xf]
                  %1709 = vst [vmem:[%s1599 + $0xd8] sm:$0xf] %v1708
                  %v1710 = vld [vmem:[%s1598 + $0xdc] sm:$0xf]
                  %1711 = vst [vmem:[%s1599 + $0xdc] sm:$0xf] %v1710
                  %v1712 = vld [vmem:[%s1598 + $0xe0] sm:$0xf]
                  %1713 = vst [vmem:[%s1599 + $0xe0] sm:$0xf] %v1712
                  %v1714 = vld [vmem:[%s1598 + $0xe4] sm:$0xf]
                  %1715 = vst [vmem:[%s1599 + $0xe4] sm:$0xf] %v1714
                  %v1716 = vld [vmem:[%s1598 + $0xe8] sm:$0xf]
                  %1717 = vst [vmem:[%s1599 + $0xe8] sm:$0xf] %v1716
                  %v1718 = vld [vmem:[%s1598 + $0xec] sm:$0xf]
                  %1719 = vst [vmem:[%s1599 + $0xec] sm:$0xf] %v1718
                  %v1720 = vld [vmem:[%s1598 + $0xf0] sm:$0xf]
                  %1721 = vst [vmem:[%s1599 + $0xf0] sm:$0xf] %v1720
                  %v1722 = vld [vmem:[%s1598 + $0xf4] sm:$0xf]
                  %1723 = vst [vmem:[%s1599 + $0xf4] sm:$0xf] %v1722
                  %v1724 = vld [vmem:[%s1598 + $0xf8] sm:$0xf]
                  %1725 = vst [vmem:[%s1599 + $0xf8] sm:$0xf] %v1724
                  %v1726 = vld [vmem:[%s1598 + $0xfc] sm:$0xf]
                  %1727 = vst [vmem:[%s1599 + $0xfc] sm:$0xf] %v1726
                  %s1728 = sadd.s32 1, %s1597
                  %p1729 = scmp.ge.s32.totalorder %s1728, %s1590
                  %s1730 = scalar_select %p1729, 0, %s1728
                  %s1731 = smul.u32 %s1730, 256
                  %s1732 = smul.u32 %s1730, 256
                  %s1733 = scalar_lea.vmem %s1397, %s1731 [#allocation2]
                  %s1734 = scalar_lea.vmem %s1408, %s1732
                $region71: #{cnn_multiaction_forward.4} parent=65 // loop_footer
                  %s1594 = sadd.s32 %s1592, 1
                $region72: #{cnn_multiaction_forward.4} parent=65 // loop_footer_branch
                  %1591 = sbr.rel target = $region68
                $region73: #{cnn_multiaction_forward.4} parent=65 // loop_exit
                  _
                %s1735 = sshrl.u32 %s1404, 6
                %s1736 = sand.u32 %s1404, 63
                %s1737 = smul.u32 %s1735, 64
                %s1738 = smul.u32 4, %s1737
                %s1739 = scalar_lea.vmem %s1397, %s1738 [#allocation2]
                %s1740 = smul.u32 4, %s1737
                %s1741 = scalar_lea.vmem %s1408, %s1740
                // While loop
                $region74: #{cnn_multiaction_forward.4} parent=65 // loop_pre_header
                  _
                $region75: #{cnn_multiaction_forward.4} parent=65 // loop_header
                  %s1743 = sphi 0, %s1745
                  %p1744 = scmp.ge.s32.totalorder %s1743, %s1736
                  %s1748 = sphi 0, %s1755
                  %s1749 = sphi %s1739, %s1758
                  %s1750 = sphi %s1741, %s1759
                $region76: #{cnn_multiaction_forward.4} parent=65 // loop_header_branch
                  %1747 = sbr.rel (%p1744) target = $region80
                $region77: #{cnn_multiaction_forward.4} parent=65 // loop_body
                  %v1751 = vld [vmem:[%s1749] sm:$0xf]
                  %1752 = vst [vmem:[%s1750] sm:$0xf] %v1751
                  %s1753 = sadd.s32 1, %s1748
                  %p1754 = scmp.ge.s32.totalorder %s1753, %s1736
                  %s1755 = scalar_select %p1754, 0, %s1753
                  %s1756 = smul.u32 %s1755, 4
                  %s1757 = smul.u32 %s1755, 4
                  %s1758 = scalar_lea.vmem %s1739, %s1756 [#allocation2]
                  %s1759 = scalar_lea.vmem %s1741, %s1757
                $region78: #{cnn_multiaction_forward.4} parent=65 // loop_footer
                  %s1745 = sadd.s32 %s1743, 1
                $region79: #{cnn_multiaction_forward.4} parent=65 // loop_footer_branch
                  %1742 = sbr.rel target = $region75
                $region80: #{cnn_multiaction_forward.4} parent=65 // loop_exit
                  _
              $region66: #{cnn_multiaction_forward.4} parent=43 // pred_fallthru
                _
            $region44: #{cnn_multiaction_forward.4} parent=39 // pred_fallthru
              _
            // Predicated region
            $region45: #{cnn_multiaction_forward.4} parent=39 // pred_check
              _
            $region46: #{cnn_multiaction_forward.4} parent=39 // pred_check_branch
              %1415 = sbr.rel (0) target = $region48
            $region47: #{cnn_multiaction_forward.4} parent=39 // pred_region
              %s1417 = sshrl.u32 %s1404, 6
              // While loop
              $region49: #{cnn_multiaction_forward.4} parent=47 // loop_pre_header
                _
              $region50: #{cnn_multiaction_forward.4} parent=47 // loop_header
                %s1419 = sphi 0, %s1421
                %p1420 = scmp.ge.s32.totalorder %s1419, %s1417
                %s1424 = sphi 0, %s1557
                %s1425 = sphi %s1397, %s1560
                %s1426 = sphi %s1408, %s1561
              $region51: #{cnn_multiaction_forward.4} parent=47 // loop_header_branch
                %1423 = sbr.rel (%p1420) target = $region55
              $region52: #{cnn_multiaction_forward.4} parent=47 // loop_body
                %v1427 = vld [vmem:[%s1425] sm:$0xf]
                %1428 = vst [vmem:[%s1426] sm:$0xf] %v1427
                %v1429 = vld [vmem:[%s1425 + $0x4] sm:$0xf]
                %1430 = vst [vmem:[%s1426 + $0x4] sm:$0xf] %v1429
                %v1431 = vld [vmem:[%s1425 + $0x8] sm:$0xf]
                %1432 = vst [vmem:[%s1426 + $0x8] sm:$0xf] %v1431
                %v1433 = vld [vmem:[%s1425 + $0xc] sm:$0xf]
                %1434 = vst [vmem:[%s1426 + $0xc] sm:$0xf] %v1433
                %v1435 = vld [vmem:[%s1425 + $0x10] sm:$0xf]
                %1436 = vst [vmem:[%s1426 + $0x10] sm:$0xf] %v1435
                %v1437 = vld [vmem:[%s1425 + $0x14] sm:$0xf]
                %1438 = vst [vmem:[%s1426 + $0x14] sm:$0xf] %v1437
                %v1439 = vld [vmem:[%s1425 + $0x18] sm:$0xf]
                %1440 = vst [vmem:[%s1426 + $0x18] sm:$0xf] %v1439
                %v1441 = vld [vmem:[%s1425 + $0x1c] sm:$0xf]
                %1442 = vst [vmem:[%s1426 + $0x1c] sm:$0xf] %v1441
                %v1443 = vld [vmem:[%s1425 + $0x20] sm:$0xf]
                %1444 = vst [vmem:[%s1426 + $0x20] sm:$0xf] %v1443
                %v1445 = vld [vmem:[%s1425 + $0x24] sm:$0xf]
                %1446 = vst [vmem:[%s1426 + $0x24] sm:$0xf] %v1445
                %v1447 = vld [vmem:[%s1425 + $0x28] sm:$0xf]
                %1448 = vst [vmem:[%s1426 + $0x28] sm:$0xf] %v1447
                %v1449 = vld [vmem:[%s1425 + $0x2c] sm:$0xf]
                %1450 = vst [vmem:[%s1426 + $0x2c] sm:$0xf] %v1449
                %v1451 = vld [vmem:[%s1425 + $0x30] sm:$0xf]
                %1452 = vst [vmem:[%s1426 + $0x30] sm:$0xf] %v1451
                %v1453 = vld [vmem:[%s1425 + $0x34] sm:$0xf]
                %1454 = vst [vmem:[%s1426 + $0x34] sm:$0xf] %v1453
                %v1455 = vld [vmem:[%s1425 + $0x38] sm:$0xf]
                %1456 = vst [vmem:[%s1426 + $0x38] sm:$0xf] %v1455
                %v1457 = vld [vmem:[%s1425 + $0x3c] sm:$0xf]
                %1458 = vst [vmem:[%s1426 + $0x3c] sm:$0xf] %v1457
                %v1459 = vld [vmem:[%s1425 + $0x40] sm:$0xf]
                %1460 = vst [vmem:[%s1426 + $0x40] sm:$0xf] %v1459
                %v1461 = vld [vmem:[%s1425 + $0x44] sm:$0xf]
                %1462 = vst [vmem:[%s1426 + $0x44] sm:$0xf] %v1461
                %v1463 = vld [vmem:[%s1425 + $0x48] sm:$0xf]
                %1464 = vst [vmem:[%s1426 + $0x48] sm:$0xf] %v1463
                %v1465 = vld [vmem:[%s1425 + $0x4c] sm:$0xf]
                %1466 = vst [vmem:[%s1426 + $0x4c] sm:$0xf] %v1465
                %v1467 = vld [vmem:[%s1425 + $0x50] sm:$0xf]
                %1468 = vst [vmem:[%s1426 + $0x50] sm:$0xf] %v1467
                %v1469 = vld [vmem:[%s1425 + $0x54] sm:$0xf]
                %1470 = vst [vmem:[%s1426 + $0x54] sm:$0xf] %v1469
                %v1471 = vld [vmem:[%s1425 + $0x58] sm:$0xf]
                %1472 = vst [vmem:[%s1426 + $0x58] sm:$0xf] %v1471
                %v1473 = vld [vmem:[%s1425 + $0x5c] sm:$0xf]
                %1474 = vst [vmem:[%s1426 + $0x5c] sm:$0xf] %v1473
                %v1475 = vld [vmem:[%s1425 + $0x60] sm:$0xf]
                %1476 = vst [vmem:[%s1426 + $0x60] sm:$0xf] %v1475
                %v1477 = vld [vmem:[%s1425 + $0x64] sm:$0xf]
                %1478 = vst [vmem:[%s1426 + $0x64] sm:$0xf] %v1477
                %v1479 = vld [vmem:[%s1425 + $0x68] sm:$0xf]
                %1480 = vst [vmem:[%s1426 + $0x68] sm:$0xf] %v1479
                %v1481 = vld [vmem:[%s1425 + $0x6c] sm:$0xf]
                %1482 = vst [vmem:[%s1426 + $0x6c] sm:$0xf] %v1481
                %v1483 = vld [vmem:[%s1425 + $0x70] sm:$0xf]
                %1484 = vst [vmem:[%s1426 + $0x70] sm:$0xf] %v1483
                %v1485 = vld [vmem:[%s1425 + $0x74] sm:$0xf]
                %1486 = vst [vmem:[%s1426 + $0x74] sm:$0xf] %v1485
                %v1487 = vld [vmem:[%s1425 + $0x78] sm:$0xf]
                %1488 = vst [vmem:[%s1426 + $0x78] sm:$0xf] %v1487
                %v1489 = vld [vmem:[%s1425 + $0x7c] sm:$0xf]
                %1490 = vst [vmem:[%s1426 + $0x7c] sm:$0xf] %v1489
                %v1491 = vld [vmem:[%s1425 + $0x80] sm:$0xf]
                %1492 = vst [vmem:[%s1426 + $0x80] sm:$0xf] %v1491
                %v1493 = vld [vmem:[%s1425 + $0x84] sm:$0xf]
                %1494 = vst [vmem:[%s1426 + $0x84] sm:$0xf] %v1493
                %v1495 = vld [vmem:[%s1425 + $0x88] sm:$0xf]
                %1496 = vst [vmem:[%s1426 + $0x88] sm:$0xf] %v1495
                %v1497 = vld [vmem:[%s1425 + $0x8c] sm:$0xf]
                %1498 = vst [vmem:[%s1426 + $0x8c] sm:$0xf] %v1497
                %v1499 = vld [vmem:[%s1425 + $0x90] sm:$0xf]
                %1500 = vst [vmem:[%s1426 + $0x90] sm:$0xf] %v1499
                %v1501 = vld [vmem:[%s1425 + $0x94] sm:$0xf]
                %1502 = vst [vmem:[%s1426 + $0x94] sm:$0xf] %v1501
                %v1503 = vld [vmem:[%s1425 + $0x98] sm:$0xf]
                %1504 = vst [vmem:[%s1426 + $0x98] sm:$0xf] %v1503
                %v1505 = vld [vmem:[%s1425 + $0x9c] sm:$0xf]
                %1506 = vst [vmem:[%s1426 + $0x9c] sm:$0xf] %v1505
                %v1507 = vld [vmem:[%s1425 + $0xa0] sm:$0xf]
                %1508 = vst [vmem:[%s1426 + $0xa0] sm:$0xf] %v1507
                %v1509 = vld [vmem:[%s1425 + $0xa4] sm:$0xf]
                %1510 = vst [vmem:[%s1426 + $0xa4] sm:$0xf] %v1509
                %v1511 = vld [vmem:[%s1425 + $0xa8] sm:$0xf]
                %1512 = vst [vmem:[%s1426 + $0xa8] sm:$0xf] %v1511
                %v1513 = vld [vmem:[%s1425 + $0xac] sm:$0xf]
                %1514 = vst [vmem:[%s1426 + $0xac] sm:$0xf] %v1513
                %v1515 = vld [vmem:[%s1425 + $0xb0] sm:$0xf]
                %1516 = vst [vmem:[%s1426 + $0xb0] sm:$0xf] %v1515
                %v1517 = vld [vmem:[%s1425 + $0xb4] sm:$0xf]
                %1518 = vst [vmem:[%s1426 + $0xb4] sm:$0xf] %v1517
                %v1519 = vld [vmem:[%s1425 + $0xb8] sm:$0xf]
                %1520 = vst [vmem:[%s1426 + $0xb8] sm:$0xf] %v1519
                %v1521 = vld [vmem:[%s1425 + $0xbc] sm:$0xf]
                %1522 = vst [vmem:[%s1426 + $0xbc] sm:$0xf] %v1521
                %v1523 = vld [vmem:[%s1425 + $0xc0] sm:$0xf]
                %1524 = vst [vmem:[%s1426 + $0xc0] sm:$0xf] %v1523
                %v1525 = vld [vmem:[%s1425 + $0xc4] sm:$0xf]
                %1526 = vst [vmem:[%s1426 + $0xc4] sm:$0xf] %v1525
                %v1527 = vld [vmem:[%s1425 + $0xc8] sm:$0xf]
                %1528 = vst [vmem:[%s1426 + $0xc8] sm:$0xf] %v1527
                %v1529 = vld [vmem:[%s1425 + $0xcc] sm:$0xf]
                %1530 = vst [vmem:[%s1426 + $0xcc] sm:$0xf] %v1529
                %v1531 = vld [vmem:[%s1425 + $0xd0] sm:$0xf]
                %1532 = vst [vmem:[%s1426 + $0xd0] sm:$0xf] %v1531
                %v1533 = vld [vmem:[%s1425 + $0xd4] sm:$0xf]
                %1534 = vst [vmem:[%s1426 + $0xd4] sm:$0xf] %v1533
                %v1535 = vld [vmem:[%s1425 + $0xd8] sm:$0xf]
                %1536 = vst [vmem:[%s1426 + $0xd8] sm:$0xf] %v1535
                %v1537 = vld [vmem:[%s1425 + $0xdc] sm:$0xf]
                %1538 = vst [vmem:[%s1426 + $0xdc] sm:$0xf] %v1537
                %v1539 = vld [vmem:[%s1425 + $0xe0] sm:$0xf]
                %1540 = vst [vmem:[%s1426 + $0xe0] sm:$0xf] %v1539
                %v1541 = vld [vmem:[%s1425 + $0xe4] sm:$0xf]
                %1542 = vst [vmem:[%s1426 + $0xe4] sm:$0xf] %v1541
                %v1543 = vld [vmem:[%s1425 + $0xe8] sm:$0xf]
                %1544 = vst [vmem:[%s1426 + $0xe8] sm:$0xf] %v1543
                %v1545 = vld [vmem:[%s1425 + $0xec] sm:$0xf]
                %1546 = vst [vmem:[%s1426 + $0xec] sm:$0xf] %v1545
                %v1547 = vld [vmem:[%s1425 + $0xf0] sm:$0xf]
                %1548 = vst [vmem:[%s1426 + $0xf0] sm:$0xf] %v1547
                %v1549 = vld [vmem:[%s1425 + $0xf4] sm:$0xf]
                %1550 = vst [vmem:[%s1426 + $0xf4] sm:$0xf] %v1549
                %v1551 = vld [vmem:[%s1425 + $0xf8] sm:$0xf]
                %1552 = vst [vmem:[%s1426 + $0xf8] sm:$0xf] %v1551
                %v1553 = vld [vmem:[%s1425 + $0xfc] sm:$0xf]
                %1554 = vst [vmem:[%s1426 + $0xfc] sm:$0xf] %v1553
                %s1555 = sadd.s32 1, %s1424
                %p1556 = scmp.ge.s32.totalorder %s1555, %s1417
                %s1557 = scalar_select %p1556, 0, %s1555
                %s1558 = smul.u32 %s1557, 256
                %s1559 = smul.u32 %s1557, 256
                %s1560 = scalar_lea.vmem %s1397, %s1558 [#allocation2]
                %s1561 = scalar_lea.vmem %s1408, %s1559
              $region53: #{cnn_multiaction_forward.4} parent=47 // loop_footer
                %s1421 = sadd.s32 %s1419, 1
              $region54: #{cnn_multiaction_forward.4} parent=47 // loop_footer_branch
                %1418 = sbr.rel target = $region50
              $region55: #{cnn_multiaction_forward.4} parent=47 // loop_exit
                _
              %s1562 = sshrl.u32 %s1404, 6
              %s1563 = sand.u32 %s1404, 63
              %s1564 = smul.u32 %s1562, 64
              %s1565 = smul.u32 4, %s1564
              %s1566 = scalar_lea.vmem %s1397, %s1565 [#allocation2]
              %s1567 = smul.u32 4, %s1564
              %s1568 = scalar_lea.vmem %s1408, %s1567
              // While loop
              $region56: #{cnn_multiaction_forward.4} parent=47 // loop_pre_header
                _
              $region57: #{cnn_multiaction_forward.4} parent=47 // loop_header
                %s1570 = sphi 0, %s1572
                %p1571 = scmp.ge.s32.totalorder %s1570, %s1563
                %s1575 = sphi 0, %s1582
                %s1576 = sphi %s1566, %s1585
                %s1577 = sphi %s1568, %s1586
              $region58: #{cnn_multiaction_forward.4} parent=47 // loop_header_branch
                %1574 = sbr.rel (%p1571) target = $region62
              $region59: #{cnn_multiaction_forward.4} parent=47 // loop_body
                %v1578 = vld [vmem:[%s1576] sm:$0xf]
                %1579 = vst [vmem:[%s1577] sm:$0xf] %v1578
                %s1580 = sadd.s32 1, %s1575
                %p1581 = scmp.ge.s32.totalorder %s1580, %s1563
                %s1582 = scalar_select %p1581, 0, %s1580
                %s1583 = smul.u32 %s1582, 4
                %s1584 = smul.u32 %s1582, 4
                %s1585 = scalar_lea.vmem %s1566, %s1583 [#allocation2]
                %s1586 = scalar_lea.vmem %s1568, %s1584
              $region60: #{cnn_multiaction_forward.4} parent=47 // loop_footer
                %s1572 = sadd.s32 %s1570, 1
              $region61: #{cnn_multiaction_forward.4} parent=47 // loop_footer_branch
                %1569 = sbr.rel target = $region57
              $region62: #{cnn_multiaction_forward.4} parent=47 // loop_exit
                _
            $region48: #{cnn_multiaction_forward.4} parent=39 // pred_fallthru
              _
          $region40: #{cnn_multiaction_forward.4} parent=35 // pred_fallthru
            _
          %1760 = vnop
        $region36: #{cnn_multiaction_forward.4} parent=31 // pred_fallthru
          _
      $region32: #{cnn_multiaction_forward.4} parent=5 // pred_fallthru
        _
      %p1761 = scmp.le.s32.totalorder 2, %s9
      // Predicated region
      $region81: #{cnn_multiaction_forward.4} parent=5 // pred_check
        %p1762 = pneg %p1761
      $region82: #{cnn_multiaction_forward.4} parent=5 // pred_check_branch
        %1764 = sbr.rel (%p1762) target = $region84
      $region83: #{cnn_multiaction_forward.4} parent=5 // pred_region
        %s1765 = ssub.s32 %s9, 2
        // Predicated region
        $region85: #{cnn_multiaction_forward.4} parent=83 // pred_check
          %p1766 = pneg %p106
        $region86: #{cnn_multiaction_forward.4} parent=83 // pred_check_branch
          %1768 = sbr.rel (%p1766) target = $region88
        $region87: #{cnn_multiaction_forward.4} parent=83 // pred_region
          %s1769 = sand.u32 %s91, 1
          %s1770 = sand.u32 %s91, 1
          %s1771 = smul.addr %s1770, 256
          %s1772 = scalar_lea.vmem [#allocation2], %s1771
        $region88: #{cnn_multiaction_forward.4} parent=83 // pred_fallthru
          _
      $region84: #{cnn_multiaction_forward.4} parent=5 // pred_fallthru
        _
    $region6: #{cnn_multiaction_forward.4} parent=1 // loop_footer
      %s13 = sadd.s32 1, %s9
    $region7: #{cnn_multiaction_forward.4} parent=1 // loop_footer_branch
      %8 = sbr.rel target = $region3
    $region8: #{cnn_multiaction_forward.4} parent=1 // loop_exit
      _

// kernel: cnn_multiaction_forward.5
$region0: #{cnn_multiaction_forward.5}
  #allocation0 [shape = 'u32[]', space=smem, size = 0x4, offset = 0x4, fixed_abs, tag = 'smem constant byte address 0x4 - core index']
  #allocation1 [shape = 'u32[144,128]{1,0:T(1,128)}', space=vmem, size = 0x12000, scoped, tag = 'internal scratch']
  %s0 = inlined_call_operand.vmem [shape: bf16[128,512], index: 0, kind: input, shape index: {}]
  %s1 = inlined_call_operand.vmem [shape: bf16[512,64], index: 1, kind: input, shape index: {}]
  %s2 = inlined_call_operand.vmem [shape: f32[1,64], index: 2, kind: input, shape index: {}]
  %s3 = inlined_call_operand.vmem [shape: bf16[128,64], index: 3, kind: output, shape index: {}]
  %s4 = sld [smem:[#allocation0]]
  $region22: #{cnn_multiaction_forward.5} parent=0
    _
  %s6 = ssub.s32 1, %s4
  %s7 = scalar_select 0, %s6, %s4
  // Predicated region
  $region2: #{cnn_multiaction_forward.5} parent=0 // pred_check
    _
  $region3: #{cnn_multiaction_forward.5} parent=0 // pred_check_branch
    %9 = sbr.rel (0) target = $region5
  $region4: #{cnn_multiaction_forward.5} parent=0 // pred_region
    _
  $region5: #{cnn_multiaction_forward.5} parent=0 // pred_fallthru
    _
  // Predicated region
  $region6: #{cnn_multiaction_forward.5} parent=0 // pred_check
    _
  $region7: #{cnn_multiaction_forward.5} parent=0 // pred_check_branch
    %11 = sbr.rel (0) target = $region9
  $region8: #{cnn_multiaction_forward.5} parent=0 // pred_region
    _
  $region9: #{cnn_multiaction_forward.5} parent=0 // pred_fallthru
    _
  // Predicated region
  $region10: #{cnn_multiaction_forward.5} parent=0 // pred_check
    _
  $region11: #{cnn_multiaction_forward.5} parent=0 // pred_check_branch
    %13 = sbr.rel (0) target = $region13
  $region12: #{cnn_multiaction_forward.5} parent=0 // pred_region
    _
  $region13: #{cnn_multiaction_forward.5} parent=0 // pred_fallthru
    _
  %v15 = vld [vmem:[%s0] sm:$0xff]
  %v16 = vld [vmem:[%s0 + $0x8] sm:$0xff]
  %v17 = vld [vmem:[%s0 + $0x10] sm:$0xff]
  %v18 = vld [vmem:[%s0 + $0x18] sm:$0xff]
  %v19 = vld [vmem:[%s0 + $0x20] sm:$0xff]
  %v20 = vld [vmem:[%s0 + $0x28] sm:$0xff]
  %v21 = vld [vmem:[%s0 + $0x30] sm:$0xff]
  %v22 = vld [vmem:[%s0 + $0x38] sm:$0xff]
  %v23 = vld [vmem:[%s0 + $0x40] sm:$0xff]
  %v24 = vld [vmem:[%s0 + $0x48] sm:$0xff]
  %v25 = vld [vmem:[%s0 + $0x50] sm:$0xff]
  %v26 = vld [vmem:[%s0 + $0x58] sm:$0xff]
  %v27 = vld [vmem:[%s0 + $0x60] sm:$0xff]
  %v28 = vld [vmem:[%s0 + $0x68] sm:$0xff]
  %v29 = vld [vmem:[%s0 + $0x70] sm:$0xff]
  %v30 = vld [vmem:[%s0 + $0x78] sm:$0xff]
  %v31 = vld [vmem:[%s0 + $0x80] sm:$0xff]
  %v32 = vld [vmem:[%s0 + $0x88] sm:$0xff]
  %v33 = vld [vmem:[%s0 + $0x90] sm:$0xff]
  %v34 = vld [vmem:[%s0 + $0x98] sm:$0xff]
  %v35 = vld [vmem:[%s0 + $0xa0] sm:$0xff]
  %v36 = vld [vmem:[%s0 + $0xa8] sm:$0xff]
  %v37 = vld [vmem:[%s0 + $0xb0] sm:$0xff]
  %v38 = vld [vmem:[%s0 + $0xb8] sm:$0xff]
  %v39 = vld [vmem:[%s0 + $0xc0] sm:$0xff]
  %v40 = vld [vmem:[%s0 + $0xc8] sm:$0xff]
  %v41 = vld [vmem:[%s0 + $0xd0] sm:$0xff]
  %v42 = vld [vmem:[%s0 + $0xd8] sm:$0xff]
  %v43 = vld [vmem:[%s0 + $0xe0] sm:$0xff]
  %v44 = vld [vmem:[%s0 + $0xe8] sm:$0xff]
  %v45 = vld [vmem:[%s0 + $0xf0] sm:$0xff]
  %v46 = vld [vmem:[%s0 + $0xf8] sm:$0xff]
  %v47 = vld [vmem:[%s1] sm:$0xf]
  %v48 = vld [vmem:[%s1 + $0x4] sm:$0xf]
  %v49 = vld [vmem:[%s1 + $0x8] sm:$0xf]
  %v50 = vld [vmem:[%s1 + $0xc] sm:$0xf]
  %v51 = vld [vmem:[%s1 + $0x10] sm:$0xf]
  %v52 = vld [vmem:[%s1 + $0x14] sm:$0xf]
  %v53 = vld [vmem:[%s1 + $0x18] sm:$0xf]
  %v54 = vld [vmem:[%s1 + $0x1c] sm:$0xf]
  %v55 = vld [vmem:[%s1 + $0x20] sm:$0xf]
  %v56 = vld [vmem:[%s1 + $0x24] sm:$0xf]
  %v57 = vld [vmem:[%s1 + $0x28] sm:$0xf]
  %v58 = vld [vmem:[%s1 + $0x2c] sm:$0xf]
  %v59 = vld [vmem:[%s1 + $0x30] sm:$0xf]
  %v60 = vld [vmem:[%s1 + $0x34] sm:$0xf]
  %v61 = vld [vmem:[%s1 + $0x38] sm:$0xf]
  %v62 = vld [vmem:[%s1 + $0x3c] sm:$0xf]
  %v63 = vld [vmem:[%s1 + $0x40] sm:$0xf]
  %v64 = vld [vmem:[%s1 + $0x44] sm:$0xf]
  %v65 = vld [vmem:[%s1 + $0x48] sm:$0xf]
  %v66 = vld [vmem:[%s1 + $0x4c] sm:$0xf]
  %v67 = vld [vmem:[%s1 + $0x50] sm:$0xf]
  %v68 = vld [vmem:[%s1 + $0x54] sm:$0xf]
  %v69 = vld [vmem:[%s1 + $0x58] sm:$0xf]
  %v70 = vld [vmem:[%s1 + $0x5c] sm:$0xf]
  %v71 = vld [vmem:[%s1 + $0x60] sm:$0xf]
  %v72 = vld [vmem:[%s1 + $0x64] sm:$0xf]
  %v73 = vld [vmem:[%s1 + $0x68] sm:$0xf]
  %v74 = vld [vmem:[%s1 + $0x6c] sm:$0xf]
  %v75 = vld [vmem:[%s1 + $0x70] sm:$0xf]
  %v76 = vld [vmem:[%s1 + $0x74] sm:$0xf]
  %v77 = vld [vmem:[%s1 + $0x78] sm:$0xf]
  %v78 = vld [vmem:[%s1 + $0x7c] sm:$0xf]
  %v79 = vld [vmem:[%s1 + $0x80] sm:$0xf]
  %v80 = vld [vmem:[%s1 + $0x84] sm:$0xf]
  %v81 = vld [vmem:[%s1 + $0x88] sm:$0xf]
  %v82 = vld [vmem:[%s1 + $0x8c] sm:$0xf]
  %v83 = vld [vmem:[%s1 + $0x90] sm:$0xf]
  %v84 = vld [vmem:[%s1 + $0x94] sm:$0xf]
  %v85 = vld [vmem:[%s1 + $0x98] sm:$0xf]
  %v86 = vld [vmem:[%s1 + $0x9c] sm:$0xf]
  %v87 = vld [vmem:[%s1 + $0xa0] sm:$0xf]
  %v88 = vld [vmem:[%s1 + $0xa4] sm:$0xf]
  %v89 = vld [vmem:[%s1 + $0xa8] sm:$0xf]
  %v90 = vld [vmem:[%s1 + $0xac] sm:$0xf]
  %v91 = vld [vmem:[%s1 + $0xb0] sm:$0xf]
  %v92 = vld [vmem:[%s1 + $0xb4] sm:$0xf]
  %v93 = vld [vmem:[%s1 + $0xb8] sm:$0xf]
  %v94 = vld [vmem:[%s1 + $0xbc] sm:$0xf]
  %v95 = vld [vmem:[%s1 + $0xc0] sm:$0xf]
  %v96 = vld [vmem:[%s1 + $0xc4] sm:$0xf]
  %v97 = vld [vmem:[%s1 + $0xc8] sm:$0xf]
  %v98 = vld [vmem:[%s1 + $0xcc] sm:$0xf]
  %v99 = vld [vmem:[%s1 + $0xd0] sm:$0xf]
  %v100 = vld [vmem:[%s1 + $0xd4] sm:$0xf]
  %v101 = vld [vmem:[%s1 + $0xd8] sm:$0xf]
  %v102 = vld [vmem:[%s1 + $0xdc] sm:$0xf]
  %v103 = vld [vmem:[%s1 + $0xe0] sm:$0xf]
  %v104 = vld [vmem:[%s1 + $0xe4] sm:$0xf]
  %v105 = vld [vmem:[%s1 + $0xe8] sm:$0xf]
  %v106 = vld [vmem:[%s1 + $0xec] sm:$0xf]
  %v107 = vld [vmem:[%s1 + $0xf0] sm:$0xf]
  %v108 = vld [vmem:[%s1 + $0xf4] sm:$0xf]
  %v109 = vld [vmem:[%s1 + $0xf8] sm:$0xf]
  %v110 = vld [vmem:[%s1 + $0xfc] sm:$0xf]
  %v111 = vld [vmem:[%s2] sm:$0x1]
  %v113 = vlaneseq
  %v114 = vshrl.u32 %v113, 7
  %v115 = vsub.s32 0, %v114
  %v116 = vrot.slane %v111, %v115
  %v150 = vunpack.c.l.b16 %v15
  %v151 = vunpack.c.h.b16 %v15
  %v152 = vunpack.c.l.b16 %v16
  %v153 = vunpack.c.h.b16 %v16
  %v154 = vunpack.c.l.b16 %v17
  %v155 = vunpack.c.h.b16 %v17
  %v156 = vunpack.c.l.b16 %v18
  %v157 = vunpack.c.h.b16 %v18
  %v158 = vunpack.c.l.b16 %v19
  %v159 = vunpack.c.h.b16 %v19
  %v160 = vunpack.c.l.b16 %v20
  %v161 = vunpack.c.h.b16 %v20
  %v162 = vunpack.c.l.b16 %v21
  %v163 = vunpack.c.h.b16 %v21
  %v164 = vunpack.c.l.b16 %v22
  %v165 = vunpack.c.h.b16 %v22
  %v166 = vunpack.c.l.b16 %v23
  %v167 = vunpack.c.h.b16 %v23
  %v168 = vunpack.c.l.b16 %v24
  %v169 = vunpack.c.h.b16 %v24
  %v170 = vunpack.c.l.b16 %v25
  %v171 = vunpack.c.h.b16 %v25
  %v172 = vunpack.c.l.b16 %v26
  %v173 = vunpack.c.h.b16 %v26
  %v174 = vunpack.c.l.b16 %v27
  %v175 = vunpack.c.h.b16 %v27
  %v176 = vunpack.c.l.b16 %v28
  %v177 = vunpack.c.h.b16 %v28
  %v178 = vunpack.c.l.b16 %v29
  %v179 = vunpack.c.h.b16 %v29
  %v180 = vunpack.c.l.b16 %v30
  %v181 = vunpack.c.h.b16 %v30
  %v182 = vunpack.c.l.b16 %v31
  %v183 = vunpack.c.h.b16 %v31
  %v184 = vunpack.c.l.b16 %v32
  %v185 = vunpack.c.h.b16 %v32
  %v186 = vunpack.c.l.b16 %v33
  %v187 = vunpack.c.h.b16 %v33
  %v188 = vunpack.c.l.b16 %v34
  %v189 = vunpack.c.h.b16 %v34
  %v190 = vunpack.c.l.b16 %v35
  %v191 = vunpack.c.h.b16 %v35
  %v192 = vunpack.c.l.b16 %v36
  %v193 = vunpack.c.h.b16 %v36
  %v194 = vunpack.c.l.b16 %v37
  %v195 = vunpack.c.h.b16 %v37
  %v196 = vunpack.c.l.b16 %v38
  %v197 = vunpack.c.h.b16 %v38
  %v198 = vunpack.c.l.b16 %v39
  %v199 = vunpack.c.h.b16 %v39
  %v200 = vunpack.c.l.b16 %v40
  %v201 = vunpack.c.h.b16 %v40
  %v202 = vunpack.c.l.b16 %v41
  %v203 = vunpack.c.h.b16 %v41
  %v204 = vunpack.c.l.b16 %v42
  %v205 = vunpack.c.h.b16 %v42
  %v206 = vunpack.c.l.b16 %v43
  %v207 = vunpack.c.h.b16 %v43
  %v208 = vunpack.c.l.b16 %v44
  %v209 = vunpack.c.h.b16 %v44
  %v210 = vunpack.c.l.b16 %v45
  %v211 = vunpack.c.h.b16 %v45
  %v212 = vunpack.c.l.b16 %v46
  %v213 = vunpack.c.h.b16 %v46
  %v214 = vpack.c.b16 %v154, %v150
  %v215 = vpack.c.b16 %v155, %v151
  %v216 = vpack.c.b16 %v156, %v152
  %v217 = vpack.c.b16 %v157, %v153
  %v218 = vpack.c.b16 %v162, %v158
  %v219 = vpack.c.b16 %v163, %v159
  %v220 = vpack.c.b16 %v164, %v160
  %v221 = vpack.c.b16 %v165, %v161
  %v222 = vpack.c.b16 %v170, %v166
  %v223 = vpack.c.b16 %v171, %v167
  %v224 = vpack.c.b16 %v172, %v168
  %v225 = vpack.c.b16 %v173, %v169
  %v226 = vpack.c.b16 %v178, %v174
  %v227 = vpack.c.b16 %v179, %v175
  %v228 = vpack.c.b16 %v180, %v176
  %v229 = vpack.c.b16 %v181, %v177
  %v230 = vpack.c.b16 %v186, %v182
  %v231 = vpack.c.b16 %v187, %v183
  %v232 = vpack.c.b16 %v188, %v184
  %v233 = vpack.c.b16 %v189, %v185
  %v234 = vpack.c.b16 %v194, %v190
  %v235 = vpack.c.b16 %v195, %v191
  %v236 = vpack.c.b16 %v196, %v192
  %v237 = vpack.c.b16 %v197, %v193
  %v238 = vpack.c.b16 %v202, %v198
  %v239 = vpack.c.b16 %v203, %v199
  %v240 = vpack.c.b16 %v204, %v200
  %v241 = vpack.c.b16 %v205, %v201
  %v242 = vpack.c.b16 %v210, %v206
  %v243 = vpack.c.b16 %v211, %v207
  %v244 = vpack.c.b16 %v212, %v208
  %v245 = vpack.c.b16 %v213, %v209
  %v342 = vunpack.c.l.b16 %v47
  %v343 = vunpack.c.l.b16 %v48
  %v344 = vunpack.c.l.b16 %v49
  %v345 = vunpack.c.l.b16 %v50
  %v346 = vunpack.c.l.b16 %v51
  %v347 = vunpack.c.l.b16 %v52
  %v348 = vunpack.c.l.b16 %v53
  %v349 = vunpack.c.l.b16 %v54
  %v350 = vunpack.c.l.b16 %v55
  %v351 = vunpack.c.l.b16 %v56
  %v352 = vunpack.c.l.b16 %v57
  %v353 = vunpack.c.l.b16 %v58
  %v354 = vunpack.c.l.b16 %v59
  %v355 = vunpack.c.l.b16 %v60
  %v356 = vunpack.c.l.b16 %v61
  %v357 = vunpack.c.l.b16 %v62
  %v358 = vunpack.c.l.b16 %v63
  %v359 = vunpack.c.l.b16 %v64
  %v360 = vunpack.c.l.b16 %v65
  %v361 = vunpack.c.l.b16 %v66
  %v362 = vunpack.c.l.b16 %v67
  %v363 = vunpack.c.l.b16 %v68
  %v364 = vunpack.c.l.b16 %v69
  %v365 = vunpack.c.l.b16 %v70
  %v366 = vunpack.c.l.b16 %v71
  %v367 = vunpack.c.l.b16 %v72
  %v368 = vunpack.c.l.b16 %v73
  %v369 = vunpack.c.l.b16 %v74
  %v370 = vunpack.c.l.b16 %v75
  %v371 = vunpack.c.l.b16 %v76
  %v372 = vunpack.c.l.b16 %v77
  %v373 = vunpack.c.l.b16 %v78
  %v374 = vunpack.c.l.b16 %v79
  %v375 = vunpack.c.l.b16 %v80
  %v376 = vunpack.c.l.b16 %v81
  %v377 = vunpack.c.l.b16 %v82
  %v378 = vunpack.c.l.b16 %v83
  %v379 = vunpack.c.l.b16 %v84
  %v380 = vunpack.c.l.b16 %v85
  %v381 = vunpack.c.l.b16 %v86
  %v382 = vunpack.c.l.b16 %v87
  %v383 = vunpack.c.l.b16 %v88
  %v384 = vunpack.c.l.b16 %v89
  %v385 = vunpack.c.l.b16 %v90
  %v386 = vunpack.c.l.b16 %v91
  %v387 = vunpack.c.l.b16 %v92
  %v388 = vunpack.c.l.b16 %v93
  %v389 = vunpack.c.l.b16 %v94
  %v390 = vunpack.c.l.b16 %v95
  %v391 = vunpack.c.l.b16 %v96
  %v392 = vunpack.c.l.b16 %v97
  %v393 = vunpack.c.l.b16 %v98
  %v394 = vunpack.c.l.b16 %v99
  %v395 = vunpack.c.l.b16 %v100
  %v396 = vunpack.c.l.b16 %v101
  %v397 = vunpack.c.l.b16 %v102
  %v398 = vunpack.c.l.b16 %v103
  %v399 = vunpack.c.l.b16 %v104
  %v400 = vunpack.c.l.b16 %v105
  %v401 = vunpack.c.l.b16 %v106
  %v402 = vunpack.c.l.b16 %v107
  %v403 = vunpack.c.l.b16 %v108
  %v404 = vunpack.c.l.b16 %v109
  %v405 = vunpack.c.l.b16 %v110
  %v406 = vpack.c.b16 %v343, %v342
  %v407 = vpack.c.b16 %v345, %v344
  %v408 = vpack.c.b16 %v347, %v346
  %v409 = vpack.c.b16 %v349, %v348
  %v410 = vpack.c.b16 %v351, %v350
  %v411 = vpack.c.b16 %v353, %v352
  %v412 = vpack.c.b16 %v355, %v354
  %v413 = vpack.c.b16 %v357, %v356
  %v414 = vpack.c.b16 %v359, %v358
  %v415 = vpack.c.b16 %v361, %v360
  %v416 = vpack.c.b16 %v363, %v362
  %v417 = vpack.c.b16 %v365, %v364
  %v418 = vpack.c.b16 %v367, %v366
  %v419 = vpack.c.b16 %v369, %v368
  %v420 = vpack.c.b16 %v371, %v370
  %v421 = vpack.c.b16 %v373, %v372
  %v422 = vpack.c.b16 %v375, %v374
  %v423 = vpack.c.b16 %v377, %v376
  %v424 = vpack.c.b16 %v379, %v378
  %v425 = vpack.c.b16 %v381, %v380
  %v426 = vpack.c.b16 %v383, %v382
  %v427 = vpack.c.b16 %v385, %v384
  %v428 = vpack.c.b16 %v387, %v386
  %v429 = vpack.c.b16 %v389, %v388
  %v430 = vpack.c.b16 %v391, %v390
  %v431 = vpack.c.b16 %v393, %v392
  %v432 = vpack.c.b16 %v395, %v394
  %v433 = vpack.c.b16 %v397, %v396
  %v434 = vpack.c.b16 %v399, %v398
  %v435 = vpack.c.b16 %v401, %v400
  %v436 = vpack.c.b16 %v403, %v402
  %v437 = vpack.c.b16 %v405, %v404
  %470 = vmatprep.subr.bf16.mxu0 0
  %471 = vmatpush1.bf16.msra.mxu0 %v406
  %472 = vmatprep.subr.bf16.mxu0 0
  %473 = vmatpush1.bf16.msra.mxu0 %v407
  %474 = vmatprep.subr.bf16.mxu0 0
  %475 = vmatpush1.bf16.msra.mxu0 %v408
  %476 = vmatprep.subr.bf16.mxu0 0
  %477 = vmatpush1.bf16.msra.mxu0 %v409
  %478 = vmatprep.subr.bf16.mxu0 0
  %479 = vmatpush1.bf16.msra.mxu0 %v410
  %480 = vmatprep.subr.bf16.mxu0 0
  %481 = vmatpush1.bf16.msra.mxu0 %v411
  %482 = vmatprep.subr.bf16.mxu0 0
  %483 = vmatpush1.bf16.msra.mxu0 %v412
  %484 = vmatprep.subr.bf16.mxu0 0
  %485 = vmatpush1.bf16.msra.mxu0 %v413
  %486 = vmatprep.subr.bf16.mxu0 0
  %487 = vmatpush1.bf16.msra.mxu0 %v414
  %488 = vmatprep.subr.bf16.mxu0 0
  %489 = vmatpush1.bf16.msra.mxu0 %v415
  %490 = vmatprep.subr.bf16.mxu0 0
  %491 = vmatpush1.bf16.msra.mxu0 %v416
  %492 = vmatprep.subr.bf16.mxu0 0
  %493 = vmatpush1.bf16.msra.mxu0 %v417
  %494 = vmatprep.subr.bf16.mxu0 0
  %495 = vmatpush1.bf16.msra.mxu0 %v418
  %496 = vmatprep.subr.bf16.mxu0 0
  %497 = vmatpush1.bf16.msra.mxu0 %v419
  %498 = vmatprep.subr.bf16.mxu0 0
  %499 = vmatpush1.bf16.msra.mxu0 %v420
  %500 = vmatprep.subr.bf16.mxu0 0
  %501 = vmatpush1.bf16.msra.mxu0 %v421
  %502 = vmatprep.mubr.bf16.mxu0 %v215
  %503 = vmatmul.mubr.bf16.gmra.mrb[0].mxu0 %v214
  %v504 = vpop.f32.mrb[0].mxu0
  %v505 = vadd.f32 %v116, %v504
  %v506 = vpop.f32.mrb[0].mxu0
  %v507 = vpop.f32.mrb[0].mxu0
  %v508 = vadd.f32 %v116, %v507
  %v509 = vpop.f32.mrb[0].mxu0
  %510 = vmatprep.mubr.bf16.mxu0 %v219
  %511 = vmatmul.mubr.bf16.gmra.mrb[0].mxu0 %v218
  %v512 = vpop.f32.mrb[0].mxu0
  %v513 = vadd.f32 %v116, %v512
  %v514 = vpop.f32.mrb[0].mxu0
  %v515 = vpop.f32.mrb[0].mxu0
  %v516 = vadd.f32 %v116, %v515
  %v517 = vpop.f32.mrb[0].mxu0
  %518 = vmatprep.mubr.bf16.mxu0 %v223
  %519 = vmatmul.mubr.bf16.gmra.mrb[0].mxu0 %v222
  %v520 = vpop.f32.mrb[0].mxu0
  %v521 = vadd.f32 %v116, %v520
  %v522 = vpop.f32.mrb[0].mxu0
  %v523 = vpop.f32.mrb[0].mxu0
  %v524 = vadd.f32 %v116, %v523
  %v525 = vpop.f32.mrb[0].mxu0
  %526 = vmatprep.mubr.bf16.mxu0 %v227
  %527 = vmatmul.mubr.bf16.gmra.mrb[0].mxu0 %v226
  %v528 = vpop.f32.mrb[0].mxu0
  %v529 = vadd.f32 %v116, %v528
  %v530 = vpop.f32.mrb[0].mxu0
  %v531 = vpop.f32.mrb[0].mxu0
  %v532 = vadd.f32 %v116, %v531
  %v533 = vpop.f32.mrb[0].mxu0
  %534 = vmatprep.mubr.bf16.mxu0 %v231
  %535 = vmatmul.mubr.bf16.gmra.mrb[0].mxu0 %v230
  %v536 = vpop.f32.mrb[0].mxu0
  %v537 = vadd.f32 %v116, %v536
  %v538 = vpop.f32.mrb[0].mxu0
  %v539 = vpop.f32.mrb[0].mxu0
  %v540 = vadd.f32 %v116, %v539
  %v541 = vpop.f32.mrb[0].mxu0
  %542 = vmatprep.mubr.bf16.mxu0 %v235
  %543 = vmatmul.mubr.bf16.gmra.mrb[0].mxu0 %v234
  %v544 = vpop.f32.mrb[0].mxu0
  %v545 = vadd.f32 %v116, %v544
  %v546 = vpop.f32.mrb[0].mxu0
  %v547 = vpop.f32.mrb[0].mxu0
  %v548 = vadd.f32 %v116, %v547
  %v549 = vpop.f32.mrb[0].mxu0
  %550 = vmatprep.mubr.bf16.mxu0 %v239
  %551 = vmatmul.mubr.bf16.gmra.mrb[0].mxu0 %v238
  %v552 = vpop.f32.mrb[0].mxu0
  %v553 = vadd.f32 %v116, %v552
  %v554 = vpop.f32.mrb[0].mxu0
  %v555 = vpop.f32.mrb[0].mxu0
  %v556 = vadd.f32 %v116, %v555
  %v557 = vpop.f32.mrb[0].mxu0
  %558 = vmatprep.mubr.bf16.mxu0 %v243
  %559 = vmatmul.mubr.bf16.gmra.mrb[0].mxu0 %v242
  %v560 = vpop.f32.mrb[0].mxu0
  %v561 = vadd.f32 %v116, %v560
  %v562 = vpop.f32.mrb[0].mxu0
  %v563 = vpop.f32.mrb[0].mxu0
  %v564 = vadd.f32 %v116, %v563
  %v565 = vpop.f32.mrb[0].mxu0
  %566 = vdwg.mxu0
  %567 = vmatprep.subr.bf16.mxu0 0
  %568 = vmatpush1.bf16.msra.mxu0 %v422
  %569 = vmatprep.subr.bf16.mxu0 0
  %570 = vmatpush1.bf16.msra.mxu0 %v423
  %571 = vmatprep.subr.bf16.mxu0 0
  %572 = vmatpush1.bf16.msra.mxu0 %v424
  %573 = vmatprep.subr.bf16.mxu0 0
  %574 = vmatpush1.bf16.msra.mxu0 %v425
  %575 = vmatprep.subr.bf16.mxu0 0
  %576 = vmatpush1.bf16.msra.mxu0 %v426
  %577 = vmatprep.subr.bf16.mxu0 0
  %578 = vmatpush1.bf16.msra.mxu0 %v427
  %579 = vmatprep.subr.bf16.mxu0 0
  %580 = vmatpush1.bf16.msra.mxu0 %v428
  %581 = vmatprep.subr.bf16.mxu0 0
  %582 = vmatpush1.bf16.msra.mxu0 %v429
  %583 = vmatprep.subr.bf16.mxu0 0
  %584 = vmatpush1.bf16.msra.mxu0 %v430
  %585 = vmatprep.subr.bf16.mxu0 0
  %586 = vmatpush1.bf16.msra.mxu0 %v431
  %587 = vmatprep.subr.bf16.mxu0 0
  %588 = vmatpush1.bf16.msra.mxu0 %v432
  %589 = vmatprep.subr.bf16.mxu0 0
  %590 = vmatpush1.bf16.msra.mxu0 %v433
  %591 = vmatprep.subr.bf16.mxu0 0
  %592 = vmatpush1.bf16.msra.mxu0 %v434
  %593 = vmatprep.subr.bf16.mxu0 0
  %594 = vmatpush1.bf16.msra.mxu0 %v435
  %595 = vmatprep.subr.bf16.mxu0 0
  %596 = vmatpush1.bf16.msra.mxu0 %v436
  %597 = vmatprep.subr.bf16.mxu0 0
  %598 = vmatpush1.bf16.msra.mxu0 %v437
  %599 = vmatprep.mubr.bf16.mxu0 %v217
  %600 = vmatmul.mubr.bf16.gmra.mrb[0].mxu0 %v216
  %v601 = vpop.f32.mrb[0].mxu0
  %v602 = vadd.f32 %v505, %v601
  %v603 = vpop.f32.mrb[0].mxu0
  %v604 = vpop.f32.mrb[0].mxu0
  %v605 = vadd.f32 %v508, %v604
  %v606 = vpop.f32.mrb[0].mxu0
  %607 = vmatprep.mubr.bf16.mxu0 %v221
  %608 = vmatmul.mubr.bf16.gmra.mrb[0].mxu0 %v220
  %v609 = vpop.f32.mrb[0].mxu0
  %v610 = vadd.f32 %v513, %v609
  %v611 = vpop.f32.mrb[0].mxu0
  %v612 = vpop.f32.mrb[0].mxu0
  %v613 = vadd.f32 %v516, %v612
  %v614 = vpop.f32.mrb[0].mxu0
  %615 = vmatprep.mubr.bf16.mxu0 %v225
  %616 = vmatmul.mubr.bf16.gmra.mrb[0].mxu0 %v224
  %v617 = vpop.f32.mrb[0].mxu0
  %v618 = vadd.f32 %v521, %v617
  %v619 = vpop.f32.mrb[0].mxu0
  %v620 = vpop.f32.mrb[0].mxu0
  %v621 = vadd.f32 %v524, %v620
  %v622 = vpop.f32.mrb[0].mxu0
  %623 = vmatprep.mubr.bf16.mxu0 %v229
  %624 = vmatmul.mubr.bf16.gmra.mrb[0].mxu0 %v228
  %v625 = vpop.f32.mrb[0].mxu0
  %v626 = vadd.f32 %v529, %v625
  %v627 = vpop.f32.mrb[0].mxu0
  %v628 = vpop.f32.mrb[0].mxu0
  %v629 = vadd.f32 %v532, %v628
  %v630 = vpop.f32.mrb[0].mxu0
  %631 = vmatprep.mubr.bf16.mxu0 %v233
  %632 = vmatmul.mubr.bf16.gmra.mrb[0].mxu0 %v232
  %v633 = vpop.f32.mrb[0].mxu0
  %v634 = vadd.f32 %v537, %v633
  %v635 = vpop.f32.mrb[0].mxu0
  %v636 = vpop.f32.mrb[0].mxu0
  %v637 = vadd.f32 %v540, %v636
  %v638 = vpop.f32.mrb[0].mxu0
  %639 = vmatprep.mubr.bf16.mxu0 %v237
  %640 = vmatmul.mubr.bf16.gmra.mrb[0].mxu0 %v236
  %v641 = vpop.f32.mrb[0].mxu0
  %v642 = vadd.f32 %v545, %v641
  %v643 = vpop.f32.mrb[0].mxu0
  %v644 = vpop.f32.mrb[0].mxu0
  %v645 = vadd.f32 %v548, %v644
  %v646 = vpop.f32.mrb[0].mxu0
  %647 = vmatprep.mubr.bf16.mxu0 %v241
  %648 = vmatmul.mubr.bf16.gmra.mrb[0].mxu0 %v240
  %v649 = vpop.f32.mrb[0].mxu0
  %v650 = vadd.f32 %v553, %v649
  %v651 = vpop.f32.mrb[0].mxu0
  %v652 = vpop.f32.mrb[0].mxu0
  %v653 = vadd.f32 %v556, %v652
  %v654 = vpop.f32.mrb[0].mxu0
  %655 = vmatprep.mubr.bf16.mxu0 %v245
  %656 = vmatmul.mubr.bf16.gmra.mrb[0].mxu0 %v244
  %v657 = vpop.f32.mrb[0].mxu0
  %v658 = vadd.f32 %v561, %v657
  %v659 = vpop.f32.mrb[0].mxu0
  %v660 = vpop.f32.mrb[0].mxu0
  %v661 = vadd.f32 %v564, %v660
  %v662 = vpop.f32.mrb[0].mxu0
  %663 = vdwg.mxu0
  %v664 = vmax.f32 %v602, 0.0
  %v665 = vmax.f32 %v605, 0.0
  %v666 = vmax.f32 %v610, 0.0
  %v667 = vmax.f32 %v613, 0.0
  %v668 = vmax.f32 %v618, 0.0
  %v669 = vmax.f32 %v621, 0.0
  %v670 = vmax.f32 %v626, 0.0
  %v671 = vmax.f32 %v629, 0.0
  %v672 = vmax.f32 %v634, 0.0
  %v673 = vmax.f32 %v637, 0.0
  %v674 = vmax.f32 %v642, 0.0
  %v675 = vmax.f32 %v645, 0.0
  %v676 = vmax.f32 %v650, 0.0
  %v677 = vmax.f32 %v653, 0.0
  %v678 = vmax.f32 %v658, 0.0
  %v679 = vmax.f32 %v661, 0.0
  %v680 = vpack.c.bf16 %v665, %v664
  %v681 = vpack.c.bf16 %v667, %v666
  %v682 = vpack.c.bf16 %v669, %v668
  %v683 = vpack.c.bf16 %v671, %v670
  %v684 = vpack.c.bf16 %v673, %v672
  %v685 = vpack.c.bf16 %v675, %v674
  %v686 = vpack.c.bf16 %v677, %v676
  %v687 = vpack.c.bf16 %v679, %v678
  %v696 = vunpack.c.l.b16 %v680
  %v697 = vunpack.c.h.b16 %v680
  %v698 = vunpack.c.l.b16 %v681
  %v699 = vunpack.c.h.b16 %v681
  %v700 = vunpack.c.l.b16 %v682
  %v701 = vunpack.c.h.b16 %v682
  %v702 = vunpack.c.l.b16 %v683
  %v703 = vunpack.c.h.b16 %v683
  %v704 = vunpack.c.l.b16 %v684
  %v705 = vunpack.c.h.b16 %v684
  %v706 = vunpack.c.l.b16 %v685
  %v707 = vunpack.c.h.b16 %v685
  %v708 = vunpack.c.l.b16 %v686
  %v709 = vunpack.c.h.b16 %v686
  %v710 = vunpack.c.l.b16 %v687
  %v711 = vunpack.c.h.b16 %v687
  %v712 = vpack.c.b16 %v696, %v696
  %v713 = vpack.c.b16 %v697, %v697
  %v714 = vpack.c.b16 %v698, %v698
  %v715 = vpack.c.b16 %v699, %v699
  %v716 = vpack.c.b16 %v700, %v700
  %v717 = vpack.c.b16 %v701, %v701
  %v718 = vpack.c.b16 %v702, %v702
  %v719 = vpack.c.b16 %v703, %v703
  %v720 = vpack.c.b16 %v704, %v704
  %v721 = vpack.c.b16 %v705, %v705
  %v722 = vpack.c.b16 %v706, %v706
  %v723 = vpack.c.b16 %v707, %v707
  %v724 = vpack.c.b16 %v708, %v708
  %v725 = vpack.c.b16 %v709, %v709
  %v726 = vpack.c.b16 %v710, %v710
  %v727 = vpack.c.b16 %v711, %v711
  %vm744 = vcmask 519168
  %745 = vst.msk [vmem:[%s3] sm:$0xf] %vm744, %v712
  %746 = vst.msk [vmem:[%s3 + $0x4] sm:$0xf] %vm744, %v713
  %747 = vst.msk [vmem:[%s3 + $0x8] sm:$0xf] %vm744, %v714
  %748 = vst.msk [vmem:[%s3 + $0xc] sm:$0xf] %vm744, %v715
  %749 = vst.msk [vmem:[%s3 + $0x10] sm:$0xf] %vm744, %v716
  %750 = vst.msk [vmem:[%s3 + $0x14] sm:$0xf] %vm744, %v717
  %751 = vst.msk [vmem:[%s3 + $0x18] sm:$0xf] %vm744, %v718
  %752 = vst.msk [vmem:[%s3 + $0x1c] sm:$0xf] %vm744, %v719
  %753 = vst.msk [vmem:[%s3 + $0x20] sm:$0xf] %vm744, %v720
  %754 = vst.msk [vmem:[%s3 + $0x24] sm:$0xf] %vm744, %v721
  %755 = vst.msk [vmem:[%s3 + $0x28] sm:$0xf] %vm744, %v722
  %756 = vst.msk [vmem:[%s3 + $0x2c] sm:$0xf] %vm744, %v723
  %757 = vst.msk [vmem:[%s3 + $0x30] sm:$0xf] %vm744, %v724
  %758 = vst.msk [vmem:[%s3 + $0x34] sm:$0xf] %vm744, %v725
  %759 = vst.msk [vmem:[%s3 + $0x38] sm:$0xf] %vm744, %v726
  %760 = vst.msk [vmem:[%s3 + $0x3c] sm:$0xf] %vm744, %v727
  // Predicated region
  $region14: #{cnn_multiaction_forward.5} parent=0 // pred_check
    _
  $region15: #{cnn_multiaction_forward.5} parent=0 // pred_check_branch
    %762 = sbr.rel (0) target = $region17
  $region16: #{cnn_multiaction_forward.5} parent=0 // pred_region
    _
  $region17: #{cnn_multiaction_forward.5} parent=0 // pred_fallthru
    _
  // Predicated region
  $region18: #{cnn_multiaction_forward.5} parent=0 // pred_check
    _
  $region19: #{cnn_multiaction_forward.5} parent=0 // pred_check_branch
    %764 = sbr.rel (0) target = $region21
  $region20: #{cnn_multiaction_forward.5} parent=0 // pred_region
    _
  $region21: #{cnn_multiaction_forward.5} parent=0 // pred_fallthru
    _

// kernel: cnn_multiaction_forward.6
$region0: #{cnn_multiaction_forward.6}
  #allocation0 [shape = 'u32[]', space=smem, size = 0x4, offset = 0x4, fixed_abs, tag = 'smem constant byte address 0x4 - core index']
  #allocation1 [shape = 'u32[144,128]{1,0:T(1,128)}', space=vmem, size = 0x12000, scoped, tag = 'internal scratch']
  %s0 = inlined_call_operand.vmem [shape: bf16[72,576], index: 0, kind: input, shape index: {}]
  %s1 = inlined_call_operand.vmem [shape: bf16[576,64], index: 1, kind: input, shape index: {}]
  %s2 = inlined_call_operand.vmem [shape: f32[1,64], index: 2, kind: input, shape index: {}]
  %s3 = inlined_call_operand.vmem [shape: bf16[72,64], index: 3, kind: output, shape index: {}]
  %s4 = sld [smem:[#allocation0]]
  $region22: #{cnn_multiaction_forward.6} parent=0
    _
  %s6 = ssub.s32 1, %s4
  %s7 = scalar_select 0, %s6, %s4
  // Predicated region
  $region2: #{cnn_multiaction_forward.6} parent=0 // pred_check
    _
  $region3: #{cnn_multiaction_forward.6} parent=0 // pred_check_branch
    %9 = sbr.rel (0) target = $region5
  $region4: #{cnn_multiaction_forward.6} parent=0 // pred_region
    _
  $region5: #{cnn_multiaction_forward.6} parent=0 // pred_fallthru
    _
  // Predicated region
  $region6: #{cnn_multiaction_forward.6} parent=0 // pred_check
    _
  $region7: #{cnn_multiaction_forward.6} parent=0 // pred_check_branch
    %11 = sbr.rel (0) target = $region9
  $region8: #{cnn_multiaction_forward.6} parent=0 // pred_region
    _
  $region9: #{cnn_multiaction_forward.6} parent=0 // pred_fallthru
    _
  // Predicated region
  $region10: #{cnn_multiaction_forward.6} parent=0 // pred_check
    _
  $region11: #{cnn_multiaction_forward.6} parent=0 // pred_check_branch
    %13 = sbr.rel (0) target = $region13
  $region12: #{cnn_multiaction_forward.6} parent=0 // pred_region
    _
  $region13: #{cnn_multiaction_forward.6} parent=0 // pred_fallthru
    _
  %v15 = vld [vmem:[%s0] sm:$0xff]
  %v16 = vld [vmem:[%s0 + $0x8] sm:$0xff]
  %v17 = vld [vmem:[%s0 + $0x10] sm:$0xf]
  %v18 = vld [vmem:[%s0 + $0x14] sm:$0xff]
  %v19 = vld [vmem:[%s0 + $0x1c] sm:$0xff]
  %v20 = vld [vmem:[%s0 + $0x24] sm:$0xf]
  %v21 = vld [vmem:[%s0 + $0x28] sm:$0xff]
  %v22 = vld [vmem:[%s0 + $0x30] sm:$0xff]
  %v23 = vld [vmem:[%s0 + $0x38] sm:$0xf]
  %v24 = vld [vmem:[%s0 + $0x3c] sm:$0xff]
  %v25 = vld [vmem:[%s0 + $0x44] sm:$0xff]
  %v26 = vld [vmem:[%s0 + $0x4c] sm:$0xf]
  %v27 = vld [vmem:[%s0 + $0x50] sm:$0xff]
  %v28 = vld [vmem:[%s0 + $0x58] sm:$0xff]
  %v29 = vld [vmem:[%s0 + $0x60] sm:$0xf]
  %v30 = vld [vmem:[%s0 + $0x64] sm:$0xff]
  %v31 = vld [vmem:[%s0 + $0x6c] sm:$0xff]
  %v32 = vld [vmem:[%s0 + $0x74] sm:$0xf]
  %v33 = vld [vmem:[%s0 + $0x78] sm:$0xff]
  %v34 = vld [vmem:[%s0 + $0x80] sm:$0xff]
  %v35 = vld [vmem:[%s0 + $0x88] sm:$0xf]
  %v36 = vld [vmem:[%s0 + $0x8c] sm:$0xff]
  %v37 = vld [vmem:[%s0 + $0x94] sm:$0xff]
  %v38 = vld [vmem:[%s0 + $0x9c] sm:$0xf]
  %v39 = vld [vmem:[%s0 + $0xa0] sm:$0xff]
  %v40 = vld [vmem:[%s0 + $0xa8] sm:$0xff]
  %v41 = vld [vmem:[%s0 + $0xb0] sm:$0xf]
  %v42 = vld [vmem:[%s1] sm:$0xf]
  %v43 = vld [vmem:[%s1 + $0x4] sm:$0xf]
  %v44 = vld [vmem:[%s1 + $0x8] sm:$0xf]
  %v45 = vld [vmem:[%s1 + $0xc] sm:$0xf]
  %v46 = vld [vmem:[%s1 + $0x10] sm:$0xf]
  %v47 = vld [vmem:[%s1 + $0x14] sm:$0xf]
  %v48 = vld [vmem:[%s1 + $0x18] sm:$0xf]
  %v49 = vld [vmem:[%s1 + $0x1c] sm:$0xf]
  %v50 = vld [vmem:[%s1 + $0x20] sm:$0xf]
  %v51 = vld [vmem:[%s1 + $0x24] sm:$0xf]
  %v52 = vld [vmem:[%s1 + $0x28] sm:$0xf]
  %v53 = vld [vmem:[%s1 + $0x2c] sm:$0xf]
  %v54 = vld [vmem:[%s1 + $0x30] sm:$0xf]
  %v55 = vld [vmem:[%s1 + $0x34] sm:$0xf]
  %v56 = vld [vmem:[%s1 + $0x38] sm:$0xf]
  %v57 = vld [vmem:[%s1 + $0x3c] sm:$0xf]
  %v58 = vld [vmem:[%s1 + $0x40] sm:$0xf]
  %v59 = vld [vmem:[%s1 + $0x44] sm:$0xf]
  %v60 = vld [vmem:[%s1 + $0x48] sm:$0xf]
  %v61 = vld [vmem:[%s1 + $0x4c] sm:$0xf]
  %v62 = vld [vmem:[%s1 + $0x50] sm:$0xf]
  %v63 = vld [vmem:[%s1 + $0x54] sm:$0xf]
  %v64 = vld [vmem:[%s1 + $0x58] sm:$0xf]
  %v65 = vld [vmem:[%s1 + $0x5c] sm:$0xf]
  %v66 = vld [vmem:[%s1 + $0x60] sm:$0xf]
  %v67 = vld [vmem:[%s1 + $0x64] sm:$0xf]
  %v68 = vld [vmem:[%s1 + $0x68] sm:$0xf]
  %v69 = vld [vmem:[%s1 + $0x6c] sm:$0xf]
  %v70 = vld [vmem:[%s1 + $0x70] sm:$0xf]
  %v71 = vld [vmem:[%s1 + $0x74] sm:$0xf]
  %v72 = vld [vmem:[%s1 + $0x78] sm:$0xf]
  %v73 = vld [vmem:[%s1 + $0x7c] sm:$0xf]
  %v74 = vld [vmem:[%s1 + $0x80] sm:$0xf]
  %v75 = vld [vmem:[%s1 + $0x84] sm:$0xf]
  %v76 = vld [vmem:[%s1 + $0x88] sm:$0xf]
  %v77 = vld [vmem:[%s1 + $0x8c] sm:$0xf]
  %v78 = vld [vmem:[%s1 + $0x90] sm:$0xf]
  %v79 = vld [vmem:[%s1 + $0x94] sm:$0xf]
  %v80 = vld [vmem:[%s1 + $0x98] sm:$0xf]
  %v81 = vld [vmem:[%s1 + $0x9c] sm:$0xf]
  %v82 = vld [vmem:[%s1 + $0xa0] sm:$0xf]
  %v83 = vld [vmem:[%s1 + $0xa4] sm:$0xf]
  %v84 = vld [vmem:[%s1 + $0xa8] sm:$0xf]
  %v85 = vld [vmem:[%s1 + $0xac] sm:$0xf]
  %v86 = vld [vmem:[%s1 + $0xb0] sm:$0xf]
  %v87 = vld [vmem:[%s1 + $0xb4] sm:$0xf]
  %v88 = vld [vmem:[%s1 + $0xb8] sm:$0xf]
  %v89 = vld [vmem:[%s1 + $0xbc] sm:$0xf]
  %v90 = vld [vmem:[%s1 + $0xc0] sm:$0xf]
  %v91 = vld [vmem:[%s1 + $0xc4] sm:$0xf]
  %v92 = vld [vmem:[%s1 + $0xc8] sm:$0xf]
  %v93 = vld [vmem:[%s1 + $0xcc] sm:$0xf]
  %v94 = vld [vmem:[%s1 + $0xd0] sm:$0xf]
  %v95 = vld [vmem:[%s1 + $0xd4] sm:$0xf]
  %v96 = vld [vmem:[%s1 + $0xd8] sm:$0xf]
  %v97 = vld [vmem:[%s1 + $0xdc] sm:$0xf]
  %v98 = vld [vmem:[%s1 + $0xe0] sm:$0xf]
  %v99 = vld [vmem:[%s1 + $0xe4] sm:$0xf]
  %v100 = vld [vmem:[%s1 + $0xe8] sm:$0xf]
  %v101 = vld [vmem:[%s1 + $0xec] sm:$0xf]
  %v102 = vld [vmem:[%s1 + $0xf0] sm:$0xf]
  %v103 = vld [vmem:[%s1 + $0xf4] sm:$0xf]
  %v104 = vld [vmem:[%s1 + $0xf8] sm:$0xf]
  %v105 = vld [vmem:[%s1 + $0xfc] sm:$0xf]
  %v106 = vld [vmem:[%s1 + $0x100] sm:$0xf]
  %v107 = vld [vmem:[%s1 + $0x104] sm:$0xf]
  %v108 = vld [vmem:[%s1 + $0x108] sm:$0xf]
  %v109 = vld [vmem:[%s1 + $0x10c] sm:$0xf]
  %v110 = vld [vmem:[%s1 + $0x110] sm:$0xf]
  %v111 = vld [vmem:[%s1 + $0x114] sm:$0xf]
  %v112 = vld [vmem:[%s1 + $0x118] sm:$0xf]
  %v113 = vld [vmem:[%s1 + $0x11c] sm:$0xf]
  %v114 = vld [vmem:[%s2] sm:$0x1]
  %v116 = vlaneseq
  %v117 = vshrl.u32 %v116, 7
  %v118 = vsub.s32 0, %v117
  %v119 = vrot.slane %v114, %v118
  %v148 = vunpack.c.l.b16 %v15
  %v149 = vunpack.c.h.b16 %v15
  %v150 = vunpack.c.l.b16 %v16
  %v151 = vunpack.c.h.b16 %v16
  %v152 = vunpack.c.l.b16 %v17
  %v153 = vunpack.c.l.b16 %v18
  %v154 = vunpack.c.h.b16 %v18
  %v155 = vunpack.c.l.b16 %v19
  %v156 = vunpack.c.h.b16 %v19
  %v157 = vunpack.c.l.b16 %v20
  %v158 = vunpack.c.l.b16 %v21
  %v159 = vunpack.c.h.b16 %v21
  %v160 = vunpack.c.l.b16 %v22
  %v161 = vunpack.c.h.b16 %v22
  %v162 = vunpack.c.l.b16 %v23
  %v163 = vunpack.c.l.b16 %v24
  %v164 = vunpack.c.h.b16 %v24
  %v165 = vunpack.c.l.b16 %v25
  %v166 = vunpack.c.h.b16 %v25
  %v167 = vunpack.c.l.b16 %v26
  %v168 = vunpack.c.l.b16 %v27
  %v169 = vunpack.c.h.b16 %v27
  %v170 = vunpack.c.l.b16 %v28
  %v171 = vunpack.c.h.b16 %v28
  %v172 = vunpack.c.l.b16 %v29
  %v173 = vunpack.c.l.b16 %v30
  %v174 = vunpack.c.h.b16 %v30
  %v175 = vunpack.c.l.b16 %v31
  %v176 = vunpack.c.h.b16 %v31
  %v177 = vunpack.c.l.b16 %v32
  %v178 = vunpack.c.l.b16 %v33
  %v179 = vunpack.c.h.b16 %v33
  %v180 = vunpack.c.l.b16 %v34
  %v181 = vunpack.c.h.b16 %v34
  %v182 = vunpack.c.l.b16 %v35
  %v183 = vunpack.c.l.b16 %v36
  %v184 = vunpack.c.h.b16 %v36
  %v185 = vunpack.c.l.b16 %v37
  %v186 = vunpack.c.h.b16 %v37
  %v187 = vunpack.c.l.b16 %v38
  %v188 = vunpack.c.l.b16 %v39
  %v189 = vunpack.c.h.b16 %v39
  %v190 = vunpack.c.l.b16 %v40
  %v191 = vunpack.c.h.b16 %v40
  %v192 = vunpack.c.l.b16 %v41
  %v193 = vpack.c.b16 %v153, %v148
  %v194 = vpack.c.b16 %v154, %v149
  %v195 = vpack.c.b16 %v155, %v150
  %v196 = vpack.c.b16 %v156, %v151
  %v197 = vpack.c.b16 %v157, %v152
  %v198 = vpack.c.b16 %v163, %v158
  %v199 = vpack.c.b16 %v164, %v159
  %v200 = vpack.c.b16 %v165, %v160
  %v201 = vpack.c.b16 %v166, %v161
  %v202 = vpack.c.b16 %v167, %v162
  %v203 = vpack.c.b16 %v173, %v168
  %v204 = vpack.c.b16 %v174, %v169
  %v205 = vpack.c.b16 %v175, %v170
  %v206 = vpack.c.b16 %v176, %v171
  %v207 = vpack.c.b16 %v177, %v172
  %v208 = vpack.c.b16 %v183, %v178
  %v209 = vpack.c.b16 %v184, %v179
  %v210 = vpack.c.b16 %v185, %v180
  %v211 = vpack.c.b16 %v186, %v181
  %v212 = vpack.c.b16 %v187, %v182
  %v213 = vpack.c.b16 %v188, %v188
  %v214 = vpack.c.b16 %v189, %v189
  %v215 = vpack.c.b16 %v190, %v190
  %v216 = vpack.c.b16 %v191, %v191
  %v217 = vpack.c.b16 %v192, %v192
  %v310 = vunpack.c.l.b16 %v42
  %v311 = vunpack.c.l.b16 %v43
  %v312 = vunpack.c.l.b16 %v44
  %v313 = vunpack.c.l.b16 %v45
  %v314 = vunpack.c.l.b16 %v46
  %v315 = vunpack.c.l.b16 %v47
  %v316 = vunpack.c.l.b16 %v48
  %v317 = vunpack.c.l.b16 %v49
  %v318 = vunpack.c.l.b16 %v50
  %v319 = vunpack.c.l.b16 %v51
  %v320 = vunpack.c.l.b16 %v52
  %v321 = vunpack.c.l.b16 %v53
  %v322 = vunpack.c.l.b16 %v54
  %v323 = vunpack.c.l.b16 %v55
  %v324 = vunpack.c.l.b16 %v56
  %v325 = vunpack.c.l.b16 %v57
  %v326 = vunpack.c.l.b16 %v58
  %v327 = vunpack.c.l.b16 %v59
  %v328 = vunpack.c.l.b16 %v60
  %v329 = vunpack.c.l.b16 %v61
  %v330 = vunpack.c.l.b16 %v62
  %v331 = vunpack.c.l.b16 %v63
  %v332 = vunpack.c.l.b16 %v64
  %v333 = vunpack.c.l.b16 %v65
  %v334 = vunpack.c.l.b16 %v66
  %v335 = vunpack.c.l.b16 %v67
  %v336 = vunpack.c.l.b16 %v68
  %v337 = vunpack.c.l.b16 %v69
  %v338 = vunpack.c.l.b16 %v70
  %v339 = vunpack.c.l.b16 %v71
  %v340 = vunpack.c.l.b16 %v72
  %v341 = vunpack.c.l.b16 %v73
  %v342 = vunpack.c.l.b16 %v74
  %v343 = vunpack.c.l.b16 %v75
  %v344 = vunpack.c.l.b16 %v76
  %v345 = vunpack.c.l.b16 %v77
  %v346 = vunpack.c.l.b16 %v78
  %v347 = vunpack.c.l.b16 %v79
  %v348 = vunpack.c.l.b16 %v80
  %v349 = vunpack.c.l.b16 %v81
  %v350 = vunpack.c.l.b16 %v82
  %v351 = vunpack.c.l.b16 %v83
  %v352 = vunpack.c.l.b16 %v84
  %v353 = vunpack.c.l.b16 %v85
  %v354 = vunpack.c.l.b16 %v86
  %v355 = vunpack.c.l.b16 %v87
  %v356 = vunpack.c.l.b16 %v88
  %v357 = vunpack.c.l.b16 %v89
  %v358 = vunpack.c.l.b16 %v90
  %v359 = vunpack.c.l.b16 %v91
  %v360 = vunpack.c.l.b16 %v92
  %v361 = vunpack.c.l.b16 %v93
  %v362 = vunpack.c.l.b16 %v94
  %v363 = vunpack.c.l.b16 %v95
  %v364 = vunpack.c.l.b16 %v96
  %v365 = vunpack.c.l.b16 %v97
  %v366 = vunpack.c.l.b16 %v98
  %v367 = vunpack.c.l.b16 %v99
  %v368 = vunpack.c.l.b16 %v100
  %v369 = vunpack.c.l.b16 %v101
  %v370 = vunpack.c.l.b16 %v102
  %v371 = vunpack.c.l.b16 %v103
  %v372 = vunpack.c.l.b16 %v104
  %v373 = vunpack.c.l.b16 %v105
  %v374 = vunpack.c.l.b16 %v106
  %v375 = vunpack.c.l.b16 %v107
  %v376 = vunpack.c.l.b16 %v108
  %v377 = vunpack.c.l.b16 %v109
  %v378 = vunpack.c.l.b16 %v110
  %v379 = vunpack.c.l.b16 %v111
  %v380 = vunpack.c.l.b16 %v112
  %v381 = vunpack.c.l.b16 %v113
  %v382 = vpack.c.b16 %v311, %v310
  %v383 = vpack.c.b16 %v313, %v312
  %v384 = vpack.c.b16 %v315, %v314
  %v385 = vpack.c.b16 %v317, %v316
  %v386 = vpack.c.b16 %v319, %v318
  %v387 = vpack.c.b16 %v321, %v320
  %v388 = vpack.c.b16 %v323, %v322
  %v389 = vpack.c.b16 %v325, %v324
  %v390 = vpack.c.b16 %v327, %v326
  %v391 = vpack.c.b16 %v329, %v328
  %v392 = vpack.c.b16 %v331, %v330
  %v393 = vpack.c.b16 %v333, %v332
  %v394 = vpack.c.b16 %v335, %v334
  %v395 = vpack.c.b16 %v337, %v336
  %v396 = vpack.c.b16 %v339, %v338
  %v397 = vpack.c.b16 %v341, %v340
  %v398 = vpack.c.b16 %v343, %v342
  %v399 = vpack.c.b16 %v345, %v344
  %v400 = vpack.c.b16 %v347, %v346
  %v401 = vpack.c.b16 %v349, %v348
  %v402 = vpack.c.b16 %v351, %v350
  %v403 = vpack.c.b16 %v353, %v352
  %v404 = vpack.c.b16 %v355, %v354
  %v405 = vpack.c.b16 %v357, %v356
  %v406 = vpack.c.b16 %v359, %v358
  %v407 = vpack.c.b16 %v361, %v360
  %v408 = vpack.c.b16 %v363, %v362
  %v409 = vpack.c.b16 %v365, %v364
  %v410 = vpack.c.b16 %v367, %v366
  %v411 = vpack.c.b16 %v369, %v368
  %v412 = vpack.c.b16 %v371, %v370
  %v413 = vpack.c.b16 %v373, %v372
  %v414 = vpack.c.b16 %v375, %v374
  %v415 = vpack.c.b16 %v377, %v376
  %v416 = vpack.c.b16 %v379, %v378
  %v417 = vpack.c.b16 %v381, %v380
  %vm454 = vcmask 523264
  %v456 = vsel %vm454, %v197, 0
  %v459 = vsel %vm454, %v202, 0
  %v462 = vsel %vm454, %v207, 0
  %v465 = vsel %vm454, %v212, 0
  %v468 = vsel %vm454, %v217, 0
  %470 = vmatprep.subr.bf16.mxu0 0
  %471 = vmatpush1.bf16.msra.mxu0 %v382
  %472 = vmatprep.subr.bf16.mxu0 0
  %473 = vmatpush1.bf16.msra.mxu0 %v383
  %474 = vmatprep.subr.bf16.mxu0 0
  %475 = vmatpush1.bf16.msra.mxu0 %v384
  %476 = vmatprep.subr.bf16.mxu0 0
  %477 = vmatpush1.bf16.msra.mxu0 %v385
  %478 = vmatprep.subr.bf16.mxu0 0
  %479 = vmatpush1.bf16.msra.mxu0 %v386
  %480 = vmatprep.subr.bf16.mxu0 0
  %481 = vmatpush1.bf16.msra.mxu0 %v387
  %482 = vmatprep.subr.bf16.mxu0 0
  %483 = vmatpush1.bf16.msra.mxu0 %v388
  %484 = vmatprep.subr.bf16.mxu0 0
  %485 = vmatpush1.bf16.msra.mxu0 %v389
  %486 = vmatprep.subr.bf16.mxu0 0
  %487 = vmatpush1.bf16.msra.mxu0 %v390
  %488 = vmatprep.subr.bf16.mxu0 0
  %489 = vmatpush1.bf16.msra.mxu0 %v391
  %490 = vmatprep.subr.bf16.mxu0 0
  %491 = vmatpush1.bf16.msra.mxu0 %v392
  %492 = vmatprep.subr.bf16.mxu0 0
  %493 = vmatpush1.bf16.msra.mxu0 %v393
  %494 = vmatprep.subr.bf16.mxu0 0
  %495 = vmatpush1.bf16.msra.mxu0 %v394
  %496 = vmatprep.subr.bf16.mxu0 0
  %497 = vmatpush1.bf16.msra.mxu0 %v395
  %498 = vmatprep.subr.bf16.mxu0 0
  %499 = vmatpush1.bf16.msra.mxu0 %v396
  %500 = vmatprep.subr.bf16.mxu0 0
  %501 = vmatpush1.bf16.msra.mxu0 %v397
  %502 = vmatprep.mubr.bf16.mxu0 %v194
  %503 = vmatmul.mubr.bf16.gmra.mrb[0].mxu0 %v193
  %v504 = vpop.f32.mrb[0].mxu0
  %v505 = vadd.f32 %v119, %v504
  %v506 = vpop.f32.mrb[0].mxu0
  %v507 = vpop.f32.mrb[0].mxu0
  %v508 = vadd.f32 %v119, %v507
  %v509 = vpop.f32.mrb[0].mxu0
  %510 = vmatprep.mubr.bf16.mxu0 %v199
  %511 = vmatmul.mubr.bf16.gmra.mrb[0].mxu0 %v198
  %v512 = vpop.f32.mrb[0].mxu0
  %v513 = vadd.f32 %v119, %v512
  %v514 = vpop.f32.mrb[0].mxu0
  %v515 = vpop.f32.mrb[0].mxu0
  %v516 = vadd.f32 %v119, %v515
  %v517 = vpop.f32.mrb[0].mxu0
  %518 = vmatprep.mubr.bf16.mxu0 %v204
  %519 = vmatmul.mubr.bf16.gmra.mrb[0].mxu0 %v203
  %v520 = vpop.f32.mrb[0].mxu0
  %v521 = vadd.f32 %v119, %v520
  %v522 = vpop.f32.mrb[0].mxu0
  %v523 = vpop.f32.mrb[0].mxu0
  %v524 = vadd.f32 %v119, %v523
  %v525 = vpop.f32.mrb[0].mxu0
  %526 = vmatprep.mubr.bf16.mxu0 %v209
  %527 = vmatmul.mubr.bf16.gmra.mrb[0].mxu0 %v208
  %v528 = vpop.f32.mrb[0].mxu0
  %v529 = vadd.f32 %v119, %v528
  %v530 = vpop.f32.mrb[0].mxu0
  %v531 = vpop.f32.mrb[0].mxu0
  %v532 = vadd.f32 %v119, %v531
  %v533 = vpop.f32.mrb[0].mxu0
  %534 = vmatprep.mubr.bf16.mxu0 %v214
  %535 = vmatmul.mubr.bf16.gmra.mrb[0].mxu0 %v213
  %v536 = vpop.f32.mrb[0].mxu0
  %v537 = vadd.f32 %v119, %v536
  %v538 = vpop.f32.mrb[0].mxu0
  %v539 = vpop.f32.mrb[0].mxu0
  %v540 = vpop.f32.mrb[0].mxu0
  %541 = vdwg.mxu0
  %542 = vmatprep.subr.bf16.mxu0 0
  %543 = vmatpush1.bf16.msra.mxu0 %v398
  %544 = vmatprep.subr.bf16.mxu0 0
  %545 = vmatpush1.bf16.msra.mxu0 %v399
  %546 = vmatprep.subr.bf16.mxu0 0
  %547 = vmatpush1.bf16.msra.mxu0 %v400
  %548 = vmatprep.subr.bf16.mxu0 0
  %549 = vmatpush1.bf16.msra.mxu0 %v401
  %550 = vmatprep.subr.bf16.mxu0 0
  %551 = vmatpush1.bf16.msra.mxu0 %v402
  %552 = vmatprep.subr.bf16.mxu0 0
  %553 = vmatpush1.bf16.msra.mxu0 %v403
  %554 = vmatprep.subr.bf16.mxu0 0
  %555 = vmatpush1.bf16.msra.mxu0 %v404
  %556 = vmatprep.subr.bf16.mxu0 0
  %557 = vmatpush1.bf16.msra.mxu0 %v405
  %558 = vmatprep.subr.bf16.mxu0 0
  %559 = vmatpush1.bf16.msra.mxu0 %v406
  %560 = vmatprep.subr.bf16.mxu0 0
  %561 = vmatpush1.bf16.msra.mxu0 %v407
  %562 = vmatprep.subr.bf16.mxu0 0
  %563 = vmatpush1.bf16.msra.mxu0 %v408
  %564 = vmatprep.subr.bf16.mxu0 0
  %565 = vmatpush1.bf16.msra.mxu0 %v409
  %566 = vmatprep.subr.bf16.mxu0 0
  %567 = vmatpush1.bf16.msra.mxu0 %v410
  %568 = vmatprep.subr.bf16.mxu0 0
  %569 = vmatpush1.bf16.msra.mxu0 %v411
  %570 = vmatprep.subr.bf16.mxu0 0
  %571 = vmatpush1.bf16.msra.mxu0 %v412
  %572 = vmatprep.subr.bf16.mxu0 0
  %573 = vmatpush1.bf16.msra.mxu0 %v413
  %574 = vmatprep.mubr.bf16.mxu0 %v196
  %575 = vmatmul.mubr.bf16.gmra.mrb[0].mxu0 %v195
  %v576 = vpop.f32.mrb[0].mxu0
  %v577 = vadd.f32 %v505, %v576
  %v578 = vpop.f32.mrb[0].mxu0
  %v579 = vpop.f32.mrb[0].mxu0
  %v580 = vadd.f32 %v508, %v579
  %v581 = vpop.f32.mrb[0].mxu0
  %582 = vmatprep.mubr.bf16.mxu0 %v201
  %583 = vmatmul.mubr.bf16.gmra.mrb[0].mxu0 %v200
  %v584 = vpop.f32.mrb[0].mxu0
  %v585 = vadd.f32 %v513, %v584
  %v586 = vpop.f32.mrb[0].mxu0
  %v587 = vpop.f32.mrb[0].mxu0
  %v588 = vadd.f32 %v516, %v587
  %v589 = vpop.f32.mrb[0].mxu0
  %590 = vmatprep.mubr.bf16.mxu0 %v206
  %591 = vmatmul.mubr.bf16.gmra.mrb[0].mxu0 %v205
  %v592 = vpop.f32.mrb[0].mxu0
  %v593 = vadd.f32 %v521, %v592
  %v594 = vpop.f32.mrb[0].mxu0
  %v595 = vpop.f32.mrb[0].mxu0
  %v596 = vadd.f32 %v524, %v595
  %v597 = vpop.f32.mrb[0].mxu0
  %598 = vmatprep.mubr.bf16.mxu0 %v211
  %599 = vmatmul.mubr.bf16.gmra.mrb[0].mxu0 %v210
  %v600 = vpop.f32.mrb[0].mxu0
  %v601 = vadd.f32 %v529, %v600
  %v602 = vpop.f32.mrb[0].mxu0
  %v603 = vpop.f32.mrb[0].mxu0
  %v604 = vadd.f32 %v532, %v603
  %v605 = vpop.f32.mrb[0].mxu0
  %606 = vmatprep.mubr.bf16.mxu0 %v216
  %607 = vmatmul.mubr.bf16.gmra.mrb[0].mxu0 %v215
  %v608 = vpop.f32.mrb[0].mxu0
  %v609 = vadd.f32 %v537, %v608
  %v610 = vpop.f32.mrb[0].mxu0
  %v611 = vpop.f32.mrb[0].mxu0
  %v612 = vpop.f32.mrb[0].mxu0
  %613 = vdwg.mxu0
  %614 = vmatprep.subr.bf16.mxu0 0
  %615 = vmatpush1.bf16.msra.mxu0 %v414
  %616 = vmatprep.subr.bf16.mxu0 0
  %617 = vmatpush1.bf16.msra.mxu0 %v415
  %618 = vmatprep.subr.bf16.mxu0 0
  %619 = vmatpush1.bf16.msra.mxu0 %v416
  %620 = vmatprep.subr.bf16.mxu0 0
  %621 = vmatpush1.bf16.msra.mxu0 %v417
  %622 = vmatprep.subr.bf16.mxu0 0
  %623 = vmatpush1.bf16.msra.mxu0 0
  %624 = vmatprep.subr.bf16.mxu0 0
  %625 = vmatpush1.bf16.msra.mxu0 0
  %626 = vmatprep.subr.bf16.mxu0 0
  %627 = vmatpush1.bf16.msra.mxu0 0
  %628 = vmatprep.subr.bf16.mxu0 0
  %629 = vmatpush1.bf16.msra.mxu0 0
  %630 = vmatprep.subr.bf16.mxu0 0
  %631 = vmatpush1.bf16.msra.mxu0 0
  %632 = vmatprep.subr.bf16.mxu0 0
  %633 = vmatpush1.bf16.msra.mxu0 0
  %634 = vmatprep.subr.bf16.mxu0 0
  %635 = vmatpush1.bf16.msra.mxu0 0
  %636 = vmatprep.subr.bf16.mxu0 0
  %637 = vmatpush1.bf16.msra.mxu0 0
  %638 = vmatprep.subr.bf16.mxu0 0
  %639 = vmatpush1.bf16.msra.mxu0 0
  %640 = vmatprep.subr.bf16.mxu0 0
  %641 = vmatpush1.bf16.msra.mxu0 0
  %642 = vmatprep.subr.bf16.mxu0 0
  %643 = vmatpush1.bf16.msra.mxu0 0
  %644 = vmatprep.subr.bf16.mxu0 0
  %645 = vmatpush1.bf16.msra.mxu0 0
  %646 = vmatprep.mubr.bf16.mxu0 0
  %647 = vmatmul.mubr.bf16.gmra.mrb[0].mxu0 %v456
  %v648 = vpop.f32.mrb[0].mxu0
  %v649 = vadd.f32 %v577, %v648
  %v650 = vpop.f32.mrb[0].mxu0
  %v651 = vpop.f32.mrb[0].mxu0
  %v652 = vadd.f32 %v580, %v651
  %v653 = vpop.f32.mrb[0].mxu0
  %654 = vmatprep.mubr.bf16.mxu0 0
  %655 = vmatmul.mubr.bf16.gmra.mrb[0].mxu0 %v459
  %v656 = vpop.f32.mrb[0].mxu0
  %v657 = vadd.f32 %v585, %v656
  %v658 = vpop.f32.mrb[0].mxu0
  %v659 = vpop.f32.mrb[0].mxu0
  %v660 = vadd.f32 %v588, %v659
  %v661 = vpop.f32.mrb[0].mxu0
  %662 = vmatprep.mubr.bf16.mxu0 0
  %663 = vmatmul.mubr.bf16.gmra.mrb[0].mxu0 %v462
  %v664 = vpop.f32.mrb[0].mxu0
  %v665 = vadd.f32 %v593, %v664
  %v666 = vpop.f32.mrb[0].mxu0
  %v667 = vpop.f32.mrb[0].mxu0
  %v668 = vadd.f32 %v596, %v667
  %v669 = vpop.f32.mrb[0].mxu0
  %670 = vmatprep.mubr.bf16.mxu0 0
  %671 = vmatmul.mubr.bf16.gmra.mrb[0].mxu0 %v465
  %v672 = vpop.f32.mrb[0].mxu0
  %v673 = vadd.f32 %v601, %v672
  %v674 = vpop.f32.mrb[0].mxu0
  %v675 = vpop.f32.mrb[0].mxu0
  %v676 = vadd.f32 %v604, %v675
  %v677 = vpop.f32.mrb[0].mxu0
  %678 = vmatprep.mubr.bf16.mxu0 0
  %679 = vmatmul.mubr.bf16.gmra.mrb[0].mxu0 %v468
  %v680 = vpop.f32.mrb[0].mxu0
  %v681 = vadd.f32 %v609, %v680
  %v682 = vpop.f32.mrb[0].mxu0
  %v683 = vpop.f32.mrb[0].mxu0
  %v684 = vpop.f32.mrb[0].mxu0
  %685 = vdwg.mxu0
  %v686 = vmax.f32 %v649, 0.0
  %v687 = vmax.f32 %v652, 0.0
  %v688 = vmax.f32 %v657, 0.0
  %v689 = vmax.f32 %v660, 0.0
  %v690 = vmax.f32 %v665, 0.0
  %v691 = vmax.f32 %v668, 0.0
  %v692 = vmax.f32 %v673, 0.0
  %v693 = vmax.f32 %v676, 0.0
  %v694 = vmax.f32 %v681, 0.0
  %v695 = vpack.c.bf16 %v687, %v686
  %v696 = vpack.c.bf16 %v689, %v688
  %v697 = vpack.c.bf16 %v691, %v690
  %v698 = vpack.c.bf16 %v693, %v692
  %v699 = vpack.c.bf16 %v694, %v694
  %v705 = vunpack.c.l.b16 %v695
  %v706 = vunpack.c.h.b16 %v695
  %v707 = vunpack.c.l.b16 %v696
  %v708 = vunpack.c.h.b16 %v696
  %v709 = vunpack.c.l.b16 %v697
  %v710 = vunpack.c.h.b16 %v697
  %v711 = vunpack.c.l.b16 %v698
  %v712 = vunpack.c.h.b16 %v698
  %v713 = vunpack.c.l.b16 %v699
  %v714 = vpack.c.b16 %v705, %v705
  %v715 = vpack.c.b16 %v706, %v706
  %v716 = vpack.c.b16 %v707, %v707
  %v717 = vpack.c.b16 %v708, %v708
  %v718 = vpack.c.b16 %v709, %v709
  %v719 = vpack.c.b16 %v710, %v710
  %v720 = vpack.c.b16 %v711, %v711
  %v721 = vpack.c.b16 %v712, %v712
  %v722 = vpack.c.b16 %v713, %v713
  %vm732 = vcmask 519168
  %733 = vst.msk [vmem:[%s3] sm:$0xf] %vm732, %v714
  %734 = vst.msk [vmem:[%s3 + $0x4] sm:$0xf] %vm732, %v715
  %735 = vst.msk [vmem:[%s3 + $0x8] sm:$0xf] %vm732, %v716
  %736 = vst.msk [vmem:[%s3 + $0xc] sm:$0xf] %vm732, %v717
  %737 = vst.msk [vmem:[%s3 + $0x10] sm:$0xf] %vm732, %v718
  %738 = vst.msk [vmem:[%s3 + $0x14] sm:$0xf] %vm732, %v719
  %739 = vst.msk [vmem:[%s3 + $0x18] sm:$0xf] %vm732, %v720
  %740 = vst.msk [vmem:[%s3 + $0x1c] sm:$0xf] %vm732, %v721
  %741 = vst.msk [vmem:[%s3 + $0x20] sm:$0xf] %vm732, %v722
  // Predicated region
  $region14: #{cnn_multiaction_forward.6} parent=0 // pred_check
    _
  $region15: #{cnn_multiaction_forward.6} parent=0 // pred_check_branch
    %743 = sbr.rel (0) target = $region17
  $region16: #{cnn_multiaction_forward.6} parent=0 // pred_region
    _
  $region17: #{cnn_multiaction_forward.6} parent=0 // pred_fallthru
    _
  // Predicated region
  $region18: #{cnn_multiaction_forward.6} parent=0 // pred_check
    _
  $region19: #{cnn_multiaction_forward.6} parent=0 // pred_check_branch
    %745 = sbr.rel (0) target = $region21
  $region20: #{cnn_multiaction_forward.6} parent=0 // pred_region
    _
  $region21: #{cnn_multiaction_forward.6} parent=0 // pred_fallthru
    _

// kernel: cnn_multiaction_forward.7
$region0: #{cnn_multiaction_forward.7}
  #allocation0 [shape = 'u32[]', space=smem, size = 0x4, offset = 0x4, fixed_abs, tag = 'smem constant byte address 0x4 - core index']
  #allocation1 [shape = 'u32[144,128]{1,0:T(1,128)}', space=vmem, size = 0x12000, scoped, tag = 'internal scratch']
  %s0 = inlined_call_operand.vmem [shape: bf16[2,2304], index: 0, kind: input, shape index: {}]
  %s1 = inlined_call_operand.vmem [shape: bf16[2304,32], index: 1, kind: input, shape index: {}]
  %s2 = inlined_call_operand.vmem [shape: f32[1,32], index: 2, kind: input, shape index: {}]
  %s3 = inlined_call_operand.vmem [shape: bf16[32,6], index: 3, kind: input, shape index: {}]
  %s4 = inlined_call_operand.vmem [shape: f32[1,6], index: 4, kind: input, shape index: {}]
  %s5 = inlined_call_operand.hbm [shape: f32[2,6], index: 5, kind: output, shape index: {}]
  %s6 = sld [smem:[#allocation0]]
  $region30: #{cnn_multiaction_forward.7} parent=0
    _
  %s8 = ssub.s32 1, %s6
  %s9 = scalar_select 0, %s8, %s6
  $region1: #{cnn_multiaction_forward.7} parent=0
    #allocation2 [shape = 'u8[1024]{0}', space=vmem, size = 0x400, scoped, tag = 'output window, operand 0, single buffered']
    #allocation3 [shape = 's32[1]{0}', space=sflag, size = 0x4, scoped, tag = 'scoped memory for cnn_multiaction_forward.7']
    %10 = vsyncpa [#allocation3], 0
    // Predicated region
    $region2: #{cnn_multiaction_forward.7} parent=1 // pred_check
      _
    $region3: #{cnn_multiaction_forward.7} parent=1 // pred_check_branch
      %12 = sbr.rel (0) target = $region5
    $region4: #{cnn_multiaction_forward.7} parent=1 // pred_region
      _
    $region5: #{cnn_multiaction_forward.7} parent=1 // pred_fallthru
      _
    // Predicated region
    $region6: #{cnn_multiaction_forward.7} parent=1 // pred_check
      _
    $region7: #{cnn_multiaction_forward.7} parent=1 // pred_check_branch
      %14 = sbr.rel (0) target = $region9
    $region8: #{cnn_multiaction_forward.7} parent=1 // pred_region
      _
    $region9: #{cnn_multiaction_forward.7} parent=1 // pred_fallthru
      _
    // Predicated region
    $region10: #{cnn_multiaction_forward.7} parent=1 // pred_check
      _
    $region11: #{cnn_multiaction_forward.7} parent=1 // pred_check_branch
      %16 = sbr.rel (0) target = $region13
    $region12: #{cnn_multiaction_forward.7} parent=1 // pred_region
      _
    $region13: #{cnn_multiaction_forward.7} parent=1 // pred_fallthru
      _
    // Predicated region
    $region14: #{cnn_multiaction_forward.7} parent=1 // pred_check
      _
    $region15: #{cnn_multiaction_forward.7} parent=1 // pred_check_branch
      %18 = sbr.rel (0) target = $region17
    $region16: #{cnn_multiaction_forward.7} parent=1 // pred_region
      _
    $region17: #{cnn_multiaction_forward.7} parent=1 // pred_fallthru
      _
    // Predicated region
    $region18: #{cnn_multiaction_forward.7} parent=1 // pred_check
      _
    $region19: #{cnn_multiaction_forward.7} parent=1 // pred_check_branch
      %20 = sbr.rel (0) target = $region21
    $region20: #{cnn_multiaction_forward.7} parent=1 // pred_region
      _
    $region21: #{cnn_multiaction_forward.7} parent=1 // pred_fallthru
      _
    %v22 = vld [vmem:[%s0] sm:$0xff]
    %v23 = vld [vmem:[%s0 + $0x8] sm:$0xff]
    %v24 = vld [vmem:[%s0 + $0x10] sm:$0x3]
    %v25 = vld [vmem:[%s1] sm:$0xf]
    %v26 = vld [vmem:[%s1 + $0x4] sm:$0xf]
    %v27 = vld [vmem:[%s1 + $0x8] sm:$0xf]
    %v28 = vld [vmem:[%s1 + $0xc] sm:$0xf]
    %v29 = vld [vmem:[%s1 + $0x10] sm:$0xf]
    %v30 = vld [vmem:[%s1 + $0x14] sm:$0xf]
    %v31 = vld [vmem:[%s1 + $0x18] sm:$0xf]
    %v32 = vld [vmem:[%s1 + $0x1c] sm:$0xf]
    %v33 = vld [vmem:[%s1 + $0x20] sm:$0xf]
    %v34 = vld [vmem:[%s1 + $0x24] sm:$0xf]
    %v35 = vld [vmem:[%s1 + $0x28] sm:$0xf]
    %v36 = vld [vmem:[%s1 + $0x2c] sm:$0xf]
    %v37 = vld [vmem:[%s1 + $0x30] sm:$0xf]
    %v38 = vld [vmem:[%s1 + $0x34] sm:$0xf]
    %v39 = vld [vmem:[%s1 + $0x38] sm:$0xf]
    %v40 = vld [vmem:[%s1 + $0x3c] sm:$0xf]
    %v41 = vld [vmem:[%s1 + $0x40] sm:$0xf]
    %v42 = vld [vmem:[%s1 + $0x44] sm:$0xf]
    %v43 = vld [vmem:[%s1 + $0x48] sm:$0xf]
    %v44 = vld [vmem:[%s1 + $0x4c] sm:$0xf]
    %v45 = vld [vmem:[%s1 + $0x50] sm:$0xf]
    %v46 = vld [vmem:[%s1 + $0x54] sm:$0xf]
    %v47 = vld [vmem:[%s1 + $0x58] sm:$0xf]
    %v48 = vld [vmem:[%s1 + $0x5c] sm:$0xf]
    %v49 = vld [vmem:[%s1 + $0x60] sm:$0xf]
    %v50 = vld [vmem:[%s1 + $0x64] sm:$0xf]
    %v51 = vld [vmem:[%s1 + $0x68] sm:$0xf]
    %v52 = vld [vmem:[%s1 + $0x6c] sm:$0xf]
    %v53 = vld [vmem:[%s1 + $0x70] sm:$0xf]
    %v54 = vld [vmem:[%s1 + $0x74] sm:$0xf]
    %v55 = vld [vmem:[%s1 + $0x78] sm:$0xf]
    %v56 = vld [vmem:[%s1 + $0x7c] sm:$0xf]
    %v57 = vld [vmem:[%s1 + $0x80] sm:$0xf]
    %v58 = vld [vmem:[%s1 + $0x84] sm:$0xf]
    %v59 = vld [vmem:[%s1 + $0x88] sm:$0xf]
    %v60 = vld [vmem:[%s1 + $0x8c] sm:$0xf]
    %v61 = vld [vmem:[%s1 + $0x90] sm:$0xf]
    %v62 = vld [vmem:[%s1 + $0x94] sm:$0xf]
    %v63 = vld [vmem:[%s1 + $0x98] sm:$0xf]
    %v64 = vld [vmem:[%s1 + $0x9c] sm:$0xf]
    %v65 = vld [vmem:[%s1 + $0xa0] sm:$0xf]
    %v66 = vld [vmem:[%s1 + $0xa4] sm:$0xf]
    %v67 = vld [vmem:[%s1 + $0xa8] sm:$0xf]
    %v68 = vld [vmem:[%s1 + $0xac] sm:$0xf]
    %v69 = vld [vmem:[%s1 + $0xb0] sm:$0xf]
    %v70 = vld [vmem:[%s1 + $0xb4] sm:$0xf]
    %v71 = vld [vmem:[%s1 + $0xb8] sm:$0xf]
    %v72 = vld [vmem:[%s1 + $0xbc] sm:$0xf]
    %v73 = vld [vmem:[%s1 + $0xc0] sm:$0xf]
    %v74 = vld [vmem:[%s1 + $0xc4] sm:$0xf]
    %v75 = vld [vmem:[%s1 + $0xc8] sm:$0xf]
    %v76 = vld [vmem:[%s1 + $0xcc] sm:$0xf]
    %v77 = vld [vmem:[%s1 + $0xd0] sm:$0xf]
    %v78 = vld [vmem:[%s1 + $0xd4] sm:$0xf]
    %v79 = vld [vmem:[%s1 + $0xd8] sm:$0xf]
    %v80 = vld [vmem:[%s1 + $0xdc] sm:$0xf]
    %v81 = vld [vmem:[%s1 + $0xe0] sm:$0xf]
    %v82 = vld [vmem:[%s1 + $0xe4] sm:$0xf]
    %v83 = vld [vmem:[%s1 + $0xe8] sm:$0xf]
    %v84 = vld [vmem:[%s1 + $0xec] sm:$0xf]
    %v85 = vld [vmem:[%s1 + $0xf0] sm:$0xf]
    %v86 = vld [vmem:[%s1 + $0xf4] sm:$0xf]
    %v87 = vld [vmem:[%s1 + $0xf8] sm:$0xf]
    %v88 = vld [vmem:[%s1 + $0xfc] sm:$0xf]
    %v89 = vld [vmem:[%s1 + $0x100] sm:$0xf]
    %v90 = vld [vmem:[%s1 + $0x104] sm:$0xf]
    %v91 = vld [vmem:[%s1 + $0x108] sm:$0xf]
    %v92 = vld [vmem:[%s1 + $0x10c] sm:$0xf]
    %v93 = vld [vmem:[%s1 + $0x110] sm:$0xf]
    %v94 = vld [vmem:[%s1 + $0x114] sm:$0xf]
    %v95 = vld [vmem:[%s1 + $0x118] sm:$0xf]
    %v96 = vld [vmem:[%s1 + $0x11c] sm:$0xf]
    %v97 = vld [vmem:[%s1 + $0x120] sm:$0xf]
    %v98 = vld [vmem:[%s1 + $0x124] sm:$0xf]
    %v99 = vld [vmem:[%s1 + $0x128] sm:$0xf]
    %v100 = vld [vmem:[%s1 + $0x12c] sm:$0xf]
    %v101 = vld [vmem:[%s1 + $0x130] sm:$0xf]
    %v102 = vld [vmem:[%s1 + $0x134] sm:$0xf]
    %v103 = vld [vmem:[%s1 + $0x138] sm:$0xf]
    %v104 = vld [vmem:[%s1 + $0x13c] sm:$0xf]
    %v105 = vld [vmem:[%s1 + $0x140] sm:$0xf]
    %v106 = vld [vmem:[%s1 + $0x144] sm:$0xf]
    %v107 = vld [vmem:[%s1 + $0x148] sm:$0xf]
    %v108 = vld [vmem:[%s1 + $0x14c] sm:$0xf]
    %v109 = vld [vmem:[%s1 + $0x150] sm:$0xf]
    %v110 = vld [vmem:[%s1 + $0x154] sm:$0xf]
    %v111 = vld [vmem:[%s1 + $0x158] sm:$0xf]
    %v112 = vld [vmem:[%s1 + $0x15c] sm:$0xf]
    %v113 = vld [vmem:[%s1 + $0x160] sm:$0xf]
    %v114 = vld [vmem:[%s1 + $0x164] sm:$0xf]
    %v115 = vld [vmem:[%s1 + $0x168] sm:$0xf]
    %v116 = vld [vmem:[%s1 + $0x16c] sm:$0xf]
    %v117 = vld [vmem:[%s1 + $0x170] sm:$0xf]
    %v118 = vld [vmem:[%s1 + $0x174] sm:$0xf]
    %v119 = vld [vmem:[%s1 + $0x178] sm:$0xf]
    %v120 = vld [vmem:[%s1 + $0x17c] sm:$0xf]
    %v121 = vld [vmem:[%s1 + $0x180] sm:$0xf]
    %v122 = vld [vmem:[%s1 + $0x184] sm:$0xf]
    %v123 = vld [vmem:[%s1 + $0x188] sm:$0xf]
    %v124 = vld [vmem:[%s1 + $0x18c] sm:$0xf]
    %v125 = vld [vmem:[%s1 + $0x190] sm:$0xf]
    %v126 = vld [vmem:[%s1 + $0x194] sm:$0xf]
    %v127 = vld [vmem:[%s1 + $0x198] sm:$0xf]
    %v128 = vld [vmem:[%s1 + $0x19c] sm:$0xf]
    %v129 = vld [vmem:[%s1 + $0x1a0] sm:$0xf]
    %v130 = vld [vmem:[%s1 + $0x1a4] sm:$0xf]
    %v131 = vld [vmem:[%s1 + $0x1a8] sm:$0xf]
    %v132 = vld [vmem:[%s1 + $0x1ac] sm:$0xf]
    %v133 = vld [vmem:[%s1 + $0x1b0] sm:$0xf]
    %v134 = vld [vmem:[%s1 + $0x1b4] sm:$0xf]
    %v135 = vld [vmem:[%s1 + $0x1b8] sm:$0xf]
    %v136 = vld [vmem:[%s1 + $0x1bc] sm:$0xf]
    %v137 = vld [vmem:[%s1 + $0x1c0] sm:$0xf]
    %v138 = vld [vmem:[%s1 + $0x1c4] sm:$0xf]
    %v139 = vld [vmem:[%s1 + $0x1c8] sm:$0xf]
    %v140 = vld [vmem:[%s1 + $0x1cc] sm:$0xf]
    %v141 = vld [vmem:[%s1 + $0x1d0] sm:$0xf]
    %v142 = vld [vmem:[%s1 + $0x1d4] sm:$0xf]
    %v143 = vld [vmem:[%s1 + $0x1d8] sm:$0xf]
    %v144 = vld [vmem:[%s1 + $0x1dc] sm:$0xf]
    %v145 = vld [vmem:[%s1 + $0x1e0] sm:$0xf]
    %v146 = vld [vmem:[%s1 + $0x1e4] sm:$0xf]
    %v147 = vld [vmem:[%s1 + $0x1e8] sm:$0xf]
    %v148 = vld [vmem:[%s1 + $0x1ec] sm:$0xf]
    %v149 = vld [vmem:[%s1 + $0x1f0] sm:$0xf]
    %v150 = vld [vmem:[%s1 + $0x1f4] sm:$0xf]
    %v151 = vld [vmem:[%s1 + $0x1f8] sm:$0xf]
    %v152 = vld [vmem:[%s1 + $0x1fc] sm:$0xf]
    %v153 = vld [vmem:[%s1 + $0x200] sm:$0xf]
    %v154 = vld [vmem:[%s1 + $0x204] sm:$0xf]
    %v155 = vld [vmem:[%s1 + $0x208] sm:$0xf]
    %v156 = vld [vmem:[%s1 + $0x20c] sm:$0xf]
    %v157 = vld [vmem:[%s1 + $0x210] sm:$0xf]
    %v158 = vld [vmem:[%s1 + $0x214] sm:$0xf]
    %v159 = vld [vmem:[%s1 + $0x218] sm:$0xf]
    %v160 = vld [vmem:[%s1 + $0x21c] sm:$0xf]
    %v161 = vld [vmem:[%s1 + $0x220] sm:$0xf]
    %v162 = vld [vmem:[%s1 + $0x224] sm:$0xf]
    %v163 = vld [vmem:[%s1 + $0x228] sm:$0xf]
    %v164 = vld [vmem:[%s1 + $0x22c] sm:$0xf]
    %v165 = vld [vmem:[%s1 + $0x230] sm:$0xf]
    %v166 = vld [vmem:[%s1 + $0x234] sm:$0xf]
    %v167 = vld [vmem:[%s1 + $0x238] sm:$0xf]
    %v168 = vld [vmem:[%s1 + $0x23c] sm:$0xf]
    %v169 = vld [vmem:[%s1 + $0x240] sm:$0xf]
    %v170 = vld [vmem:[%s1 + $0x244] sm:$0xf]
    %v171 = vld [vmem:[%s1 + $0x248] sm:$0xf]
    %v172 = vld [vmem:[%s1 + $0x24c] sm:$0xf]
    %v173 = vld [vmem:[%s1 + $0x250] sm:$0xf]
    %v174 = vld [vmem:[%s1 + $0x254] sm:$0xf]
    %v175 = vld [vmem:[%s1 + $0x258] sm:$0xf]
    %v176 = vld [vmem:[%s1 + $0x25c] sm:$0xf]
    %v177 = vld [vmem:[%s1 + $0x260] sm:$0xf]
    %v178 = vld [vmem:[%s1 + $0x264] sm:$0xf]
    %v179 = vld [vmem:[%s1 + $0x268] sm:$0xf]
    %v180 = vld [vmem:[%s1 + $0x26c] sm:$0xf]
    %v181 = vld [vmem:[%s1 + $0x270] sm:$0xf]
    %v182 = vld [vmem:[%s1 + $0x274] sm:$0xf]
    %v183 = vld [vmem:[%s1 + $0x278] sm:$0xf]
    %v184 = vld [vmem:[%s1 + $0x27c] sm:$0xf]
    %v185 = vld [vmem:[%s1 + $0x280] sm:$0xf]
    %v186 = vld [vmem:[%s1 + $0x284] sm:$0xf]
    %v187 = vld [vmem:[%s1 + $0x288] sm:$0xf]
    %v188 = vld [vmem:[%s1 + $0x28c] sm:$0xf]
    %v189 = vld [vmem:[%s1 + $0x290] sm:$0xf]
    %v190 = vld [vmem:[%s1 + $0x294] sm:$0xf]
    %v191 = vld [vmem:[%s1 + $0x298] sm:$0xf]
    %v192 = vld [vmem:[%s1 + $0x29c] sm:$0xf]
    %v193 = vld [vmem:[%s1 + $0x2a0] sm:$0xf]
    %v194 = vld [vmem:[%s1 + $0x2a4] sm:$0xf]
    %v195 = vld [vmem:[%s1 + $0x2a8] sm:$0xf]
    %v196 = vld [vmem:[%s1 + $0x2ac] sm:$0xf]
    %v197 = vld [vmem:[%s1 + $0x2b0] sm:$0xf]
    %v198 = vld [vmem:[%s1 + $0x2b4] sm:$0xf]
    %v199 = vld [vmem:[%s1 + $0x2b8] sm:$0xf]
    %v200 = vld [vmem:[%s1 + $0x2bc] sm:$0xf]
    %v201 = vld [vmem:[%s1 + $0x2c0] sm:$0xf]
    %v202 = vld [vmem:[%s1 + $0x2c4] sm:$0xf]
    %v203 = vld [vmem:[%s1 + $0x2c8] sm:$0xf]
    %v204 = vld [vmem:[%s1 + $0x2cc] sm:$0xf]
    %v205 = vld [vmem:[%s1 + $0x2d0] sm:$0xf]
    %v206 = vld [vmem:[%s1 + $0x2d4] sm:$0xf]
    %v207 = vld [vmem:[%s1 + $0x2d8] sm:$0xf]
    %v208 = vld [vmem:[%s1 + $0x2dc] sm:$0xf]
    %v209 = vld [vmem:[%s1 + $0x2e0] sm:$0xf]
    %v210 = vld [vmem:[%s1 + $0x2e4] sm:$0xf]
    %v211 = vld [vmem:[%s1 + $0x2e8] sm:$0xf]
    %v212 = vld [vmem:[%s1 + $0x2ec] sm:$0xf]
    %v213 = vld [vmem:[%s1 + $0x2f0] sm:$0xf]
    %v214 = vld [vmem:[%s1 + $0x2f4] sm:$0xf]
    %v215 = vld [vmem:[%s1 + $0x2f8] sm:$0xf]
    %v216 = vld [vmem:[%s1 + $0x2fc] sm:$0xf]
    %v217 = vld [vmem:[%s1 + $0x300] sm:$0xf]
    %v218 = vld [vmem:[%s1 + $0x304] sm:$0xf]
    %v219 = vld [vmem:[%s1 + $0x308] sm:$0xf]
    %v220 = vld [vmem:[%s1 + $0x30c] sm:$0xf]
    %v221 = vld [vmem:[%s1 + $0x310] sm:$0xf]
    %v222 = vld [vmem:[%s1 + $0x314] sm:$0xf]
    %v223 = vld [vmem:[%s1 + $0x318] sm:$0xf]
    %v224 = vld [vmem:[%s1 + $0x31c] sm:$0xf]
    %v225 = vld [vmem:[%s1 + $0x320] sm:$0xf]
    %v226 = vld [vmem:[%s1 + $0x324] sm:$0xf]
    %v227 = vld [vmem:[%s1 + $0x328] sm:$0xf]
    %v228 = vld [vmem:[%s1 + $0x32c] sm:$0xf]
    %v229 = vld [vmem:[%s1 + $0x330] sm:$0xf]
    %v230 = vld [vmem:[%s1 + $0x334] sm:$0xf]
    %v231 = vld [vmem:[%s1 + $0x338] sm:$0xf]
    %v232 = vld [vmem:[%s1 + $0x33c] sm:$0xf]
    %v233 = vld [vmem:[%s1 + $0x340] sm:$0xf]
    %v234 = vld [vmem:[%s1 + $0x344] sm:$0xf]
    %v235 = vld [vmem:[%s1 + $0x348] sm:$0xf]
    %v236 = vld [vmem:[%s1 + $0x34c] sm:$0xf]
    %v237 = vld [vmem:[%s1 + $0x350] sm:$0xf]
    %v238 = vld [vmem:[%s1 + $0x354] sm:$0xf]
    %v239 = vld [vmem:[%s1 + $0x358] sm:$0xf]
    %v240 = vld [vmem:[%s1 + $0x35c] sm:$0xf]
    %v241 = vld [vmem:[%s1 + $0x360] sm:$0xf]
    %v242 = vld [vmem:[%s1 + $0x364] sm:$0xf]
    %v243 = vld [vmem:[%s1 + $0x368] sm:$0xf]
    %v244 = vld [vmem:[%s1 + $0x36c] sm:$0xf]
    %v245 = vld [vmem:[%s1 + $0x370] sm:$0xf]
    %v246 = vld [vmem:[%s1 + $0x374] sm:$0xf]
    %v247 = vld [vmem:[%s1 + $0x378] sm:$0xf]
    %v248 = vld [vmem:[%s1 + $0x37c] sm:$0xf]
    %v249 = vld [vmem:[%s1 + $0x380] sm:$0xf]
    %v250 = vld [vmem:[%s1 + $0x384] sm:$0xf]
    %v251 = vld [vmem:[%s1 + $0x388] sm:$0xf]
    %v252 = vld [vmem:[%s1 + $0x38c] sm:$0xf]
    %v253 = vld [vmem:[%s1 + $0x390] sm:$0xf]
    %v254 = vld [vmem:[%s1 + $0x394] sm:$0xf]
    %v255 = vld [vmem:[%s1 + $0x398] sm:$0xf]
    %v256 = vld [vmem:[%s1 + $0x39c] sm:$0xf]
    %v257 = vld [vmem:[%s1 + $0x3a0] sm:$0xf]
    %v258 = vld [vmem:[%s1 + $0x3a4] sm:$0xf]
    %v259 = vld [vmem:[%s1 + $0x3a8] sm:$0xf]
    %v260 = vld [vmem:[%s1 + $0x3ac] sm:$0xf]
    %v261 = vld [vmem:[%s1 + $0x3b0] sm:$0xf]
    %v262 = vld [vmem:[%s1 + $0x3b4] sm:$0xf]
    %v263 = vld [vmem:[%s1 + $0x3b8] sm:$0xf]
    %v264 = vld [vmem:[%s1 + $0x3bc] sm:$0xf]
    %v265 = vld [vmem:[%s1 + $0x3c0] sm:$0xf]
    %v266 = vld [vmem:[%s1 + $0x3c4] sm:$0xf]
    %v267 = vld [vmem:[%s1 + $0x3c8] sm:$0xf]
    %v268 = vld [vmem:[%s1 + $0x3cc] sm:$0xf]
    %v269 = vld [vmem:[%s1 + $0x3d0] sm:$0xf]
    %v270 = vld [vmem:[%s1 + $0x3d4] sm:$0xf]
    %v271 = vld [vmem:[%s1 + $0x3d8] sm:$0xf]
    %v272 = vld [vmem:[%s1 + $0x3dc] sm:$0xf]
    %v273 = vld [vmem:[%s1 + $0x3e0] sm:$0xf]
    %v274 = vld [vmem:[%s1 + $0x3e4] sm:$0xf]
    %v275 = vld [vmem:[%s1 + $0x3e8] sm:$0xf]
    %v276 = vld [vmem:[%s1 + $0x3ec] sm:$0xf]
    %v277 = vld [vmem:[%s1 + $0x3f0] sm:$0xf]
    %v278 = vld [vmem:[%s1 + $0x3f4] sm:$0xf]
    %v279 = vld [vmem:[%s1 + $0x3f8] sm:$0xf]
    %v280 = vld [vmem:[%s1 + $0x3fc] sm:$0xf]
    %v281 = vld [vmem:[%s1 + $0x400] sm:$0xf]
    %v282 = vld [vmem:[%s1 + $0x404] sm:$0xf]
    %v283 = vld [vmem:[%s1 + $0x408] sm:$0xf]
    %v284 = vld [vmem:[%s1 + $0x40c] sm:$0xf]
    %v285 = vld [vmem:[%s1 + $0x410] sm:$0xf]
    %v286 = vld [vmem:[%s1 + $0x414] sm:$0xf]
    %v287 = vld [vmem:[%s1 + $0x418] sm:$0xf]
    %v288 = vld [vmem:[%s1 + $0x41c] sm:$0xf]
    %v289 = vld [vmem:[%s1 + $0x420] sm:$0xf]
    %v290 = vld [vmem:[%s1 + $0x424] sm:$0xf]
    %v291 = vld [vmem:[%s1 + $0x428] sm:$0xf]
    %v292 = vld [vmem:[%s1 + $0x42c] sm:$0xf]
    %v293 = vld [vmem:[%s1 + $0x430] sm:$0xf]
    %v294 = vld [vmem:[%s1 + $0x434] sm:$0xf]
    %v295 = vld [vmem:[%s1 + $0x438] sm:$0xf]
    %v296 = vld [vmem:[%s1 + $0x43c] sm:$0xf]
    %v297 = vld [vmem:[%s1 + $0x440] sm:$0xf]
    %v298 = vld [vmem:[%s1 + $0x444] sm:$0xf]
    %v299 = vld [vmem:[%s1 + $0x448] sm:$0xf]
    %v300 = vld [vmem:[%s1 + $0x44c] sm:$0xf]
    %v301 = vld [vmem:[%s1 + $0x450] sm:$0xf]
    %v302 = vld [vmem:[%s1 + $0x454] sm:$0xf]
    %v303 = vld [vmem:[%s1 + $0x458] sm:$0xf]
    %v304 = vld [vmem:[%s1 + $0x45c] sm:$0xf]
    %v305 = vld [vmem:[%s1 + $0x460] sm:$0xf]
    %v306 = vld [vmem:[%s1 + $0x464] sm:$0xf]
    %v307 = vld [vmem:[%s1 + $0x468] sm:$0xf]
    %v308 = vld [vmem:[%s1 + $0x46c] sm:$0xf]
    %v309 = vld [vmem:[%s1 + $0x470] sm:$0xf]
    %v310 = vld [vmem:[%s1 + $0x474] sm:$0xf]
    %v311 = vld [vmem:[%s1 + $0x478] sm:$0xf]
    %v312 = vld [vmem:[%s1 + $0x47c] sm:$0xf]
    %v313 = vld [vmem:[%s2] sm:$0x1]
    %v315 = vlaneseq
    %v316 = vshrl.u32 %v315, 7
    %v317 = vsub.s32 0, %v316
    %v318 = vrot.slane %v313, %v317
    %v323 = vcombine.high %v22, %v22
    %v325 = vunpack.c.l.s4 1966171168
    %v326 = vunpack.c.0.s8 %v325
    %v327 = vlaneseq
    %v328 = vshrl.u32 %v327, 7
    %v329 = vsub.s32 %v326, %v328
    %v330 = vrot.slane %v22, %v329
    %v332 = vunpack.c.l.s4 1966171168
    %v333 = vunpack.c.0.s8 %v332
    %v334 = vlaneseq
    %v335 = vshrl.u32 %v334, 7
    %v336 = vsub.s32 %v333, %v335
    %v337 = vrot.slane %v323, %v336
    %v338 = vcombine.high %v330, %v330
    %v339 = vcombine.high %v337, %v337
    %v341 = vunpack.c.l.s4 1966171168
    %v342 = vunpack.c.0.s8 %v341
    %v343 = vlaneseq
    %v344 = vshrl.u32 %v343, 7
    %v345 = vsub.s32 %v342, %v344
    %v346 = vrot.slane %v330, %v345
    %v348 = vunpack.c.l.s4 1966171168
    %v349 = vunpack.c.0.s8 %v348
    %v350 = vlaneseq
    %v351 = vshrl.u32 %v350, 7
    %v352 = vsub.s32 %v349, %v351
    %v353 = vrot.slane %v337, %v352
    %v355 = vunpack.c.l.s4 1966171168
    %v356 = vunpack.c.0.s8 %v355
    %v357 = vlaneseq
    %v358 = vshrl.u32 %v357, 7
    %v359 = vsub.s32 %v356, %v358
    %v360 = vrot.slane %v338, %v359
    %v362 = vunpack.c.l.s4 1966171168
    %v363 = vunpack.c.0.s8 %v362
    %v364 = vlaneseq
    %v365 = vshrl.u32 %v364, 7
    %v366 = vsub.s32 %v363, %v365
    %v367 = vrot.slane %v339, %v366
    %v368 = vcombine.high %v346, %v346
    %v369 = vcombine.high %v353, %v353
    %v370 = vcombine.high %v360, %v360
    %v371 = vcombine.high %v367, %v367
    %v372 = vcombine.high %v23, %v23
    %v374 = vunpack.c.l.s4 1966171168
    %v375 = vunpack.c.0.s8 %v374
    %v376 = vlaneseq
    %v377 = vshrl.u32 %v376, 7
    %v378 = vsub.s32 %v375, %v377
    %v379 = vrot.slane %v23, %v378
    %v381 = vunpack.c.l.s4 1966171168
    %v382 = vunpack.c.0.s8 %v381
    %v383 = vlaneseq
    %v384 = vshrl.u32 %v383, 7
    %v385 = vsub.s32 %v382, %v384
    %v386 = vrot.slane %v372, %v385
    %v387 = vcombine.high %v379, %v379
    %v388 = vcombine.high %v386, %v386
    %v390 = vunpack.c.l.s4 1966171168
    %v391 = vunpack.c.0.s8 %v390
    %v392 = vlaneseq
    %v393 = vshrl.u32 %v392, 7
    %v394 = vsub.s32 %v391, %v393
    %v395 = vrot.slane %v379, %v394
    %v397 = vunpack.c.l.s4 1966171168
    %v398 = vunpack.c.0.s8 %v397
    %v399 = vlaneseq
    %v400 = vshrl.u32 %v399, 7
    %v401 = vsub.s32 %v398, %v400
    %v402 = vrot.slane %v386, %v401
    %v404 = vunpack.c.l.s4 1966171168
    %v405 = vunpack.c.0.s8 %v404
    %v406 = vlaneseq
    %v407 = vshrl.u32 %v406, 7
    %v408 = vsub.s32 %v405, %v407
    %v409 = vrot.slane %v387, %v408
    %v411 = vunpack.c.l.s4 1966171168
    %v412 = vunpack.c.0.s8 %v411
    %v413 = vlaneseq
    %v414 = vshrl.u32 %v413, 7
    %v415 = vsub.s32 %v412, %v414
    %v416 = vrot.slane %v388, %v415
    %v417 = vcombine.high %v395, %v395
    %v418 = vcombine.high %v402, %v402
    %v419 = vcombine.high %v409, %v409
    %v420 = vcombine.high %v416, %v416
    %v422 = vunpack.c.l.s4 1966171168
    %v423 = vunpack.c.0.s8 %v422
    %v424 = vlaneseq
    %v425 = vshrl.u32 %v424, 7
    %v426 = vsub.s32 %v423, %v425
    %v427 = vrot.slane %v24, %v426
    %v428 = vcombine.high %v427, %v427
    %v430 = vunpack.c.l.s4 1966171168
    %v431 = vunpack.c.0.s8 %v430
    %v432 = vlaneseq
    %v433 = vshrl.u32 %v432, 7
    %v434 = vsub.s32 %v431, %v433
    %v435 = vrot.slane %v427, %v434
    %v437 = vunpack.c.l.s4 1966171168
    %v438 = vunpack.c.0.s8 %v437
    %v439 = vlaneseq
    %v440 = vshrl.u32 %v439, 7
    %v441 = vsub.s32 %v438, %v440
    %v442 = vrot.slane %v428, %v441
    %v749 = vunpack.c.l.b16 %v25
    %v750 = vunpack.c.l.b16 %v26
    %v751 = vunpack.c.l.b16 %v27
    %v752 = vunpack.c.l.b16 %v28
    %v753 = vunpack.c.l.b16 %v29
    %v754 = vunpack.c.l.b16 %v30
    %v755 = vunpack.c.l.b16 %v31
    %v756 = vunpack.c.l.b16 %v32
    %v757 = vunpack.c.l.b16 %v33
    %v758 = vunpack.c.l.b16 %v34
    %v759 = vunpack.c.l.b16 %v35
    %v760 = vunpack.c.l.b16 %v36
    %v761 = vunpack.c.l.b16 %v37
    %v762 = vunpack.c.l.b16 %v38
    %v763 = vunpack.c.l.b16 %v39
    %v764 = vunpack.c.l.b16 %v40
    %v765 = vunpack.c.l.b16 %v41
    %v766 = vunpack.c.l.b16 %v42
    %v767 = vunpack.c.l.b16 %v43
    %v768 = vunpack.c.l.b16 %v44
    %v769 = vunpack.c.l.b16 %v45
    %v770 = vunpack.c.l.b16 %v46
    %v771 = vunpack.c.l.b16 %v47
    %v772 = vunpack.c.l.b16 %v48
    %v773 = vunpack.c.l.b16 %v49
    %v774 = vunpack.c.l.b16 %v50
    %v775 = vunpack.c.l.b16 %v51
    %v776 = vunpack.c.l.b16 %v52
    %v777 = vunpack.c.l.b16 %v53
    %v778 = vunpack.c.l.b16 %v54
    %v779 = vunpack.c.l.b16 %v55
    %v780 = vunpack.c.l.b16 %v56
    %v781 = vunpack.c.l.b16 %v57
    %v782 = vunpack.c.l.b16 %v58
    %v783 = vunpack.c.l.b16 %v59
    %v784 = vunpack.c.l.b16 %v60
    %v785 = vunpack.c.l.b16 %v61
    %v786 = vunpack.c.l.b16 %v62
    %v787 = vunpack.c.l.b16 %v63
    %v788 = vunpack.c.l.b16 %v64
    %v789 = vunpack.c.l.b16 %v65
    %v790 = vunpack.c.l.b16 %v66
    %v791 = vunpack.c.l.b16 %v67
    %v792 = vunpack.c.l.b16 %v68
    %v793 = vunpack.c.l.b16 %v69
    %v794 = vunpack.c.l.b16 %v70
    %v795 = vunpack.c.l.b16 %v71
    %v796 = vunpack.c.l.b16 %v72
    %v797 = vunpack.c.l.b16 %v73
    %v798 = vunpack.c.l.b16 %v74
    %v799 = vunpack.c.l.b16 %v75
    %v800 = vunpack.c.l.b16 %v76
    %v801 = vunpack.c.l.b16 %v77
    %v802 = vunpack.c.l.b16 %v78
    %v803 = vunpack.c.l.b16 %v79
    %v804 = vunpack.c.l.b16 %v80
    %v805 = vunpack.c.l.b16 %v81
    %v806 = vunpack.c.l.b16 %v82
    %v807 = vunpack.c.l.b16 %v83
    %v808 = vunpack.c.l.b16 %v84
    %v809 = vunpack.c.l.b16 %v85
    %v810 = vunpack.c.l.b16 %v86
    %v811 = vunpack.c.l.b16 %v87
    %v812 = vunpack.c.l.b16 %v88
    %v813 = vunpack.c.l.b16 %v89
    %v814 = vunpack.c.l.b16 %v90
    %v815 = vunpack.c.l.b16 %v91
    %v816 = vunpack.c.l.b16 %v92
    %v817 = vunpack.c.l.b16 %v93
    %v818 = vunpack.c.l.b16 %v94
    %v819 = vunpack.c.l.b16 %v95
    %v820 = vunpack.c.l.b16 %v96
    %v821 = vunpack.c.l.b16 %v97
    %v822 = vunpack.c.l.b16 %v98
    %v823 = vunpack.c.l.b16 %v99
    %v824 = vunpack.c.l.b16 %v100
    %v825 = vunpack.c.l.b16 %v101
    %v826 = vunpack.c.l.b16 %v102
    %v827 = vunpack.c.l.b16 %v103
    %v828 = vunpack.c.l.b16 %v104
    %v829 = vunpack.c.l.b16 %v105
    %v830 = vunpack.c.l.b16 %v106
    %v831 = vunpack.c.l.b16 %v107
    %v832 = vunpack.c.l.b16 %v108
    %v833 = vunpack.c.l.b16 %v109
    %v834 = vunpack.c.l.b16 %v110
    %v835 = vunpack.c.l.b16 %v111
    %v836 = vunpack.c.l.b16 %v112
    %v837 = vunpack.c.l.b16 %v113
    %v838 = vunpack.c.l.b16 %v114
    %v839 = vunpack.c.l.b16 %v115
    %v840 = vunpack.c.l.b16 %v116
    %v841 = vunpack.c.l.b16 %v117
    %v842 = vunpack.c.l.b16 %v118
    %v843 = vunpack.c.l.b16 %v119
    %v844 = vunpack.c.l.b16 %v120
    %v845 = vunpack.c.l.b16 %v121
    %v846 = vunpack.c.l.b16 %v122
    %v847 = vunpack.c.l.b16 %v123
    %v848 = vunpack.c.l.b16 %v124
    %v849 = vunpack.c.l.b16 %v125
    %v850 = vunpack.c.l.b16 %v126
    %v851 = vunpack.c.l.b16 %v127
    %v852 = vunpack.c.l.b16 %v128
    %v853 = vunpack.c.l.b16 %v129
    %v854 = vunpack.c.l.b16 %v130
    %v855 = vunpack.c.l.b16 %v131
    %v856 = vunpack.c.l.b16 %v132
    %v857 = vunpack.c.l.b16 %v133
    %v858 = vunpack.c.l.b16 %v134
    %v859 = vunpack.c.l.b16 %v135
    %v860 = vunpack.c.l.b16 %v136
    %v861 = vunpack.c.l.b16 %v137
    %v862 = vunpack.c.l.b16 %v138
    %v863 = vunpack.c.l.b16 %v139
    %v864 = vunpack.c.l.b16 %v140
    %v865 = vunpack.c.l.b16 %v141
    %v866 = vunpack.c.l.b16 %v142
    %v867 = vunpack.c.l.b16 %v143
    %v868 = vunpack.c.l.b16 %v144
    %v869 = vunpack.c.l.b16 %v145
    %v870 = vunpack.c.l.b16 %v146
    %v871 = vunpack.c.l.b16 %v147
    %v872 = vunpack.c.l.b16 %v148
    %v873 = vunpack.c.l.b16 %v149
    %v874 = vunpack.c.l.b16 %v150
    %v875 = vunpack.c.l.b16 %v151
    %v876 = vunpack.c.l.b16 %v152
    %v877 = vunpack.c.l.b16 %v153
    %v878 = vunpack.c.l.b16 %v154
    %v879 = vunpack.c.l.b16 %v155
    %v880 = vunpack.c.l.b16 %v156
    %v881 = vunpack.c.l.b16 %v157
    %v882 = vunpack.c.l.b16 %v158
    %v883 = vunpack.c.l.b16 %v159
    %v884 = vunpack.c.l.b16 %v160
    %v885 = vunpack.c.l.b16 %v161
    %v886 = vunpack.c.l.b16 %v162
    %v887 = vunpack.c.l.b16 %v163
    %v888 = vunpack.c.l.b16 %v164
    %v889 = vunpack.c.l.b16 %v165
    %v890 = vunpack.c.l.b16 %v166
    %v891 = vunpack.c.l.b16 %v167
    %v892 = vunpack.c.l.b16 %v168
    %v893 = vunpack.c.l.b16 %v169
    %v894 = vunpack.c.l.b16 %v170
    %v895 = vunpack.c.l.b16 %v171
    %v896 = vunpack.c.l.b16 %v172
    %v897 = vunpack.c.l.b16 %v173
    %v898 = vunpack.c.l.b16 %v174
    %v899 = vunpack.c.l.b16 %v175
    %v900 = vunpack.c.l.b16 %v176
    %v901 = vunpack.c.l.b16 %v177
    %v902 = vunpack.c.l.b16 %v178
    %v903 = vunpack.c.l.b16 %v179
    %v904 = vunpack.c.l.b16 %v180
    %v905 = vunpack.c.l.b16 %v181
    %v906 = vunpack.c.l.b16 %v182
    %v907 = vunpack.c.l.b16 %v183
    %v908 = vunpack.c.l.b16 %v184
    %v909 = vunpack.c.l.b16 %v185
    %v910 = vunpack.c.l.b16 %v186
    %v911 = vunpack.c.l.b16 %v187
    %v912 = vunpack.c.l.b16 %v188
    %v913 = vunpack.c.l.b16 %v189
    %v914 = vunpack.c.l.b16 %v190
    %v915 = vunpack.c.l.b16 %v191
    %v916 = vunpack.c.l.b16 %v192
    %v917 = vunpack.c.l.b16 %v193
    %v918 = vunpack.c.l.b16 %v194
    %v919 = vunpack.c.l.b16 %v195
    %v920 = vunpack.c.l.b16 %v196
    %v921 = vunpack.c.l.b16 %v197
    %v922 = vunpack.c.l.b16 %v198
    %v923 = vunpack.c.l.b16 %v199
    %v924 = vunpack.c.l.b16 %v200
    %v925 = vunpack.c.l.b16 %v201
    %v926 = vunpack.c.l.b16 %v202
    %v927 = vunpack.c.l.b16 %v203
    %v928 = vunpack.c.l.b16 %v204
    %v929 = vunpack.c.l.b16 %v205
    %v930 = vunpack.c.l.b16 %v206
    %v931 = vunpack.c.l.b16 %v207
    %v932 = vunpack.c.l.b16 %v208
    %v933 = vunpack.c.l.b16 %v209
    %v934 = vunpack.c.l.b16 %v210
    %v935 = vunpack.c.l.b16 %v211
    %v936 = vunpack.c.l.b16 %v212
    %v937 = vunpack.c.l.b16 %v213
    %v938 = vunpack.c.l.b16 %v214
    %v939 = vunpack.c.l.b16 %v215
    %v940 = vunpack.c.l.b16 %v216
    %v941 = vunpack.c.l.b16 %v217
    %v942 = vunpack.c.l.b16 %v218
    %v943 = vunpack.c.l.b16 %v219
    %v944 = vunpack.c.l.b16 %v220
    %v945 = vunpack.c.l.b16 %v221
    %v946 = vunpack.c.l.b16 %v222
    %v947 = vunpack.c.l.b16 %v223
    %v948 = vunpack.c.l.b16 %v224
    %v949 = vunpack.c.l.b16 %v225
    %v950 = vunpack.c.l.b16 %v226
    %v951 = vunpack.c.l.b16 %v227
    %v952 = vunpack.c.l.b16 %v228
    %v953 = vunpack.c.l.b16 %v229
    %v954 = vunpack.c.l.b16 %v230
    %v955 = vunpack.c.l.b16 %v231
    %v956 = vunpack.c.l.b16 %v232
    %v957 = vunpack.c.l.b16 %v233
    %v958 = vunpack.c.l.b16 %v234
    %v959 = vunpack.c.l.b16 %v235
    %v960 = vunpack.c.l.b16 %v236
    %v961 = vunpack.c.l.b16 %v237
    %v962 = vunpack.c.l.b16 %v238
    %v963 = vunpack.c.l.b16 %v239
    %v964 = vunpack.c.l.b16 %v240
    %v965 = vunpack.c.l.b16 %v241
    %v966 = vunpack.c.l.b16 %v242
    %v967 = vunpack.c.l.b16 %v243
    %v968 = vunpack.c.l.b16 %v244
    %v969 = vunpack.c.l.b16 %v245
    %v970 = vunpack.c.l.b16 %v246
    %v971 = vunpack.c.l.b16 %v247
    %v972 = vunpack.c.l.b16 %v248
    %v973 = vunpack.c.l.b16 %v249
    %v974 = vunpack.c.l.b16 %v250
    %v975 = vunpack.c.l.b16 %v251
    %v976 = vunpack.c.l.b16 %v252
    %v977 = vunpack.c.l.b16 %v253
    %v978 = vunpack.c.l.b16 %v254
    %v979 = vunpack.c.l.b16 %v255
    %v980 = vunpack.c.l.b16 %v256
    %v981 = vunpack.c.l.b16 %v257
    %v982 = vunpack.c.l.b16 %v258
    %v983 = vunpack.c.l.b16 %v259
    %v984 = vunpack.c.l.b16 %v260
    %v985 = vunpack.c.l.b16 %v261
    %v986 = vunpack.c.l.b16 %v262
    %v987 = vunpack.c.l.b16 %v263
    %v988 = vunpack.c.l.b16 %v264
    %v989 = vunpack.c.l.b16 %v265
    %v990 = vunpack.c.l.b16 %v266
    %v991 = vunpack.c.l.b16 %v267
    %v992 = vunpack.c.l.b16 %v268
    %v993 = vunpack.c.l.b16 %v269
    %v994 = vunpack.c.l.b16 %v270
    %v995 = vunpack.c.l.b16 %v271
    %v996 = vunpack.c.l.b16 %v272
    %v997 = vunpack.c.l.b16 %v273
    %v998 = vunpack.c.l.b16 %v274
    %v999 = vunpack.c.l.b16 %v275
    %v1000 = vunpack.c.l.b16 %v276
    %v1001 = vunpack.c.l.b16 %v277
    %v1002 = vunpack.c.l.b16 %v278
    %v1003 = vunpack.c.l.b16 %v279
    %v1004 = vunpack.c.l.b16 %v280
    %v1005 = vunpack.c.l.b16 %v281
    %v1006 = vunpack.c.l.b16 %v282
    %v1007 = vunpack.c.l.b16 %v283
    %v1008 = vunpack.c.l.b16 %v284
    %v1009 = vunpack.c.l.b16 %v285
    %v1010 = vunpack.c.l.b16 %v286
    %v1011 = vunpack.c.l.b16 %v287
    %v1012 = vunpack.c.l.b16 %v288
    %v1013 = vunpack.c.l.b16 %v289
    %v1014 = vunpack.c.l.b16 %v290
    %v1015 = vunpack.c.l.b16 %v291
    %v1016 = vunpack.c.l.b16 %v292
    %v1017 = vunpack.c.l.b16 %v293
    %v1018 = vunpack.c.l.b16 %v294
    %v1019 = vunpack.c.l.b16 %v295
    %v1020 = vunpack.c.l.b16 %v296
    %v1021 = vunpack.c.l.b16 %v297
    %v1022 = vunpack.c.l.b16 %v298
    %v1023 = vunpack.c.l.b16 %v299
    %v1024 = vunpack.c.l.b16 %v300
    %v1025 = vunpack.c.l.b16 %v301
    %v1026 = vunpack.c.l.b16 %v302
    %v1027 = vunpack.c.l.b16 %v303
    %v1028 = vunpack.c.l.b16 %v304
    %v1029 = vunpack.c.l.b16 %v305
    %v1030 = vunpack.c.l.b16 %v306
    %v1031 = vunpack.c.l.b16 %v307
    %v1032 = vunpack.c.l.b16 %v308
    %v1033 = vunpack.c.l.b16 %v309
    %v1034 = vunpack.c.l.b16 %v310
    %v1035 = vunpack.c.l.b16 %v311
    %v1036 = vunpack.c.l.b16 %v312
    %v1037 = vpack.c.b16 %v750, %v749
    %v1038 = vpack.c.b16 %v752, %v751
    %v1039 = vpack.c.b16 %v754, %v753
    %v1040 = vpack.c.b16 %v756, %v755
    %v1041 = vpack.c.b16 %v758, %v757
    %v1042 = vpack.c.b16 %v760, %v759
    %v1043 = vpack.c.b16 %v762, %v761
    %v1044 = vpack.c.b16 %v764, %v763
    %v1045 = vpack.c.b16 %v766, %v765
    %v1046 = vpack.c.b16 %v768, %v767
    %v1047 = vpack.c.b16 %v770, %v769
    %v1048 = vpack.c.b16 %v772, %v771
    %v1049 = vpack.c.b16 %v774, %v773
    %v1050 = vpack.c.b16 %v776, %v775
    %v1051 = vpack.c.b16 %v778, %v777
    %v1052 = vpack.c.b16 %v780, %v779
    %v1053 = vpack.c.b16 %v782, %v781
    %v1054 = vpack.c.b16 %v784, %v783
    %v1055 = vpack.c.b16 %v786, %v785
    %v1056 = vpack.c.b16 %v788, %v787
    %v1057 = vpack.c.b16 %v790, %v789
    %v1058 = vpack.c.b16 %v792, %v791
    %v1059 = vpack.c.b16 %v794, %v793
    %v1060 = vpack.c.b16 %v796, %v795
    %v1061 = vpack.c.b16 %v798, %v797
    %v1062 = vpack.c.b16 %v800, %v799
    %v1063 = vpack.c.b16 %v802, %v801
    %v1064 = vpack.c.b16 %v804, %v803
    %v1065 = vpack.c.b16 %v806, %v805
    %v1066 = vpack.c.b16 %v808, %v807
    %v1067 = vpack.c.b16 %v810, %v809
    %v1068 = vpack.c.b16 %v812, %v811
    %v1069 = vpack.c.b16 %v814, %v813
    %v1070 = vpack.c.b16 %v816, %v815
    %v1071 = vpack.c.b16 %v818, %v817
    %v1072 = vpack.c.b16 %v820, %v819
    %v1073 = vpack.c.b16 %v822, %v821
    %v1074 = vpack.c.b16 %v824, %v823
    %v1075 = vpack.c.b16 %v826, %v825
    %v1076 = vpack.c.b16 %v828, %v827
    %v1077 = vpack.c.b16 %v830, %v829
    %v1078 = vpack.c.b16 %v832, %v831
    %v1079 = vpack.c.b16 %v834, %v833
    %v1080 = vpack.c.b16 %v836, %v835
    %v1081 = vpack.c.b16 %v838, %v837
    %v1082 = vpack.c.b16 %v840, %v839
    %v1083 = vpack.c.b16 %v842, %v841
    %v1084 = vpack.c.b16 %v844, %v843
    %v1085 = vpack.c.b16 %v846, %v845
    %v1086 = vpack.c.b16 %v848, %v847
    %v1087 = vpack.c.b16 %v850, %v849
    %v1088 = vpack.c.b16 %v852, %v851
    %v1089 = vpack.c.b16 %v854, %v853
    %v1090 = vpack.c.b16 %v856, %v855
    %v1091 = vpack.c.b16 %v858, %v857
    %v1092 = vpack.c.b16 %v860, %v859
    %v1093 = vpack.c.b16 %v862, %v861
    %v1094 = vpack.c.b16 %v864, %v863
    %v1095 = vpack.c.b16 %v866, %v865
    %v1096 = vpack.c.b16 %v868, %v867
    %v1097 = vpack.c.b16 %v870, %v869
    %v1098 = vpack.c.b16 %v872, %v871
    %v1099 = vpack.c.b16 %v874, %v873
    %v1100 = vpack.c.b16 %v876, %v875
    %v1101 = vpack.c.b16 %v878, %v877
    %v1102 = vpack.c.b16 %v880, %v879
    %v1103 = vpack.c.b16 %v882, %v881
    %v1104 = vpack.c.b16 %v884, %v883
    %v1105 = vpack.c.b16 %v886, %v885
    %v1106 = vpack.c.b16 %v888, %v887
    %v1107 = vpack.c.b16 %v890, %v889
    %v1108 = vpack.c.b16 %v892, %v891
    %v1109 = vpack.c.b16 %v894, %v893
    %v1110 = vpack.c.b16 %v896, %v895
    %v1111 = vpack.c.b16 %v898, %v897
    %v1112 = vpack.c.b16 %v900, %v899
    %v1113 = vpack.c.b16 %v902, %v901
    %v1114 = vpack.c.b16 %v904, %v903
    %v1115 = vpack.c.b16 %v906, %v905
    %v1116 = vpack.c.b16 %v908, %v907
    %v1117 = vpack.c.b16 %v910, %v909
    %v1118 = vpack.c.b16 %v912, %v911
    %v1119 = vpack.c.b16 %v914, %v913
    %v1120 = vpack.c.b16 %v916, %v915
    %v1121 = vpack.c.b16 %v918, %v917
    %v1122 = vpack.c.b16 %v920, %v919
    %v1123 = vpack.c.b16 %v922, %v921
    %v1124 = vpack.c.b16 %v924, %v923
    %v1125 = vpack.c.b16 %v926, %v925
    %v1126 = vpack.c.b16 %v928, %v927
    %v1127 = vpack.c.b16 %v930, %v929
    %v1128 = vpack.c.b16 %v932, %v931
    %v1129 = vpack.c.b16 %v934, %v933
    %v1130 = vpack.c.b16 %v936, %v935
    %v1131 = vpack.c.b16 %v938, %v937
    %v1132 = vpack.c.b16 %v940, %v939
    %v1133 = vpack.c.b16 %v942, %v941
    %v1134 = vpack.c.b16 %v944, %v943
    %v1135 = vpack.c.b16 %v946, %v945
    %v1136 = vpack.c.b16 %v948, %v947
    %v1137 = vpack.c.b16 %v950, %v949
    %v1138 = vpack.c.b16 %v952, %v951
    %v1139 = vpack.c.b16 %v954, %v953
    %v1140 = vpack.c.b16 %v956, %v955
    %v1141 = vpack.c.b16 %v958, %v957
    %v1142 = vpack.c.b16 %v960, %v959
    %v1143 = vpack.c.b16 %v962, %v961
    %v1144 = vpack.c.b16 %v964, %v963
    %v1145 = vpack.c.b16 %v966, %v965
    %v1146 = vpack.c.b16 %v968, %v967
    %v1147 = vpack.c.b16 %v970, %v969
    %v1148 = vpack.c.b16 %v972, %v971
    %v1149 = vpack.c.b16 %v974, %v973
    %v1150 = vpack.c.b16 %v976, %v975
    %v1151 = vpack.c.b16 %v978, %v977
    %v1152 = vpack.c.b16 %v980, %v979
    %v1153 = vpack.c.b16 %v982, %v981
    %v1154 = vpack.c.b16 %v984, %v983
    %v1155 = vpack.c.b16 %v986, %v985
    %v1156 = vpack.c.b16 %v988, %v987
    %v1157 = vpack.c.b16 %v990, %v989
    %v1158 = vpack.c.b16 %v992, %v991
    %v1159 = vpack.c.b16 %v994, %v993
    %v1160 = vpack.c.b16 %v996, %v995
    %v1161 = vpack.c.b16 %v998, %v997
    %v1162 = vpack.c.b16 %v1000, %v999
    %v1163 = vpack.c.b16 %v1002, %v1001
    %v1164 = vpack.c.b16 %v1004, %v1003
    %v1165 = vpack.c.b16 %v1006, %v1005
    %v1166 = vpack.c.b16 %v1008, %v1007
    %v1167 = vpack.c.b16 %v1010, %v1009
    %v1168 = vpack.c.b16 %v1012, %v1011
    %v1169 = vpack.c.b16 %v1014, %v1013
    %v1170 = vpack.c.b16 %v1016, %v1015
    %v1171 = vpack.c.b16 %v1018, %v1017
    %v1172 = vpack.c.b16 %v1020, %v1019
    %v1173 = vpack.c.b16 %v1022, %v1021
    %v1174 = vpack.c.b16 %v1024, %v1023
    %v1175 = vpack.c.b16 %v1026, %v1025
    %v1176 = vpack.c.b16 %v1028, %v1027
    %v1177 = vpack.c.b16 %v1030, %v1029
    %v1178 = vpack.c.b16 %v1032, %v1031
    %v1179 = vpack.c.b16 %v1034, %v1033
    %v1180 = vpack.c.b16 %v1036, %v1035
    %1325 = vmatprep.subr.bf16.mxu0 0
    %1326 = vmatpush1.bf16.msra.mxu0 %v1037
    %1327 = vmatprep.subr.bf16.mxu0 0
    %1328 = vmatpush1.bf16.msra.mxu0 %v1038
    %1329 = vmatprep.subr.bf16.mxu0 0
    %1330 = vmatpush1.bf16.msra.mxu0 %v1039
    %1331 = vmatprep.subr.bf16.mxu0 0
    %1332 = vmatpush1.bf16.msra.mxu0 %v1040
    %1333 = vmatprep.subr.bf16.mxu0 0
    %1334 = vmatpush1.bf16.msra.mxu0 %v1041
    %1335 = vmatprep.subr.bf16.mxu0 0
    %1336 = vmatpush1.bf16.msra.mxu0 %v1042
    %1337 = vmatprep.subr.bf16.mxu0 0
    %1338 = vmatpush1.bf16.msra.mxu0 %v1043
    %1339 = vmatprep.subr.bf16.mxu0 0
    %1340 = vmatpush1.bf16.msra.mxu0 %v1044
    %1341 = vmatprep.subr.bf16.mxu0 0
    %1342 = vmatpush1.bf16.msra.mxu0 %v1045
    %1343 = vmatprep.subr.bf16.mxu0 0
    %1344 = vmatpush1.bf16.msra.mxu0 %v1046
    %1345 = vmatprep.subr.bf16.mxu0 0
    %1346 = vmatpush1.bf16.msra.mxu0 %v1047
    %1347 = vmatprep.subr.bf16.mxu0 0
    %1348 = vmatpush1.bf16.msra.mxu0 %v1048
    %1349 = vmatprep.subr.bf16.mxu0 0
    %1350 = vmatpush1.bf16.msra.mxu0 %v1049
    %1351 = vmatprep.subr.bf16.mxu0 0
    %1352 = vmatpush1.bf16.msra.mxu0 %v1050
    %1353 = vmatprep.subr.bf16.mxu0 0
    %1354 = vmatpush1.bf16.msra.mxu0 %v1051
    %1355 = vmatprep.subr.bf16.mxu0 0
    %1356 = vmatpush1.bf16.msra.mxu0 %v1052
    %1357 = vmatprep.mubr.bf16.mxu0 %v360
    %1358 = vmatmul.mubr.bf16.gmra.mrb[0].mxu0 %v346
    %v1359 = vpop.f32.mrb[0].mxu0
    %v1360 = vadd.f32 %v318, %v1359
    %v1361 = vpop.f32.mrb[0].mxu0
    %v1362 = vpop.f32.mrb[0].mxu0
    %v1363 = vpop.f32.mrb[0].mxu0
    %1364 = vdwg.mxu0
    %1365 = vmatprep.subr.bf16.mxu0 0
    %1366 = vmatpush1.bf16.msra.mxu0 %v1053
    %1367 = vmatprep.subr.bf16.mxu0 0
    %1368 = vmatpush1.bf16.msra.mxu0 %v1054
    %1369 = vmatprep.subr.bf16.mxu0 0
    %1370 = vmatpush1.bf16.msra.mxu0 %v1055
    %1371 = vmatprep.subr.bf16.mxu0 0
    %1372 = vmatpush1.bf16.msra.mxu0 %v1056
    %1373 = vmatprep.subr.bf16.mxu0 0
    %1374 = vmatpush1.bf16.msra.mxu0 %v1057
    %1375 = vmatprep.subr.bf16.mxu0 0
    %1376 = vmatpush1.bf16.msra.mxu0 %v1058
    %1377 = vmatprep.subr.bf16.mxu0 0
    %1378 = vmatpush1.bf16.msra.mxu0 %v1059
    %1379 = vmatprep.subr.bf16.mxu0 0
    %1380 = vmatpush1.bf16.msra.mxu0 %v1060
    %1381 = vmatprep.subr.bf16.mxu0 0
    %1382 = vmatpush1.bf16.msra.mxu0 %v1061
    %1383 = vmatprep.subr.bf16.mxu0 0
    %1384 = vmatpush1.bf16.msra.mxu0 %v1062
    %1385 = vmatprep.subr.bf16.mxu0 0
    %1386 = vmatpush1.bf16.msra.mxu0 %v1063
    %1387 = vmatprep.subr.bf16.mxu0 0
    %1388 = vmatpush1.bf16.msra.mxu0 %v1064
    %1389 = vmatprep.subr.bf16.mxu0 0
    %1390 = vmatpush1.bf16.msra.mxu0 %v1065
    %1391 = vmatprep.subr.bf16.mxu0 0
    %1392 = vmatpush1.bf16.msra.mxu0 %v1066
    %1393 = vmatprep.subr.bf16.mxu0 0
    %1394 = vmatpush1.bf16.msra.mxu0 %v1067
    %1395 = vmatprep.subr.bf16.mxu0 0
    %1396 = vmatpush1.bf16.msra.mxu0 %v1068
    %1397 = vmatprep.mubr.bf16.mxu0 %v370
    %1398 = vmatmul.mubr.bf16.gmra.mrb[0].mxu0 %v368
    %v1399 = vpop.f32.mrb[0].mxu0
    %v1400 = vadd.f32 %v1360, %v1399
    %v1401 = vpop.f32.mrb[0].mxu0
    %v1402 = vpop.f32.mrb[0].mxu0
    %v1403 = vpop.f32.mrb[0].mxu0
    %1404 = vdwg.mxu0
    %1405 = vmatprep.subr.bf16.mxu0 0
    %1406 = vmatpush1.bf16.msra.mxu0 %v1069
    %1407 = vmatprep.subr.bf16.mxu0 0
    %1408 = vmatpush1.bf16.msra.mxu0 %v1070
    %1409 = vmatprep.subr.bf16.mxu0 0
    %1410 = vmatpush1.bf16.msra.mxu0 %v1071
    %1411 = vmatprep.subr.bf16.mxu0 0
    %1412 = vmatpush1.bf16.msra.mxu0 %v1072
    %1413 = vmatprep.subr.bf16.mxu0 0
    %1414 = vmatpush1.bf16.msra.mxu0 %v1073
    %1415 = vmatprep.subr.bf16.mxu0 0
    %1416 = vmatpush1.bf16.msra.mxu0 %v1074
    %1417 = vmatprep.subr.bf16.mxu0 0
    %1418 = vmatpush1.bf16.msra.mxu0 %v1075
    %1419 = vmatprep.subr.bf16.mxu0 0
    %1420 = vmatpush1.bf16.msra.mxu0 %v1076
    %1421 = vmatprep.subr.bf16.mxu0 0
    %1422 = vmatpush1.bf16.msra.mxu0 %v1077
    %1423 = vmatprep.subr.bf16.mxu0 0
    %1424 = vmatpush1.bf16.msra.mxu0 %v1078
    %1425 = vmatprep.subr.bf16.mxu0 0
    %1426 = vmatpush1.bf16.msra.mxu0 %v1079
    %1427 = vmatprep.subr.bf16.mxu0 0
    %1428 = vmatpush1.bf16.msra.mxu0 %v1080
    %1429 = vmatprep.subr.bf16.mxu0 0
    %1430 = vmatpush1.bf16.msra.mxu0 %v1081
    %1431 = vmatprep.subr.bf16.mxu0 0
    %1432 = vmatpush1.bf16.msra.mxu0 %v1082
    %1433 = vmatprep.subr.bf16.mxu0 0
    %1434 = vmatpush1.bf16.msra.mxu0 %v1083
    %1435 = vmatprep.subr.bf16.mxu0 0
    %1436 = vmatpush1.bf16.msra.mxu0 %v1084
    %1437 = vmatprep.mubr.bf16.mxu0 %v367
    %1438 = vmatmul.mubr.bf16.gmra.mrb[0].mxu0 %v353
    %v1439 = vpop.f32.mrb[0].mxu0
    %v1440 = vadd.f32 %v1400, %v1439
    %v1441 = vpop.f32.mrb[0].mxu0
    %v1442 = vpop.f32.mrb[0].mxu0
    %v1443 = vpop.f32.mrb[0].mxu0
    %1444 = vdwg.mxu0
    %1445 = vmatprep.subr.bf16.mxu0 0
    %1446 = vmatpush1.bf16.msra.mxu0 %v1085
    %1447 = vmatprep.subr.bf16.mxu0 0
    %1448 = vmatpush1.bf16.msra.mxu0 %v1086
    %1449 = vmatprep.subr.bf16.mxu0 0
    %1450 = vmatpush1.bf16.msra.mxu0 %v1087
    %1451 = vmatprep.subr.bf16.mxu0 0
    %1452 = vmatpush1.bf16.msra.mxu0 %v1088
    %1453 = vmatprep.subr.bf16.mxu0 0
    %1454 = vmatpush1.bf16.msra.mxu0 %v1089
    %1455 = vmatprep.subr.bf16.mxu0 0
    %1456 = vmatpush1.bf16.msra.mxu0 %v1090
    %1457 = vmatprep.subr.bf16.mxu0 0
    %1458 = vmatpush1.bf16.msra.mxu0 %v1091
    %1459 = vmatprep.subr.bf16.mxu0 0
    %1460 = vmatpush1.bf16.msra.mxu0 %v1092
    %1461 = vmatprep.subr.bf16.mxu0 0
    %1462 = vmatpush1.bf16.msra.mxu0 %v1093
    %1463 = vmatprep.subr.bf16.mxu0 0
    %1464 = vmatpush1.bf16.msra.mxu0 %v1094
    %1465 = vmatprep.subr.bf16.mxu0 0
    %1466 = vmatpush1.bf16.msra.mxu0 %v1095
    %1467 = vmatprep.subr.bf16.mxu0 0
    %1468 = vmatpush1.bf16.msra.mxu0 %v1096
    %1469 = vmatprep.subr.bf16.mxu0 0
    %1470 = vmatpush1.bf16.msra.mxu0 %v1097
    %1471 = vmatprep.subr.bf16.mxu0 0
    %1472 = vmatpush1.bf16.msra.mxu0 %v1098
    %1473 = vmatprep.subr.bf16.mxu0 0
    %1474 = vmatpush1.bf16.msra.mxu0 %v1099
    %1475 = vmatprep.subr.bf16.mxu0 0
    %1476 = vmatpush1.bf16.msra.mxu0 %v1100
    %1477 = vmatprep.mubr.bf16.mxu0 %v371
    %1478 = vmatmul.mubr.bf16.gmra.mrb[0].mxu0 %v369
    %v1479 = vpop.f32.mrb[0].mxu0
    %v1480 = vadd.f32 %v1440, %v1479
    %v1481 = vpop.f32.mrb[0].mxu0
    %v1482 = vpop.f32.mrb[0].mxu0
    %v1483 = vpop.f32.mrb[0].mxu0
    %1484 = vdwg.mxu0
    %1485 = vmatprep.subr.bf16.mxu0 0
    %1486 = vmatpush1.bf16.msra.mxu0 %v1101
    %1487 = vmatprep.subr.bf16.mxu0 0
    %1488 = vmatpush1.bf16.msra.mxu0 %v1102
    %1489 = vmatprep.subr.bf16.mxu0 0
    %1490 = vmatpush1.bf16.msra.mxu0 %v1103
    %1491 = vmatprep.subr.bf16.mxu0 0
    %1492 = vmatpush1.bf16.msra.mxu0 %v1104
    %1493 = vmatprep.subr.bf16.mxu0 0
    %1494 = vmatpush1.bf16.msra.mxu0 %v1105
    %1495 = vmatprep.subr.bf16.mxu0 0
    %1496 = vmatpush1.bf16.msra.mxu0 %v1106
    %1497 = vmatprep.subr.bf16.mxu0 0
    %1498 = vmatpush1.bf16.msra.mxu0 %v1107
    %1499 = vmatprep.subr.bf16.mxu0 0
    %1500 = vmatpush1.bf16.msra.mxu0 %v1108
    %1501 = vmatprep.subr.bf16.mxu0 0
    %1502 = vmatpush1.bf16.msra.mxu0 %v1109
    %1503 = vmatprep.subr.bf16.mxu0 0
    %1504 = vmatpush1.bf16.msra.mxu0 %v1110
    %1505 = vmatprep.subr.bf16.mxu0 0
    %1506 = vmatpush1.bf16.msra.mxu0 %v1111
    %1507 = vmatprep.subr.bf16.mxu0 0
    %1508 = vmatpush1.bf16.msra.mxu0 %v1112
    %1509 = vmatprep.subr.bf16.mxu0 0
    %1510 = vmatpush1.bf16.msra.mxu0 %v1113
    %1511 = vmatprep.subr.bf16.mxu0 0
    %1512 = vmatpush1.bf16.msra.mxu0 %v1114
    %1513 = vmatprep.subr.bf16.mxu0 0
    %1514 = vmatpush1.bf16.msra.mxu0 %v1115
    %1515 = vmatprep.subr.bf16.mxu0 0
    %1516 = vmatpush1.bf16.msra.mxu0 %v1116
    %1517 = vmatprep.mubr.bf16.mxu0 %v409
    %1518 = vmatmul.mubr.bf16.gmra.mrb[0].mxu0 %v395
    %v1519 = vpop.f32.mrb[0].mxu0
    %v1520 = vadd.f32 %v1480, %v1519
    %v1521 = vpop.f32.mrb[0].mxu0
    %v1522 = vpop.f32.mrb[0].mxu0
    %v1523 = vpop.f32.mrb[0].mxu0
    %1524 = vdwg.mxu0
    %1525 = vmatprep.subr.bf16.mxu0 0
    %1526 = vmatpush1.bf16.msra.mxu0 %v1117
    %1527 = vmatprep.subr.bf16.mxu0 0
    %1528 = vmatpush1.bf16.msra.mxu0 %v1118
    %1529 = vmatprep.subr.bf16.mxu0 0
    %1530 = vmatpush1.bf16.msra.mxu0 %v1119
    %1531 = vmatprep.subr.bf16.mxu0 0
    %1532 = vmatpush1.bf16.msra.mxu0 %v1120
    %1533 = vmatprep.subr.bf16.mxu0 0
    %1534 = vmatpush1.bf16.msra.mxu0 %v1121
    %1535 = vmatprep.subr.bf16.mxu0 0
    %1536 = vmatpush1.bf16.msra.mxu0 %v1122
    %1537 = vmatprep.subr.bf16.mxu0 0
    %1538 = vmatpush1.bf16.msra.mxu0 %v1123
    %1539 = vmatprep.subr.bf16.mxu0 0
    %1540 = vmatpush1.bf16.msra.mxu0 %v1124
    %1541 = vmatprep.subr.bf16.mxu0 0
    %1542 = vmatpush1.bf16.msra.mxu0 %v1125
    %1543 = vmatprep.subr.bf16.mxu0 0
    %1544 = vmatpush1.bf16.msra.mxu0 %v1126
    %1545 = vmatprep.subr.bf16.mxu0 0
    %1546 = vmatpush1.bf16.msra.mxu0 %v1127
    %1547 = vmatprep.subr.bf16.mxu0 0
    %1548 = vmatpush1.bf16.msra.mxu0 %v1128
    %1549 = vmatprep.subr.bf16.mxu0 0
    %1550 = vmatpush1.bf16.msra.mxu0 %v1129
    %1551 = vmatprep.subr.bf16.mxu0 0
    %1552 = vmatpush1.bf16.msra.mxu0 %v1130
    %1553 = vmatprep.subr.bf16.mxu0 0
    %1554 = vmatpush1.bf16.msra.mxu0 %v1131
    %1555 = vmatprep.subr.bf16.mxu0 0
    %1556 = vmatpush1.bf16.msra.mxu0 %v1132
    %1557 = vmatprep.mubr.bf16.mxu0 %v419
    %1558 = vmatmul.mubr.bf16.gmra.mrb[0].mxu0 %v417
    %v1559 = vpop.f32.mrb[0].mxu0
    %v1560 = vadd.f32 %v1520, %v1559
    %v1561 = vpop.f32.mrb[0].mxu0
    %v1562 = vpop.f32.mrb[0].mxu0
    %v1563 = vpop.f32.mrb[0].mxu0
    %1564 = vdwg.mxu0
    %1565 = vmatprep.subr.bf16.mxu0 0
    %1566 = vmatpush1.bf16.msra.mxu0 %v1133
    %1567 = vmatprep.subr.bf16.mxu0 0
    %1568 = vmatpush1.bf16.msra.mxu0 %v1134
    %1569 = vmatprep.subr.bf16.mxu0 0
    %1570 = vmatpush1.bf16.msra.mxu0 %v1135
    %1571 = vmatprep.subr.bf16.mxu0 0
    %1572 = vmatpush1.bf16.msra.mxu0 %v1136
    %1573 = vmatprep.subr.bf16.mxu0 0
    %1574 = vmatpush1.bf16.msra.mxu0 %v1137
    %1575 = vmatprep.subr.bf16.mxu0 0
    %1576 = vmatpush1.bf16.msra.mxu0 %v1138
    %1577 = vmatprep.subr.bf16.mxu0 0
    %1578 = vmatpush1.bf16.msra.mxu0 %v1139
    %1579 = vmatprep.subr.bf16.mxu0 0
    %1580 = vmatpush1.bf16.msra.mxu0 %v1140
    %1581 = vmatprep.subr.bf16.mxu0 0
    %1582 = vmatpush1.bf16.msra.mxu0 %v1141
    %1583 = vmatprep.subr.bf16.mxu0 0
    %1584 = vmatpush1.bf16.msra.mxu0 %v1142
    %1585 = vmatprep.subr.bf16.mxu0 0
    %1586 = vmatpush1.bf16.msra.mxu0 %v1143
    %1587 = vmatprep.subr.bf16.mxu0 0
    %1588 = vmatpush1.bf16.msra.mxu0 %v1144
    %1589 = vmatprep.subr.bf16.mxu0 0
    %1590 = vmatpush1.bf16.msra.mxu0 %v1145
    %1591 = vmatprep.subr.bf16.mxu0 0
    %1592 = vmatpush1.bf16.msra.mxu0 %v1146
    %1593 = vmatprep.subr.bf16.mxu0 0
    %1594 = vmatpush1.bf16.msra.mxu0 %v1147
    %1595 = vmatprep.subr.bf16.mxu0 0
    %1596 = vmatpush1.bf16.msra.mxu0 %v1148
    %1597 = vmatprep.mubr.bf16.mxu0 %v416
    %1598 = vmatmul.mubr.bf16.gmra.mrb[0].mxu0 %v402
    %v1599 = vpop.f32.mrb[0].mxu0
    %v1600 = vadd.f32 %v1560, %v1599
    %v1601 = vpop.f32.mrb[0].mxu0
    %v1602 = vpop.f32.mrb[0].mxu0
    %v1603 = vpop.f32.mrb[0].mxu0
    %1604 = vdwg.mxu0
    %1605 = vmatprep.subr.bf16.mxu0 0
    %1606 = vmatpush1.bf16.msra.mxu0 %v1149
    %1607 = vmatprep.subr.bf16.mxu0 0
    %1608 = vmatpush1.bf16.msra.mxu0 %v1150
    %1609 = vmatprep.subr.bf16.mxu0 0
    %1610 = vmatpush1.bf16.msra.mxu0 %v1151
    %1611 = vmatprep.subr.bf16.mxu0 0
    %1612 = vmatpush1.bf16.msra.mxu0 %v1152
    %1613 = vmatprep.subr.bf16.mxu0 0
    %1614 = vmatpush1.bf16.msra.mxu0 %v1153
    %1615 = vmatprep.subr.bf16.mxu0 0
    %1616 = vmatpush1.bf16.msra.mxu0 %v1154
    %1617 = vmatprep.subr.bf16.mxu0 0
    %1618 = vmatpush1.bf16.msra.mxu0 %v1155
    %1619 = vmatprep.subr.bf16.mxu0 0
    %1620 = vmatpush1.bf16.msra.mxu0 %v1156
    %1621 = vmatprep.subr.bf16.mxu0 0
    %1622 = vmatpush1.bf16.msra.mxu0 %v1157
    %1623 = vmatprep.subr.bf16.mxu0 0
    %1624 = vmatpush1.bf16.msra.mxu0 %v1158
    %1625 = vmatprep.subr.bf16.mxu0 0
    %1626 = vmatpush1.bf16.msra.mxu0 %v1159
    %1627 = vmatprep.subr.bf16.mxu0 0
    %1628 = vmatpush1.bf16.msra.mxu0 %v1160
    %1629 = vmatprep.subr.bf16.mxu0 0
    %1630 = vmatpush1.bf16.msra.mxu0 %v1161
    %1631 = vmatprep.subr.bf16.mxu0 0
    %1632 = vmatpush1.bf16.msra.mxu0 %v1162
    %1633 = vmatprep.subr.bf16.mxu0 0
    %1634 = vmatpush1.bf16.msra.mxu0 %v1163
    %1635 = vmatprep.subr.bf16.mxu0 0
    %1636 = vmatpush1.bf16.msra.mxu0 %v1164
    %1637 = vmatprep.mubr.bf16.mxu0 %v420
    %1638 = vmatmul.mubr.bf16.gmra.mrb[0].mxu0 %v418
    %v1639 = vpop.f32.mrb[0].mxu0
    %v1640 = vadd.f32 %v1600, %v1639
    %v1641 = vpop.f32.mrb[0].mxu0
    %v1642 = vpop.f32.mrb[0].mxu0
    %v1643 = vpop.f32.mrb[0].mxu0
    %1644 = vdwg.mxu0
    %1645 = vmatprep.subr.bf16.mxu0 0
    %1646 = vmatpush1.bf16.msra.mxu0 %v1165
    %1647 = vmatprep.subr.bf16.mxu0 0
    %1648 = vmatpush1.bf16.msra.mxu0 %v1166
    %1649 = vmatprep.subr.bf16.mxu0 0
    %1650 = vmatpush1.bf16.msra.mxu0 %v1167
    %1651 = vmatprep.subr.bf16.mxu0 0
    %1652 = vmatpush1.bf16.msra.mxu0 %v1168
    %1653 = vmatprep.subr.bf16.mxu0 0
    %1654 = vmatpush1.bf16.msra.mxu0 %v1169
    %1655 = vmatprep.subr.bf16.mxu0 0
    %1656 = vmatpush1.bf16.msra.mxu0 %v1170
    %1657 = vmatprep.subr.bf16.mxu0 0
    %1658 = vmatpush1.bf16.msra.mxu0 %v1171
    %1659 = vmatprep.subr.bf16.mxu0 0
    %1660 = vmatpush1.bf16.msra.mxu0 %v1172
    %1661 = vmatprep.subr.bf16.mxu0 0
    %1662 = vmatpush1.bf16.msra.mxu0 %v1173
    %1663 = vmatprep.subr.bf16.mxu0 0
    %1664 = vmatpush1.bf16.msra.mxu0 %v1174
    %1665 = vmatprep.subr.bf16.mxu0 0
    %1666 = vmatpush1.bf16.msra.mxu0 %v1175
    %1667 = vmatprep.subr.bf16.mxu0 0
    %1668 = vmatpush1.bf16.msra.mxu0 %v1176
    %1669 = vmatprep.subr.bf16.mxu0 0
    %1670 = vmatpush1.bf16.msra.mxu0 %v1177
    %1671 = vmatprep.subr.bf16.mxu0 0
    %1672 = vmatpush1.bf16.msra.mxu0 %v1178
    %1673 = vmatprep.subr.bf16.mxu0 0
    %1674 = vmatpush1.bf16.msra.mxu0 %v1179
    %1675 = vmatprep.subr.bf16.mxu0 0
    %1676 = vmatpush1.bf16.msra.mxu0 %v1180
    %1677 = vmatprep.mubr.bf16.mxu0 %v442
    %1678 = vmatmul.mubr.bf16.gmra.mrb[0].mxu0 %v435
    %v1679 = vpop.f32.mrb[0].mxu0
    %v1680 = vadd.f32 %v1640, %v1679
    %v1681 = vpop.f32.mrb[0].mxu0
    %v1682 = vpop.f32.mrb[0].mxu0
    %v1683 = vpop.f32.mrb[0].mxu0
    %1684 = vdwg.mxu0
    %v1685 = vmax.f32 %v1680, 0.0
    %v1686 = vpack.c.bf16 %v1685, %v1685
    %v1687 = vld [vmem:[%s3] sm:$0xf]
    %v1688 = vld [vmem:[%s3 + $0x4] sm:$0xf]
    %v1689 = vld [vmem:[%s3 + $0x8] sm:$0xf]
    %v1690 = vld [vmem:[%s3 + $0xc] sm:$0xf]
    %v1691 = vld [vmem:[%s4] sm:$0x1]
    %v1693 = vlaneseq
    %v1694 = vshrl.u32 %v1693, 7
    %v1695 = vsub.s32 0, %v1694
    %v1696 = vrot.slane %v1691, %v1695
    %v1702 = vunpack.c.l.b16 %v1687
    %v1703 = vunpack.c.l.b16 %v1688
    %v1704 = vunpack.c.l.b16 %v1689
    %v1705 = vunpack.c.l.b16 %v1690
    %v1706 = vpack.c.b16 %v1703, %v1702
    %v1707 = vpack.c.b16 %v1705, %v1704
    %vm1710 = vcmask 261120
    %v1712 = vsel %vm1710, %v1686, 0
    %1714 = vmatprep.subr.bf16.mxu0 0
    %1715 = vmatpush1.bf16.msra.mxu0 %v1706
    %1716 = vmatprep.subr.bf16.mxu0 0
    %1717 = vmatpush1.bf16.msra.mxu0 %v1707
    %1718 = vmatprep.subr.bf16.mxu0 0
    %1719 = vmatpush1.bf16.msra.mxu0 0
    %1720 = vmatprep.subr.bf16.mxu0 0
    %1721 = vmatpush1.bf16.msra.mxu0 0
    %1722 = vmatprep.subr.bf16.mxu0 0
    %1723 = vmatpush1.bf16.msra.mxu0 0
    %1724 = vmatprep.subr.bf16.mxu0 0
    %1725 = vmatpush1.bf16.msra.mxu0 0
    %1726 = vmatprep.subr.bf16.mxu0 0
    %1727 = vmatpush1.bf16.msra.mxu0 0
    %1728 = vmatprep.subr.bf16.mxu0 0
    %1729 = vmatpush1.bf16.msra.mxu0 0
    %1730 = vmatprep.subr.bf16.mxu0 0
    %1731 = vmatpush1.bf16.msra.mxu0 0
    %1732 = vmatprep.subr.bf16.mxu0 0
    %1733 = vmatpush1.bf16.msra.mxu0 0
    %1734 = vmatprep.subr.bf16.mxu0 0
    %1735 = vmatpush1.bf16.msra.mxu0 0
    %1736 = vmatprep.subr.bf16.mxu0 0
    %1737 = vmatpush1.bf16.msra.mxu0 0
    %1738 = vmatprep.subr.bf16.mxu0 0
    %1739 = vmatpush1.bf16.msra.mxu0 0
    %1740 = vmatprep.subr.bf16.mxu0 0
    %1741 = vmatpush1.bf16.msra.mxu0 0
    %1742 = vmatprep.subr.bf16.mxu0 0
    %1743 = vmatpush1.bf16.msra.mxu0 0
    %1744 = vmatprep.subr.bf16.mxu0 0
    %1745 = vmatpush1.bf16.msra.mxu0 0
    %1746 = vmatprep.mubr.bf16.mxu0 0
    %1747 = vmatmul.mubr.bf16.gmra.mrb[0].mxu0 %v1712
    %v1748 = vpop.f32.mrb[0].mxu0
    %v1749 = vadd.f32 %v1696, %v1748
    %v1750 = vpop.f32.mrb[0].mxu0
    %v1751 = vpop.f32.mrb[0].mxu0
    %v1752 = vpop.f32.mrb[0].mxu0
    %1753 = vdwg.mxu0
    %vm1754 = vcmask 41984
    %v1755 = vsel %vm1754, %v1749, -inf
    %1756 = vmax.xlane.f32.xlu0 %v1755
    %v1757 = vpop.xlane.xlu0 %1756
    %v1758 = vsub.f32 %v1749, %v1757
    %v1759 = vmul.f32 %v1758, 1.442695
    %v1760 = vpow.pop %v1759
    %v1761 = vsel %vm1754, %v1760, 0.0
    %1762 = vadd.xlane.f32.xlu0 %v1761
    %v1763 = vpop.xlane.xlu0 %1762
    %v1764 = vrcp.pop %v1763
    %v1765 = vmul.f32 %v1760, %v1764
    %1766 = vst.msk [vmem:[#allocation2] sm:$0x3] %vm1754, %v1765
    // Predicated region
    $region22: #{cnn_multiaction_forward.7} parent=1 // pred_check
      _
    $region23: #{cnn_multiaction_forward.7} parent=1 // pred_check_branch
      %1768 = sbr.rel (0) target = $region25
    $region24: #{cnn_multiaction_forward.7} parent=1 // pred_region
      %s1770 = ssub.s32 32, 32
      %1771 = vsyncadd [#allocation3], %s1770
      %s1773 = sshll.u32 [#allocation2], 4
      %s1774 = int_to_ptr.vmem [resolvable:$true] %s1773
      %1776 = dma.vmem_to_hbm [thread:$0]  %s1774, 32, %s5, [#allocation3]
    $region25: #{cnn_multiaction_forward.7} parent=1 // pred_fallthru
      _
    // Predicated region
    $region26: #{cnn_multiaction_forward.7} parent=1 // pred_check
      _
    $region27: #{cnn_multiaction_forward.7} parent=1 // pred_check_branch
      %1778 = sbr.rel (0) target = $region29
    $region28: #{cnn_multiaction_forward.7} parent=1 // pred_region
      %1779 = dma.done [#allocation3], 32
    $region29: #{cnn_multiaction_forward.7} parent=1 // pred_fallthru
      _
    %1780 = vsyncpa [#allocation3], 1

</llo_original>
